<compile_context>
chip_gen: v7x
topology: tpu7x:2x2x1
jax: 0.10.0
libtpu: 0.0.40
codegen_flags: <defaults>
</compile_context>

<pallas_src>
import math
import functools

import jax
import jax.numpy as jnp
from jax.experimental import pallas as pl
from jax.experimental.pallas import tpu as pltpu


# ----------------------------- in-kernel helpers --------------------------------

def _layernorm(x, gamma, beta, eps=1e-5):
    mean = jnp.mean(x, axis=-1, keepdims=True)
    cen = x - mean
    var = jnp.mean(cen * cen, axis=-1, keepdims=True)
    return cen * jax.lax.rsqrt(var + eps) * gamma + beta


# ------------------------------ fused forward kernel ----------------------------

def fused_encoder_kernel(plen_ref, xc_ref, wc_ref, bc_ref,
                         wqkv_ref, bqkv_ref, wo_ref, bo_ref,
                         g1_ref, be1_ref, w1_ref, b1_ref,
                         w2_ref, b2_ref, g2_ref, be2_ref,
                         wm_ref, bm_ref,
                         out_ref, h_ref, *, nhead):
    """One grid step = (sequence b, encoder layer l).

    h_ref (L, E) f32 VMEM scratch carries the activation across the layer axis.
    The row with token index L-1 is the position the conv shrinks away; it is never
    a valid attention key and is zeroed at the output.
    """
    L, E = h_ref.shape
    b = pl.program_id(0)
    l = pl.program_id(1)
    n_layers = pl.num_programs(1)

    plen = plen_ref[b]                                           # scalar from SMEM

    # ---- Conv1d(E, E, 2) + ReLU (fused 2-tap matmul), once per sequence ---------
    @pl.when(l == 0)
    def _():
        h0 = jnp.dot(xc_ref[0], wc_ref[...],
                     preferred_element_type=jnp.float32) + bc_ref[...]
        h_ref[...] = jnp.maximum(h0, 0.0)                        # (L, E) f32

    # additive key-padding bias: key position j is valid iff j < plen - 1
    pos_k = jax.lax.broadcasted_iota(jnp.int32, (1, L), 1)
    key_bias = jnp.where(pos_k < plen - 1, jnp.float32(0.0), jnp.float32(-1e30))

    h = h_ref[...]                                               # (L, E) f32
    hb = h.astype(jnp.bfloat16)

    # ---- multi-head self-attention: per-head 2D matmuls, no stack / concat ------
    attn = jnp.zeros((L, E), jnp.float32)
    for i in range(nhead):
        q = jnp.dot(hb, wqkv_ref[0, i],
                    preferred_element_type=jnp.float32) + bqkv_ref[0, i]
        k = jnp.dot(hb, wqkv_ref[0, nhead + i],
                    preferred_element_type=jnp.float32) + bqkv_ref[0, nhead + i]
        v = jnp.dot(hb, wqkv_ref[0, 2 * nhead + i],
                    preferred_element_type=jnp.float32) + bqkv_ref[0, 2 * nhead + i]
        # scores: contract the head dim directly (no explicit k transpose)
        s = jax.lax.dot_general(q.astype(jnp.bfloat16), k.astype(jnp.bfloat16),
                                (((1,), (1,)), ((), ())),
                                preferred_element_type=jnp.float32)       # (L, L)
        s = s + key_bias
        s = s - jnp.max(s, axis=-1, keepdims=True)
        p = jnp.exp(s)
        p = p * pl.reciprocal(jnp.sum(p, axis=-1, keepdims=True), approx=True)
        o = jnp.dot(p.astype(jnp.bfloat16), v.astype(jnp.bfloat16),
                    preferred_element_type=jnp.float32)                   # (L, hd)
        # head re-concat folded into the output projection
        attn = attn + jnp.dot(o.astype(jnp.bfloat16), wo_ref[0, i],
                              preferred_element_type=jnp.float32)
    attn = attn + bo_ref[0]

    # ---- post-norm residual + ReLU FFN ------------------------------------------
    h1 = _layernorm(h + attn, g1_ref[0], be1_ref[0])
    ff = jnp.maximum(jnp.dot(h1.astype(jnp.bfloat16), w1_ref[0],
                             preferred_element_type=jnp.float32) + b1_ref[0], 0.0)
    ff = jnp.dot(ff.astype(jnp.bfloat16), w2_ref[0],
                 preferred_element_type=jnp.float32) + b2_ref[0]
    h2 = _layernorm(h1 + ff, g2_ref[0], be2_ref[0])
    h_ref[...] = h2

    # ---- output head (last layer only): mslinear + ReLU + row-validity mask -----
    @pl.when(l == n_layers - 1)
    def _():
        ms = jnp.dot(h2.astype(jnp.bfloat16), wm_ref[...],
                     preferred_element_type=jnp.float32) + bm_ref[...]    # (L, C_pad)
        ms = jnp.maximum(ms, 0.0)
        pos_q = jax.lax.broadcasted_iota(jnp.int32, (L, 1), 0)
        row_mask = (pos_q < plen - 1).astype(jnp.float32)
        out_ref[...] = (ms * row_mask).reshape(1, L, -1)


# --------------------------------- VMEM budget -----------------------------------

def _vmem_limit_bytes(L, E, dff, nhead, C_pad):
    hd = E // nhead
    f32, bf16 = 4, 2
    per_layer_w = (3 * nhead * E * hd * bf16 + 3 * nhead * hd * f32
                   + nhead * hd * E * bf16 + E * f32
                   + E * dff * bf16 + dff * f32 + dff * E * bf16 + E * f32
                   + 4 * E * f32)
    static_w = 2 * E * E * bf16 + E * f32 + E * C_pad * bf16 + C_pad * f32
    acts = L * 2 * E * bf16 + L * C_pad * f32 + L * E * f32
    temps = 4 * L * L * f32 + 8 * L * E * f32 + 2 * L * dff * f32
    est = int((2 * (per_layer_w + static_w + acts) + temps) * 1.5)
    return max(32 * 1024 * 1024, min(est, 48 * 1024 * 1024))


# --------------------------------- forward wrapper ------------------------------

def deepdia_ms2_forward(params, peptide_tokens, peptide_length, phos=None, *,
                        nhead, num_col):
    N, L = peptide_tokens.shape
    E = params["a_emb"].shape[1]
    num_layers = params["wqkv"].shape[0]
    hd = E // nhead
    dff = params["w1"].shape[2]
    C_pad = params["wm"].shape[1]

    # TODO(synk): token/position embedding gathers stay in XLA glue (data-dependent
    # gathers; a DMA-gather kernel is not worth it at this size).
    a_embed = params["a_emb"][peptide_tokens]                     # (N, L, E)
    pos_embed = params["pos_emb"][jnp.arange(L)][None, :, :]      # (1, L, E)
    x = pos_embed + a_embed
    if phos is not None:                                          # `if phos:` branch of the spec
        x = x + params["phos_emb"][phos]
    x = x.astype(jnp.float32)
    # Conv1d(k=2): both taps packed so the kernel does ONE (L, 2E) @ (2E, E) matmul.
    # Token L-1 picks up a wrapped tap; that row is always masked / zeroed.
    xc = jnp.concatenate([x, jnp.roll(x, shift=-1, axis=1)], axis=-1).astype(jnp.bfloat16)

    plen = peptide_length.astype(jnp.int32)

    wspec3 = lambda shape: pl.BlockSpec(shape, lambda b, l, pref: (l, 0, 0))
    wspec4 = lambda shape: pl.BlockSpec(shape, lambda b, l, pref: (l, 0, 0, 0))
    cspec = lambda shape: pl.BlockSpec(shape, lambda b, l, pref: tuple(0 for _ in shape))

    grid_spec = pltpu.PrefetchScalarGridSpec(
        num_scalar_prefetch=1,
        grid=(N, num_layers),
        in_specs=[
            pl.BlockSpec((1, L, 2 * E), lambda b, l, pref: (b, 0, 0)),      # xc
            cspec((2 * E, E)), cspec((1, E)),                               # wc, bc
            wspec4((1, 3 * nhead, E, hd)),                                  # wqkv
            wspec4((1, 3 * nhead, 1, hd)),                                  # bqkv
            wspec4((1, nhead, hd, E)),                                      # wo
            wspec3((1, 1, E)),                                              # bo
            wspec3((1, 1, E)), wspec3((1, 1, E)),                           # g1, be1
            wspec3((1, E, dff)), wspec3((1, 1, dff)),                       # w1, b1
            wspec3((1, dff, E)), wspec3((1, 1, E)),                         # w2, b2
            wspec3((1, 1, E)), wspec3((1, 1, E)),                           # g2, be2
            cspec((E, C_pad)), cspec((1, C_pad)),                           # wm, bm
        ],
        out_specs=pl.BlockSpec((1, L, C_pad), lambda b, l, pref: (b, 0, 0)),
        scratch_shapes=[pltpu.VMEM((L, E), jnp.float32)],
    )

    kern = functools.partial(fused_encoder_kernel, nhead=nhead)
    out = pl.pallas_call(
        kern,
        out_shape=jax.ShapeDtypeStruct((N, L, C_pad), jnp.float32),
        grid_spec=grid_spec,
        compiler_params=pltpu.CompilerParams(
            dimension_semantics=("parallel", "arbitrary"),
            vmem_limit_bytes=_vmem_limit_bytes(L, E, dff, nhead, C_pad)),
    )(plen, xc,
      params["wc"], params["bc"],
      params["wqkv"], params["bqkv"], params["wo"], params["bo"],
      params["g1"], params["be1"], params["w1"], params["b1"],
      params["w2"], params["b2"], params["g2"], params["be2"],
      params["wm"], params["bm"])

    # drop the conv-shrunk last token row, un-pad the lane dim, flatten like
    # torch's .permute(1, 0, 2).reshape(N, -1)
    return out[:, :L - 1, :num_col].reshape(N, (L - 1) * num_col)


# --------------------------------- parameter init -------------------------------

def init_params(key, maxlength, acid_size, embed_dim, nhead, num_layers,
                num_col=12, dim_feedforward=2048):
    """Random params in the kernel's pre-arranged layouts.

    PyTorch -> kernel layout mapping (for porting real weights):
      wqkv[l, h]         = in_proj_weight[h*hd:(h+1)*hd].T      (Q rows, scaled 1/sqrt(hd))
      wqkv[l, nhead+h]   = K rows,  wqkv[l, 2*nhead+h] = V rows (same transpose)
      wo[l, h]           = out_proj.weight[:, h*hd:(h+1)*hd].T
      w1/w2              = linear1/linear2 .weight.T
      wc[:E] / wc[E:]    = conv.weight[:, :, 0].T / conv.weight[:, :, 1].T
      wm                 = mslinear.weight.T zero-padded to 128 lanes
    Matmul weights are stored bf16; biases / layernorm params stay f32.
    """
    E = embed_dim
    hd = E // nhead
    dff = dim_feedforward
    C_pad = ((num_col + 127) // 128) * 128
    keys = iter(jax.random.split(key, 8 + 12 * num_layers))

    def nrm(shape, scale=0.1):
        return scale * jax.random.normal(next(keys), shape, dtype=jnp.float32)

    a_emb = nrm((acid_size, E)).at[0].set(0.0)        # padding_idx=0
    pos_emb = nrm((maxlength, E))
    phos_emb = nrm((2, E))                            # nn.Embedding(2, E); unused when phos=None

    wc = nrm((2 * E, E))                              # Conv1d(E, E, 2), both taps stacked
    bc = nrm((1, E))

    qscale = 1.0 / math.sqrt(hd)
    wqkv, bqkv, wo, bo = [], [], [], []
    g1, be1, w1, b1, w2, b2, g2, be2 = ([] for _ in range(8))
    for _ in range(num_layers):
        wq, wk, wv = nrm((nhead, E, hd)) * qscale, nrm((nhead, E, hd)), nrm((nhead, E, hd))
        bq, bk, bv = nrm((nhead, 1, hd)) * qscale, nrm((nhead, 1, hd)), nrm((nhead, 1, hd))
        wqkv.append(jnp.concatenate([wq, wk, wv], axis=0))     # (3*nhead, E, hd)
        bqkv.append(jnp.concatenate([bq, bk, bv], axis=0))     # (3*nhead, 1, hd)
        wo.append(nrm((nhead, hd, E)));  bo.append(nrm((1, E)))
        g1.append(jnp.ones((1, E), jnp.float32)); be1.append(jnp.zeros((1, E), jnp.float32))
        w1.append(nrm((E, dff)));                  b1.append(nrm((1, dff)))
        w2.append(nrm((dff, E)));                  b2.append(nrm((1, E)))
        g2.append(jnp.ones((1, E), jnp.float32)); be2.append(jnp.zeros((1, E), jnp.float32))

    wm = jnp.zeros((E, C_pad), jnp.float32).at[:, :num_col].set(nrm((E, num_col)))
    bm = jnp.zeros((1, C_pad), jnp.float32).at[:, :num_col].set(nrm((1, num_col)))

    stack = lambda xs: jnp.stack(xs, axis=0)
    bf = lambda a: a.astype(jnp.bfloat16)
    return dict(
        a_emb=a_emb, pos_emb=pos_emb, phos_emb=phos_emb,
        wc=bf(wc), bc=bc,
        wqkv=bf(stack(wqkv)), bqkv=stack(bqkv),
        wo=bf(stack(wo)), bo=stack(bo),
        g1=stack(g1), be1=stack(be1),
        w1=bf(stack(w1)), b1=stack(b1),
        w2=bf(stack(w2)), b2=stack(b2),
        g2=stack(g2), be2=stack(be2),
        wm=bf(wm), bm=bm,
    )


# --------------------------------------- main -----------------------------------

if __name__ == "__main__":
    maxlength, acid_size, embed_dim = 32, 24, 32
    nhead, num_layers, num_col = 4, 2, 12
    N, L = 2, 8

    key = jax.random.PRNGKey(0)
    kp, kt = jax.random.split(key)
    params = init_params(kp, maxlength, acid_size, embed_dim, nhead, num_layers,
                         num_col=num_col)

    peptide_tokens = jax.random.randint(kt, (N, L), 1, acid_size, dtype=jnp.int32)
    # The reference forward assumes max(peptide_length) == L so the attentionmask /
    # seq_len_to_mask widths match the tensor shapes exactly.
    peptide_length = jnp.array([L, 5], dtype=jnp.int32)
    assert int(peptide_length.max()) == L

    fwd = jax.jit(functools.partial(deepdia_ms2_forward, nhead=nhead, num_col=num_col))
    pred = jax.block_until_ready(fwd(params, peptide_tokens, peptide_length))

    assert pred.shape == (N, (L - 1) * num_col), pred.shape
    assert bool(jnp.all(jnp.isfinite(pred)))
    print("KERNEL_OK")
</pallas_src>

<mosaic_0001>
module attributes {stable_mosaic.version = 11 : i64} {
  func.func @fused_encoder_kernel(%arg0: i32, %arg1: i32, %arg2: memref<2xi32, #tpu.memory_space<smem>>, %arg3: memref<1x8x64xbf16, #tpu.memory_space<vmem>>, %arg4: memref<64x32xbf16, #tpu.memory_space<vmem>>, %arg5: memref<1x32xf32, #tpu.memory_space<vmem>>, %arg6: memref<1x12x32x8xbf16, #tpu.memory_space<vmem>>, %arg7: memref<1x12x1x8xf32, #tpu.memory_space<vmem>>, %arg8: memref<1x4x8x32xbf16, #tpu.memory_space<vmem>>, %arg9: memref<1x1x32xf32, #tpu.memory_space<vmem>>, %arg10: memref<1x1x32xf32, #tpu.memory_space<vmem>>, %arg11: memref<1x1x32xf32, #tpu.memory_space<vmem>>, %arg12: memref<1x32x2048xbf16, #tpu.memory_space<vmem>>, %arg13: memref<1x1x2048xf32, #tpu.memory_space<vmem>>, %arg14: memref<1x2048x32xbf16, #tpu.memory_space<vmem>>, %arg15: memref<1x1x32xf32, #tpu.memory_space<vmem>>, %arg16: memref<1x1x32xf32, #tpu.memory_space<vmem>>, %arg17: memref<1x1x32xf32, #tpu.memory_space<vmem>>, %arg18: memref<32x128xbf16, #tpu.memory_space<vmem>>, %arg19: memref<1x128xf32, #tpu.memory_space<vmem>>, %arg20: memref<1x8x128xf32, #tpu.memory_space<vmem>>, %arg21: memref<8x32xf32, #tpu.memory_space<vmem>>) attributes {dimension_semantics = [#tpu.dimension_semantics<parallel>, #tpu.dimension_semantics<arbitrary>], iteration_bounds = array<i64: 2, 2>, scalar_prefetch = 1 : i64, scratch_operands = 1 : i64, tpu.core_type = #tpu.core_type<tc>, window_params = [{transform_indices = @transform_0, window_bounds = array<i64: 1, 8, 64>}, {pipeline_mode = #tpu.pipeline_mode<synchronous>, transform_indices = @transform_1, window_bounds = array<i64: 64, 32>}, {pipeline_mode = #tpu.pipeline_mode<synchronous>, transform_indices = @transform_2, window_bounds = array<i64: 1, 32>}, {transform_indices = @transform_3, window_bounds = array<i64: 1, 12, 32, 8>}, {transform_indices = @transform_4, window_bounds = array<i64: 1, 12, 1, 8>}, {transform_indices = @transform_5, window_bounds = array<i64: 1, 4, 8, 32>}, {transform_indices = @transform_6, window_bounds = array<i64: 1, 1, 32>}, {transform_indices = @transform_7, window_bounds = array<i64: 1, 1, 32>}, {transform_indices = @transform_8, window_bounds = array<i64: 1, 1, 32>}, {transform_indices = @transform_9, window_bounds = array<i64: 1, 32, 2048>}, {transform_indices = @transform_10, window_bounds = array<i64: 1, 1, 2048>}, {transform_indices = @transform_11, window_bounds = array<i64: 1, 2048, 32>}, {transform_indices = @transform_12, window_bounds = array<i64: 1, 1, 32>}, {transform_indices = @transform_13, window_bounds = array<i64: 1, 1, 32>}, {transform_indices = @transform_14, window_bounds = array<i64: 1, 1, 32>}, {pipeline_mode = #tpu.pipeline_mode<synchronous>, transform_indices = @transform_15, window_bounds = array<i64: 32, 128>}, {pipeline_mode = #tpu.pipeline_mode<synchronous>, transform_indices = @transform_16, window_bounds = array<i64: 1, 128>}, {transform_indices = @transform_17, window_bounds = array<i64: 1, 8, 128>}]} {
    %0 = arith.index_cast %arg0 : i32 to index
    %1 = memref.load %arg2[%0] : memref<2xi32, #tpu.memory_space<smem>>
    %c0_i32 = arith.constant 0 : i32
    %2 = arith.cmpi eq, %arg1, %c0_i32 : i32
    %3 = arith.extui %2 : i1 to i32
    %c0_i32_0 = arith.constant 0 : i32
    %4 = arith.cmpi ne, %3, %c0_i32_0 : i32
    scf.if %4 {
      %c0_181 = arith.constant 0 : index
      %c0_182 = arith.constant 0 : index
      %c0_183 = arith.constant 0 : index
      %267 = vector.load %arg3[%c0_181, %c0_182, %c0_183] : memref<1x8x64xbf16, #tpu.memory_space<vmem>>, vector<1x8x64xbf16>
      %268 = vector.shape_cast %267 : vector<1x8x64xbf16> to vector<8x64xbf16>
      %c0_184 = arith.constant 0 : index
      %c0_185 = arith.constant 0 : index
      %269 = vector.load %arg4[%c0_184, %c0_185] : memref<64x32xbf16, #tpu.memory_space<vmem>>, vector<64x32xbf16>
      %cst_186 = arith.constant dense<0.000000e+00> : vector<8x32xf32>
      %270 = tpu.matmul %268, %269, %cst_186 {dimension_numbers = #tpu.dot_dimension_numbers<[1], [0], [0], [1], [0, 0, 1, 1], [], []>} : vector<8x64xbf16>, vector<64x32xbf16>, vector<8x32xf32> -> vector<8x32xf32>
      %c0_187 = arith.constant 0 : index
      %c0_188 = arith.constant 0 : index
      %271 = vector.load %arg5[%c0_187, %c0_188] : memref<1x32xf32, #tpu.memory_space<vmem>>, vector<1x32xf32>
      %272 = vector.broadcast %271 : vector<1x32xf32> to vector<8x32xf32>
      %273 = arith.addf %270, %272 : vector<8x32xf32>
      %cst_189 = arith.constant 0.000000e+00 : f32
      %274 = vector.broadcast %cst_189 : f32 to vector<8x32xf32>
      %275 = arith.maximumf %273, %274 : vector<8x32xf32>
      %c0_190 = arith.constant 0 : index
      %c0_191 = arith.constant 0 : index
      %276 = vector.load %arg21[%c0_190, %c0_191] : memref<8x32xf32, #tpu.memory_space<vmem>>, vector<8x32xf32>
      tpu.vector_store %arg21[%c0_190, %c0_191], %275 {strides = array<i32>} : memref<8x32xf32, #tpu.memory_space<vmem>>, vector<8x32xf32>,
    } else {
    }
    %5 = tpu.iota {dimensions = array<i32: 1>} : vector<1x8xi32>
    %c1_i32 = arith.constant 1 : i32
    %6 = arith.subi %1, %c1_i32 : i32
    %7 = vector.broadcast %6 : i32 to vector<1x8xi32>
    %8 = arith.cmpi slt, %5, %7 : vector<1x8xi32>
    %cst = arith.constant 0.000000e+00 : f32
    %cst_1 = arith.constant -1.000000e+30 : f32
    %9 = vector.broadcast %cst : f32 to vector<1x8xf32>
    %10 = vector.broadcast %cst_1 : f32 to vector<1x8xf32>
    %11 = arith.select %8, %9, %10 : vector<1x8xi1>, vector<1x8xf32>
    %c0 = arith.constant 0 : index
    %c0_2 = arith.constant 0 : index
    %12 = vector.load %arg21[%c0, %c0_2] : memref<8x32xf32, #tpu.memory_space<vmem>>, vector<8x32xf32>
    %13 = arith.truncf %12 : vector<8x32xf32> to vector<8x32xbf16>
    %cst_3 = arith.constant 0.000000e+00 : f32
    %14 = vector.broadcast %cst_3 : f32 to vector<8x32xf32>
    %c0_4 = arith.constant 0 : index
    %c0_5 = arith.constant 0 : index
    %c0_6 = arith.constant 0 : index
    %c0_7 = arith.constant 0 : index
    %15 = vector.load %arg6[%c0_4, %c0_5, %c0_6, %c0_7] : memref<1x12x32x8xbf16, #tpu.memory_space<vmem>>, vector<1x1x32x8xbf16>
    %16 = vector.shape_cast %15 : vector<1x1x32x8xbf16> to vector<32x8xbf16>
    %cst_8 = arith.constant dense<0.000000e+00> : vector<8x8xf32>
    %17 = tpu.matmul %13, %16, %cst_8 {dimension_numbers = #tpu.dot_dimension_numbers<[1], [0], [0], [1], [0, 0, 1, 1], [], []>} : vector<8x32xbf16>, vector<32x8xbf16>, vector<8x8xf32> -> vector<8x8xf32>
    %c0_9 = arith.constant 0 : index
    %c0_10 = arith.constant 0 : index
    %c0_11 = arith.constant 0 : index
    %c0_12 = arith.constant 0 : index
    %18 = vector.load %arg7[%c0_9, %c0_10, %c0_11, %c0_12] : memref<1x12x1x8xf32, #tpu.memory_space<vmem>>, vector<1x1x1x8xf32>
    %19 = vector.shape_cast %18 : vector<1x1x1x8xf32> to vector<1x8xf32>
    %20 = vector.broadcast %19 : vector<1x8xf32> to vector<8x8xf32>
    %21 = arith.addf %17, %20 : vector<8x8xf32>
    %c0_13 = arith.constant 0 : index
    %c4 = arith.constant 4 : index
    %c0_14 = arith.constant 0 : index
    %c0_15 = arith.constant 0 : index
    %22 = vector.load %arg6[%c0_13, %c4, %c0_14, %c0_15] : memref<1x12x32x8xbf16, #tpu.memory_space<vmem>>, vector<1x1x32x8xbf16>
    %23 = vector.shape_cast %22 : vector<1x1x32x8xbf16> to vector<32x8xbf16>
    %cst_16 = arith.constant dense<0.000000e+00> : vector<8x8xf32>
    %24 = tpu.matmul %13, %23, %cst_16 {dimension_numbers = #tpu.dot_dimension_numbers<[1], [0], [0], [1], [0, 0, 1, 1], [], []>} : vector<8x32xbf16>, vector<32x8xbf16>, vector<8x8xf32> -> vector<8x8xf32>
    %c0_17 = arith.constant 0 : index
    %c4_18 = arith.constant 4 : index
    %c0_19 = arith.constant 0 : index
    %c0_20 = arith.constant 0 : index
    %25 = vector.load %arg7[%c0_17, %c4_18, %c0_19, %c0_20] : memref<1x12x1x8xf32, #tpu.memory_space<vmem>>, vector<1x1x1x8xf32>
    %26 = vector.shape_cast %25 : vector<1x1x1x8xf32> to vector<1x8xf32>
    %27 = vector.broadcast %26 : vector<1x8xf32> to vector<8x8xf32>
    %28 = arith.addf %24, %27 : vector<8x8xf32>
    %c0_21 = arith.constant 0 : index
    %c8 = arith.constant 8 : index
    %c0_22 = arith.constant 0 : index
    %c0_23 = arith.constant 0 : index
    %29 = vector.load %arg6[%c0_21, %c8, %c0_22, %c0_23] : memref<1x12x32x8xbf16, #tpu.memory_space<vmem>>, vector<1x1x32x8xbf16>
    %30 = vector.shape_cast %29 : vector<1x1x32x8xbf16> to vector<32x8xbf16>
    %cst_24 = arith.constant dense<0.000000e+00> : vector<8x8xf32>
    %31 = tpu.matmul %13, %30, %cst_24 {dimension_numbers = #tpu.dot_dimension_numbers<[1], [0], [0], [1], [0, 0, 1, 1], [], []>} : vector<8x32xbf16>, vector<32x8xbf16>, vector<8x8xf32> -> vector<8x8xf32>
    %c0_25 = arith.constant 0 : index
    %c8_26 = arith.constant 8 : index
    %c0_27 = arith.constant 0 : index
    %c0_28 = arith.constant 0 : index
    %32 = vector.load %arg7[%c0_25, %c8_26, %c0_27, %c0_28] : memref<1x12x1x8xf32, #tpu.memory_space<vmem>>, vector<1x1x1x8xf32>
    %33 = vector.shape_cast %32 : vector<1x1x1x8xf32> to vector<1x8xf32>
    %34 = vector.broadcast %33 : vector<1x8xf32> to vector<8x8xf32>
    %35 = arith.addf %31, %34 : vector<8x8xf32>
    %36 = arith.truncf %21 : vector<8x8xf32> to vector<8x8xbf16>
    %37 = arith.truncf %28 : vector<8x8xf32> to vector<8x8xbf16>
    %cst_29 = arith.constant dense<0.000000e+00> : vector<8x8xf32>
    %38 = tpu.matmul %36, %37, %cst_29 {dimension_numbers = #tpu.dot_dimension_numbers<[1], [1], [0], [0], [0, 0, 1, 0], [], []>} : vector<8x8xbf16>, vector<8x8xbf16>, vector<8x8xf32> -> vector<8x8xf32>
    %39 = vector.broadcast %11 : vector<1x8xf32> to vector<8x8xf32>
    %40 = arith.addf %38, %39 : vector<8x8xf32>
    %cst_30 = arith.constant dense<0xFF800000> : vector<8xf32>
    %41 = vector.multi_reduction <maximumf>, %40, %cst_30 [1] : vector<8x8xf32> to vector<8xf32>
    %42 = vector.shape_cast %41 : vector<8xf32> to vector<8x1xf32>
    %43 = vector.broadcast %42 : vector<8x1xf32> to vector<8x8xf32>
    %44 = arith.subf %40, %43 : vector<8x8xf32>
    %45 = math.exp %44 : vector<8x8xf32>
    %cst_31 = arith.constant dense<0.000000e+00> : vector<8xf32>
    %46 = vector.multi_reduction <add>, %45, %cst_31 [1] : vector<8x8xf32> to vector<8xf32>
    %47 = vector.shape_cast %46 : vector<8xf32> to vector<8x1xf32>
    %48 = tpu.reciprocal %47 {approx = true} : vector<8x1xf32> -> vector<8x1xf32>
    %49 = vector.broadcast %48 : vector<8x1xf32> to vector<8x8xf32>
    %50 = arith.mulf %45, %49 : vector<8x8xf32>
    %51 = arith.truncf %50 : vector<8x8xf32> to vector<8x8xbf16>
    %52 = arith.truncf %35 : vector<8x8xf32> to vector<8x8xbf16>
    %cst_32 = arith.constant dense<0.000000e+00> : vector<8x8xf32>
    %53 = tpu.matmul %51, %52, %cst_32 {dimension_numbers = #tpu.dot_dimension_numbers<[1], [0], [0], [1], [0, 0, 1, 1], [], []>} : vector<8x8xbf16>, vector<8x8xbf16>, vector<8x8xf32> -> vector<8x8xf32>
    %54 = arith.truncf %53 : vector<8x8xf32> to vector<8x8xbf16>
    %c0_33 = arith.constant 0 : index
    %c0_34 = arith.constant 0 : index
    %c0_35 = arith.constant 0 : index
    %c0_36 = arith.constant 0 : index
    %55 = vector.load %arg8[%c0_33, %c0_34, %c0_35, %c0_36] : memref<1x4x8x32xbf16, #tpu.memory_space<vmem>>, vector<1x1x8x32xbf16>
    %56 = vector.shape_cast %55 : vector<1x1x8x32xbf16> to vector<8x32xbf16>
    %cst_37 = arith.constant dense<0.000000e+00> : vector<8x32xf32>
    %57 = tpu.matmul %54, %56, %cst_37 {dimension_numbers = #tpu.dot_dimension_numbers<[1], [0], [0], [1], [0, 0, 1, 1], [], []>} : vector<8x8xbf16>, vector<8x32xbf16>, vector<8x32xf32> -> vector<8x32xf32>
    %58 = arith.addf %14, %57 : vector<8x32xf32>
    %c0_38 = arith.constant 0 : index
    %c1 = arith.constant 1 : index
    %c0_39 = arith.constant 0 : index
    %c0_40 = arith.constant 0 : index
    %59 = vector.load %arg6[%c0_38, %c1, %c0_39, %c0_40] : memref<1x12x32x8xbf16, #tpu.memory_space<vmem>>, vector<1x1x32x8xbf16>
    %60 = vector.shape_cast %59 : vector<1x1x32x8xbf16> to vector<32x8xbf16>
    %cst_41 = arith.constant dense<0.000000e+00> : vector<8x8xf32>
    %61 = tpu.matmul %13, %60, %cst_41 {dimension_numbers = #tpu.dot_dimension_numbers<[1], [0], [0], [1], [0, 0, 1, 1], [], []>} : vector<8x32xbf16>, vector<32x8xbf16>, vector<8x8xf32> -> vector<8x8xf32>
    %c0_42 = arith.constant 0 : index
    %c1_43 = arith.constant 1 : index
    %c0_44 = arith.constant 0 : index
    %c0_45 = arith.constant 0 : index
    %62 = vector.load %arg7[%c0_42, %c1_43, %c0_44, %c0_45] : memref<1x12x1x8xf32, #tpu.memory_space<vmem>>, vector<1x1x1x8xf32>
    %63 = vector.shape_cast %62 : vector<1x1x1x8xf32> to vector<1x8xf32>
    %64 = vector.broadcast %63 : vector<1x8xf32> to vector<8x8xf32>
    %65 = arith.addf %61, %64 : vector<8x8xf32>
    %c0_46 = arith.constant 0 : index
    %c5 = arith.constant 5 : index
    %c0_47 = arith.constant 0 : index
    %c0_48 = arith.constant 0 : index
    %66 = vector.load %arg6[%c0_46, %c5, %c0_47, %c0_48] : memref<1x12x32x8xbf16, #tpu.memory_space<vmem>>, vector<1x1x32x8xbf16>
    %67 = vector.shape_cast %66 : vector<1x1x32x8xbf16> to vector<32x8xbf16>
    %cst_49 = arith.constant dense<0.000000e+00> : vector<8x8xf32>
    %68 = tpu.matmul %13, %67, %cst_49 {dimension_numbers = #tpu.dot_dimension_numbers<[1], [0], [0], [1], [0, 0, 1, 1], [], []>} : vector<8x32xbf16>, vector<32x8xbf16>, vector<8x8xf32> -> vector<8x8xf32>
    %c0_50 = arith.constant 0 : index
    %c5_51 = arith.constant 5 : index
    %c0_52 = arith.constant 0 : index
    %c0_53 = arith.constant 0 : index
    %69 = vector.load %arg7[%c0_50, %c5_51, %c0_52, %c0_53] : memref<1x12x1x8xf32, #tpu.memory_space<vmem>>, vector<1x1x1x8xf32>
    %70 = vector.shape_cast %69 : vector<1x1x1x8xf32> to vector<1x8xf32>
    %71 = vector.broadcast %70 : vector<1x8xf32> to vector<8x8xf32>
    %72 = arith.addf %68, %71 : vector<8x8xf32>
    %c0_54 = arith.constant 0 : index
    %c9 = arith.constant 9 : index
    %c0_55 = arith.constant 0 : index
    %c0_56 = arith.constant 0 : index
    %73 = vector.load %arg6[%c0_54, %c9, %c0_55, %c0_56] : memref<1x12x32x8xbf16, #tpu.memory_space<vmem>>, vector<1x1x32x8xbf16>
    %74 = vector.shape_cast %73 : vector<1x1x32x8xbf16> to vector<32x8xbf16>
    %cst_57 = arith.constant dense<0.000000e+00> : vector<8x8xf32>
    %75 = tpu.matmul %13, %74, %cst_57 {dimension_numbers = #tpu.dot_dimension_numbers<[1], [0], [0], [1], [0, 0, 1, 1], [], []>} : vector<8x32xbf16>, vector<32x8xbf16>, vector<8x8xf32> -> vector<8x8xf32>
    %c0_58 = arith.constant 0 : index
    %c9_59 = arith.constant 9 : index
    %c0_60 = arith.constant 0 : index
    %c0_61 = arith.constant 0 : index
    %76 = vector.load %arg7[%c0_58, %c9_59, %c0_60, %c0_61] : memref<1x12x1x8xf32, #tpu.memory_space<vmem>>, vector<1x1x1x8xf32>
    %77 = vector.shape_cast %76 : vector<1x1x1x8xf32> to vector<1x8xf32>
    %78 = vector.broadcast %77 : vector<1x8xf32> to vector<8x8xf32>
    %79 = arith.addf %75, %78 : vector<8x8xf32>
    %80 = arith.truncf %65 : vector<8x8xf32> to vector<8x8xbf16>
    %81 = arith.truncf %72 : vector<8x8xf32> to vector<8x8xbf16>
    %cst_62 = arith.constant dense<0.000000e+00> : vector<8x8xf32>
    %82 = tpu.matmul %80, %81, %cst_62 {dimension_numbers = #tpu.dot_dimension_numbers<[1], [1], [0], [0], [0, 0, 1, 0], [], []>} : vector<8x8xbf16>, vector<8x8xbf16>, vector<8x8xf32> -> vector<8x8xf32>
    %83 = vector.broadcast %11 : vector<1x8xf32> to vector<8x8xf32>
    %84 = arith.addf %82, %83 : vector<8x8xf32>
    %cst_63 = arith.constant dense<0xFF800000> : vector<8xf32>
    %85 = vector.multi_reduction <maximumf>, %84, %cst_63 [1] : vector<8x8xf32> to vector<8xf32>
    %86 = vector.shape_cast %85 : vector<8xf32> to vector<8x1xf32>
    %87 = vector.broadcast %86 : vector<8x1xf32> to vector<8x8xf32>
    %88 = arith.subf %84, %87 : vector<8x8xf32>
    %89 = math.exp %88 : vector<8x8xf32>
    %cst_64 = arith.constant dense<0.000000e+00> : vector<8xf32>
    %90 = vector.multi_reduction <add>, %89, %cst_64 [1] : vector<8x8xf32> to vector<8xf32>
    %91 = vector.shape_cast %90 : vector<8xf32> to vector<8x1xf32>
    %92 = tpu.reciprocal %91 {approx = true} : vector<8x1xf32> -> vector<8x1xf32>
    %93 = vector.broadcast %92 : vector<8x1xf32> to vector<8x8xf32>
    %94 = arith.mulf %89, %93 : vector<8x8xf32>
    %95 = arith.truncf %94 : vector<8x8xf32> to vector<8x8xbf16>
    %96 = arith.truncf %79 : vector<8x8xf32> to vector<8x8xbf16>
    %cst_65 = arith.constant dense<0.000000e+00> : vector<8x8xf32>
    %97 = tpu.matmul %95, %96, %cst_65 {dimension_numbers = #tpu.dot_dimension_numbers<[1], [0], [0], [1], [0, 0, 1, 1], [], []>} : vector<8x8xbf16>, vector<8x8xbf16>, vector<8x8xf32> -> vector<8x8xf32>
    %98 = arith.truncf %97 : vector<8x8xf32> to vector<8x8xbf16>
    %c0_66 = arith.constant 0 : index
    %c1_67 = arith.constant 1 : index
    %c0_68 = arith.constant 0 : index
    %c0_69 = arith.constant 0 : index
    %99 = vector.load %arg8[%c0_66, %c1_67, %c0_68, %c0_69] : memref<1x4x8x32xbf16, #tpu.memory_space<vmem>>, vector<1x1x8x32xbf16>
    %100 = vector.shape_cast %99 : vector<1x1x8x32xbf16> to vector<8x32xbf16>
    %cst_70 = arith.constant dense<0.000000e+00> : vector<8x32xf32>
    %101 = tpu.matmul %98, %100, %cst_70 {dimension_numbers = #tpu.dot_dimension_numbers<[1], [0], [0], [1], [0, 0, 1, 1], [], []>} : vector<8x8xbf16>, vector<8x32xbf16>, vector<8x32xf32> -> vector<8x32xf32>
    %102 = arith.addf %58, %101 : vector<8x32xf32>
    %c0_71 = arith.constant 0 : index
    %c2 = arith.constant 2 : index
    %c0_72 = arith.constant 0 : index
    %c0_73 = arith.constant 0 : index
    %103 = vector.load %arg6[%c0_71, %c2, %c0_72, %c0_73] : memref<1x12x32x8xbf16, #tpu.memory_space<vmem>>, vector<1x1x32x8xbf16>
    %104 = vector.shape_cast %103 : vector<1x1x32x8xbf16> to vector<32x8xbf16>
    %cst_74 = arith.constant dense<0.000000e+00> : vector<8x8xf32>
    %105 = tpu.matmul %13, %104, %cst_74 {dimension_numbers = #tpu.dot_dimension_numbers<[1], [0], [0], [1], [0, 0, 1, 1], [], []>} : vector<8x32xbf16>, vector<32x8xbf16>, vector<8x8xf32> -> vector<8x8xf32>
    %c0_75 = arith.constant 0 : index
    %c2_76 = arith.constant 2 : index
    %c0_77 = arith.constant 0 : index
    %c0_78 = arith.constant 0 : index
    %106 = vector.load %arg7[%c0_75, %c2_76, %c0_77, %c0_78] : memref<1x12x1x8xf32, #tpu.memory_space<vmem>>, vector<1x1x1x8xf32>
    %107 = vector.shape_cast %106 : vector<1x1x1x8xf32> to vector<1x8xf32>
    %108 = vector.broadcast %107 : vector<1x8xf32> to vector<8x8xf32>
    %109 = arith.addf %105, %108 : vector<8x8xf32>
    %c0_79 = arith.constant 0 : index
    %c6 = arith.constant 6 : index
    %c0_80 = arith.constant 0 : index
    %c0_81 = arith.constant 0 : index
    %110 = vector.load %arg6[%c0_79, %c6, %c0_80, %c0_81] : memref<1x12x32x8xbf16, #tpu.memory_space<vmem>>, vector<1x1x32x8xbf16>
    %111 = vector.shape_cast %110 : vector<1x1x32x8xbf16> to vector<32x8xbf16>
    %cst_82 = arith.constant dense<0.000000e+00> : vector<8x8xf32>
    %112 = tpu.matmul %13, %111, %cst_82 {dimension_numbers = #tpu.dot_dimension_numbers<[1], [0], [0], [1], [0, 0, 1, 1], [], []>} : vector<8x32xbf16>, vector<32x8xbf16>, vector<8x8xf32> -> vector<8x8xf32>
    %c0_83 = arith.constant 0 : index
    %c6_84 = arith.constant 6 : index
    %c0_85 = arith.constant 0 : index
    %c0_86 = arith.constant 0 : index
    %113 = vector.load %arg7[%c0_83, %c6_84, %c0_85, %c0_86] : memref<1x12x1x8xf32, #tpu.memory_space<vmem>>, vector<1x1x1x8xf32>
    %114 = vector.shape_cast %113 : vector<1x1x1x8xf32> to vector<1x8xf32>
    %115 = vector.broadcast %114 : vector<1x8xf32> to vector<8x8xf32>
    %116 = arith.addf %112, %115 : vector<8x8xf32>
    %c0_87 = arith.constant 0 : index
    %c10 = arith.constant 10 : index
    %c0_88 = arith.constant 0 : index
    %c0_89 = arith.constant 0 : index
    %117 = vector.load %arg6[%c0_87, %c10, %c0_88, %c0_89] : memref<1x12x32x8xbf16, #tpu.memory_space<vmem>>, vector<1x1x32x8xbf16>
    %118 = vector.shape_cast %117 : vector<1x1x32x8xbf16> to vector<32x8xbf16>
    %cst_90 = arith.constant dense<0.000000e+00> : vector<8x8xf32>
    %119 = tpu.matmul %13, %118, %cst_90 {dimension_numbers = #tpu.dot_dimension_numbers<[1], [0], [0], [1], [0, 0, 1, 1], [], []>} : vector<8x32xbf16>, vector<32x8xbf16>, vector<8x8xf32> -> vector<8x8xf32>
    %c0_91 = arith.constant 0 : index
    %c10_92 = arith.constant 10 : index
    %c0_93 = arith.constant 0 : index
    %c0_94 = arith.constant 0 : index
    %120 = vector.load %arg7[%c0_91, %c10_92, %c0_93, %c0_94] : memref<1x12x1x8xf32, #tpu.memory_space<vmem>>, vector<1x1x1x8xf32>
    %121 = vector.shape_cast %120 : vector<1x1x1x8xf32> to vector<1x8xf32>
    %122 = vector.broadcast %121 : vector<1x8xf32> to vector<8x8xf32>
    %123 = arith.addf %119, %122 : vector<8x8xf32>
    %124 = arith.truncf %109 : vector<8x8xf32> to vector<8x8xbf16>
    %125 = arith.truncf %116 : vector<8x8xf32> to vector<8x8xbf16>
    %cst_95 = arith.constant dense<0.000000e+00> : vector<8x8xf32>
    %126 = tpu.matmul %124, %125, %cst_95 {dimension_numbers = #tpu.dot_dimension_numbers<[1], [1], [0], [0], [0, 0, 1, 0], [], []>} : vector<8x8xbf16>, vector<8x8xbf16>, vector<8x8xf32> -> vector<8x8xf32>
    %127 = vector.broadcast %11 : vector<1x8xf32> to vector<8x8xf32>
    %128 = arith.addf %126, %127 : vector<8x8xf32>
    %cst_96 = arith.constant dense<0xFF800000> : vector<8xf32>
    %129 = vector.multi_reduction <maximumf>, %128, %cst_96 [1] : vector<8x8xf32> to vector<8xf32>
    %130 = vector.shape_cast %129 : vector<8xf32> to vector<8x1xf32>
    %131 = vector.broadcast %130 : vector<8x1xf32> to vector<8x8xf32>
    %132 = arith.subf %128, %131 : vector<8x8xf32>
    %133 = math.exp %132 : vector<8x8xf32>
    %cst_97 = arith.constant dense<0.000000e+00> : vector<8xf32>
    %134 = vector.multi_reduction <add>, %133, %cst_97 [1] : vector<8x8xf32> to vector<8xf32>
    %135 = vector.shape_cast %134 : vector<8xf32> to vector<8x1xf32>
    %136 = tpu.reciprocal %135 {approx = true} : vector<8x1xf32> -> vector<8x1xf32>
    %137 = vector.broadcast %136 : vector<8x1xf32> to vector<8x8xf32>
    %138 = arith.mulf %133, %137 : vector<8x8xf32>
    %139 = arith.truncf %138 : vector<8x8xf32> to vector<8x8xbf16>
    %140 = arith.truncf %123 : vector<8x8xf32> to vector<8x8xbf16>
    %cst_98 = arith.constant dense<0.000000e+00> : vector<8x8xf32>
    %141 = tpu.matmul %139, %140, %cst_98 {dimension_numbers = #tpu.dot_dimension_numbers<[1], [0], [0], [1], [0, 0, 1, 1], [], []>} : vector<8x8xbf16>, vector<8x8xbf16>, vector<8x8xf32> -> vector<8x8xf32>
    %142 = arith.truncf %141 : vector<8x8xf32> to vector<8x8xbf16>
    %c0_99 = arith.constant 0 : index
    %c2_100 = arith.constant 2 : index
    %c0_101 = arith.constant 0 : index
    %c0_102 = arith.constant 0 : index
    %143 = vector.load %arg8[%c0_99, %c2_100, %c0_101, %c0_102] : memref<1x4x8x32xbf16, #tpu.memory_space<vmem>>, vector<1x1x8x32xbf16>
    %144 = vector.shape_cast %143 : vector<1x1x8x32xbf16> to vector<8x32xbf16>
    %cst_103 = arith.constant dense<0.000000e+00> : vector<8x32xf32>
    %145 = tpu.matmul %142, %144, %cst_103 {dimension_numbers = #tpu.dot_dimension_numbers<[1], [0], [0], [1], [0, 0, 1, 1], [], []>} : vector<8x8xbf16>, vector<8x32xbf16>, vector<8x32xf32> -> vector<8x32xf32>
    %146 = arith.addf %102, %145 : vector<8x32xf32>
    %c0_104 = arith.constant 0 : index
    %c3 = arith.constant 3 : index
    %c0_105 = arith.constant 0 : index
    %c0_106 = arith.constant 0 : index
    %147 = vector.load %arg6[%c0_104, %c3, %c0_105, %c0_106] : memref<1x12x32x8xbf16, #tpu.memory_space<vmem>>, vector<1x1x32x8xbf16>
    %148 = vector.shape_cast %147 : vector<1x1x32x8xbf16> to vector<32x8xbf16>
    %cst_107 = arith.constant dense<0.000000e+00> : vector<8x8xf32>
    %149 = tpu.matmul %13, %148, %cst_107 {dimension_numbers = #tpu.dot_dimension_numbers<[1], [0], [0], [1], [0, 0, 1, 1], [], []>} : vector<8x32xbf16>, vector<32x8xbf16>, vector<8x8xf32> -> vector<8x8xf32>
    %c0_108 = arith.constant 0 : index
    %c3_109 = arith.constant 3 : index
    %c0_110 = arith.constant 0 : index
    %c0_111 = arith.constant 0 : index
    %150 = vector.load %arg7[%c0_108, %c3_109, %c0_110, %c0_111] : memref<1x12x1x8xf32, #tpu.memory_space<vmem>>, vector<1x1x1x8xf32>
    %151 = vector.shape_cast %150 : vector<1x1x1x8xf32> to vector<1x8xf32>
    %152 = vector.broadcast %151 : vector<1x8xf32> to vector<8x8xf32>
    %153 = arith.addf %149, %152 : vector<8x8xf32>
    %c0_112 = arith.constant 0 : index
    %c7 = arith.constant 7 : index
    %c0_113 = arith.constant 0 : index
    %c0_114 = arith.constant 0 : index
    %154 = vector.load %arg6[%c0_112, %c7, %c0_113, %c0_114] : memref<1x12x32x8xbf16, #tpu.memory_space<vmem>>, vector<1x1x32x8xbf16>
    %155 = vector.shape_cast %154 : vector<1x1x32x8xbf16> to vector<32x8xbf16>
    %cst_115 = arith.constant dense<0.000000e+00> : vector<8x8xf32>
    %156 = tpu.matmul %13, %155, %cst_115 {dimension_numbers = #tpu.dot_dimension_numbers<[1], [0], [0], [1], [0, 0, 1, 1], [], []>} : vector<8x32xbf16>, vector<32x8xbf16>, vector<8x8xf32> -> vector<8x8xf32>
    %c0_116 = arith.constant 0 : index
    %c7_117 = arith.constant 7 : index
    %c0_118 = arith.constant 0 : index
    %c0_119 = arith.constant 0 : index
    %157 = vector.load %arg7[%c0_116, %c7_117, %c0_118, %c0_119] : memref<1x12x1x8xf32, #tpu.memory_space<vmem>>, vector<1x1x1x8xf32>
    %158 = vector.shape_cast %157 : vector<1x1x1x8xf32> to vector<1x8xf32>
    %159 = vector.broadcast %158 : vector<1x8xf32> to vector<8x8xf32>
    %160 = arith.addf %156, %159 : vector<8x8xf32>
    %c0_120 = arith.constant 0 : index
    %c11 = arith.constant 11 : index
    %c0_121 = arith.constant 0 : index
    %c0_122 = arith.constant 0 : index
    %161 = vector.load %arg6[%c0_120, %c11, %c0_121, %c0_122] : memref<1x12x32x8xbf16, #tpu.memory_space<vmem>>, vector<1x1x32x8xbf16>
    %162 = vector.shape_cast %161 : vector<1x1x32x8xbf16> to vector<32x8xbf16>
    %cst_123 = arith.constant dense<0.000000e+00> : vector<8x8xf32>
    %163 = tpu.matmul %13, %162, %cst_123 {dimension_numbers = #tpu.dot_dimension_numbers<[1], [0], [0], [1], [0, 0, 1, 1], [], []>} : vector<8x32xbf16>, vector<32x8xbf16>, vector<8x8xf32> -> vector<8x8xf32>
    %c0_124 = arith.constant 0 : index
    %c11_125 = arith.constant 11 : index
    %c0_126 = arith.constant 0 : index
    %c0_127 = arith.constant 0 : index
    %164 = vector.load %arg7[%c0_124, %c11_125, %c0_126, %c0_127] : memref<1x12x1x8xf32, #tpu.memory_space<vmem>>, vector<1x1x1x8xf32>
    %165 = vector.shape_cast %164 : vector<1x1x1x8xf32> to vector<1x8xf32>
    %166 = vector.broadcast %165 : vector<1x8xf32> to vector<8x8xf32>
    %167 = arith.addf %163, %166 : vector<8x8xf32>
    %168 = arith.truncf %153 : vector<8x8xf32> to vector<8x8xbf16>
    %169 = arith.truncf %160 : vector<8x8xf32> to vector<8x8xbf16>
    %cst_128 = arith.constant dense<0.000000e+00> : vector<8x8xf32>
    %170 = tpu.matmul %168, %169, %cst_128 {dimension_numbers = #tpu.dot_dimension_numbers<[1], [1], [0], [0], [0, 0, 1, 0], [], []>} : vector<8x8xbf16>, vector<8x8xbf16>, vector<8x8xf32> -> vector<8x8xf32>
    %171 = vector.broadcast %11 : vector<1x8xf32> to vector<8x8xf32>
    %172 = arith.addf %170, %171 : vector<8x8xf32>
    %cst_129 = arith.constant dense<0xFF800000> : vector<8xf32>
    %173 = vector.multi_reduction <maximumf>, %172, %cst_129 [1] : vector<8x8xf32> to vector<8xf32>
    %174 = vector.shape_cast %173 : vector<8xf32> to vector<8x1xf32>
    %175 = vector.broadcast %174 : vector<8x1xf32> to vector<8x8xf32>
    %176 = arith.subf %172, %175 : vector<8x8xf32>
    %177 = math.exp %176 : vector<8x8xf32>
    %cst_130 = arith.constant dense<0.000000e+00> : vector<8xf32>
    %178 = vector.multi_reduction <add>, %177, %cst_130 [1] : vector<8x8xf32> to vector<8xf32>
    %179 = vector.shape_cast %178 : vector<8xf32> to vector<8x1xf32>
    %180 = tpu.reciprocal %179 {approx = true} : vector<8x1xf32> -> vector<8x1xf32>
    %181 = vector.broadcast %180 : vector<8x1xf32> to vector<8x8xf32>
    %182 = arith.mulf %177, %181 : vector<8x8xf32>
    %183 = arith.truncf %182 : vector<8x8xf32> to vector<8x8xbf16>
    %184 = arith.truncf %167 : vector<8x8xf32> to vector<8x8xbf16>
    %cst_131 = arith.constant dense<0.000000e+00> : vector<8x8xf32>
    %185 = tpu.matmul %183, %184, %cst_131 {dimension_numbers = #tpu.dot_dimension_numbers<[1], [0], [0], [1], [0, 0, 1, 1], [], []>} : vector<8x8xbf16>, vector<8x8xbf16>, vector<8x8xf32> -> vector<8x8xf32>
    %186 = arith.truncf %185 : vector<8x8xf32> to vector<8x8xbf16>
    %c0_132 = arith.constant 0 : index
    %c3_133 = arith.constant 3 : index
    %c0_134 = arith.constant 0 : index
    %c0_135 = arith.constant 0 : index
    %187 = vector.load %arg8[%c0_132, %c3_133, %c0_134, %c0_135] : memref<1x4x8x32xbf16, #tpu.memory_space<vmem>>, vector<1x1x8x32xbf16>
    %188 = vector.shape_cast %187 : vector<1x1x8x32xbf16> to vector<8x32xbf16>
    %cst_136 = arith.constant dense<0.000000e+00> : vector<8x32xf32>
    %189 = tpu.matmul %186, %188, %cst_136 {dimension_numbers = #tpu.dot_dimension_numbers<[1], [0], [0], [1], [0, 0, 1, 1], [], []>} : vector<8x8xbf16>, vector<8x32xbf16>, vector<8x32xf32> -> vector<8x32xf32>
    %190 = arith.addf %146, %189 : vector<8x32xf32>
    %c0_137 = arith.constant 0 : index
    %c0_138 = arith.constant 0 : index
    %c0_139 = arith.constant 0 : index
    %191 = vector.load %arg9[%c0_137, %c0_138, %c0_139] : memref<1x1x32xf32, #tpu.memory_space<vmem>>, vector<1x1x32xf32>
    %192 = vector.shape_cast %191 : vector<1x1x32xf32> to vector<1x32xf32>
    %193 = vector.broadcast %192 : vector<1x32xf32> to vector<8x32xf32>
    %194 = arith.addf %190, %193 : vector<8x32xf32>
    %195 = arith.addf %12, %194 : vector<8x32xf32>
    %c0_140 = arith.constant 0 : index
    %c0_141 = arith.constant 0 : index
    %c0_142 = arith.constant 0 : index
    %196 = vector.load %arg10[%c0_140, %c0_141, %c0_142] : memref<1x1x32xf32, #tpu.memory_space<vmem>>, vector<1x1x32xf32>
    %197 = vector.shape_cast %196 : vector<1x1x32xf32> to vector<1x32xf32>
    %c0_143 = arith.constant 0 : index
    %c0_144 = arith.constant 0 : index
    %c0_145 = arith.constant 0 : index
    %198 = vector.load %arg11[%c0_143, %c0_144, %c0_145] : memref<1x1x32xf32, #tpu.memory_space<vmem>>, vector<1x1x32xf32>
    %199 = vector.shape_cast %198 : vector<1x1x32xf32> to vector<1x32xf32>
    %cst_146 = arith.constant dense<0.000000e+00> : vector<8xf32>
    %200 = vector.multi_reduction <add>, %195, %cst_146 [1] : vector<8x32xf32> to vector<8xf32>
    %201 = vector.shape_cast %200 : vector<8xf32> to vector<8x1xf32>
    %cst_147 = arith.constant 3.200000e+01 : f32
    %202 = vector.broadcast %cst_147 : f32 to vector<8x1xf32>
    %203 = arith.divf %201, %202 : vector<8x1xf32>
    %204 = vector.broadcast %203 : vector<8x1xf32> to vector<8x32xf32>
    %205 = arith.subf %195, %204 : vector<8x32xf32>
    %206 = arith.mulf %205, %205 : vector<8x32xf32>
    %cst_148 = arith.constant dense<0.000000e+00> : vector<8xf32>
    %207 = vector.multi_reduction <add>, %206, %cst_148 [1] : vector<8x32xf32> to vector<8xf32>
    %208 = vector.shape_cast %207 : vector<8xf32> to vector<8x1xf32>
    %cst_149 = arith.constant 3.200000e+01 : f32
    %209 = vector.broadcast %cst_149 : f32 to vector<8x1xf32>
    %210 = arith.divf %208, %209 : vector<8x1xf32>
    %cst_150 = arith.constant 9.99999974E-6 : f32
    %211 = vector.broadcast %cst_150 : f32 to vector<8x1xf32>
    %212 = arith.addf %210, %211 : vector<8x1xf32>
    %213 = math.rsqrt %212 : vector<8x1xf32>
    %214 = vector.broadcast %213 : vector<8x1xf32> to vector<8x32xf32>
    %215 = arith.mulf %205, %214 : vector<8x32xf32>
    %216 = vector.broadcast %197 : vector<1x32xf32> to vector<8x32xf32>
    %217 = arith.mulf %215, %216 : vector<8x32xf32>
    %218 = vector.broadcast %199 : vector<1x32xf32> to vector<8x32xf32>
    %219 = arith.addf %217, %218 : vector<8x32xf32>
    %220 = arith.truncf %219 : vector<8x32xf32> to vector<8x32xbf16>
    %c0_151 = arith.constant 0 : index
    %c0_152 = arith.constant 0 : index
    %c0_153 = arith.constant 0 : index
    %221 = vector.load %arg12[%c0_151, %c0_152, %c0_153] : memref<1x32x2048xbf16, #tpu.memory_space<vmem>>, vector<1x32x2048xbf16>
    %222 = vector.shape_cast %221 : vector<1x32x2048xbf16> to vector<32x2048xbf16>
    %cst_154 = arith.constant dense<0.000000e+00> : vector<8x2048xf32>
    %223 = tpu.matmul %220, %222, %cst_154 {dimension_numbers = #tpu.dot_dimension_numbers<[1], [0], [0], [1], [0, 0, 1, 1], [], []>} : vector<8x32xbf16>, vector<32x2048xbf16>, vector<8x2048xf32> -> vector<8x2048xf32>
    %c0_155 = arith.constant 0 : index
    %c0_156 = arith.constant 0 : index
    %c0_157 = arith.constant 0 : index
    %224 = vector.load %arg13[%c0_155, %c0_156, %c0_157] : memref<1x1x2048xf32, #tpu.memory_space<vmem>>, vector<1x1x2048xf32>
    %225 = vector.shape_cast %224 : vector<1x1x2048xf32> to vector<1x2048xf32>
    %226 = vector.broadcast %225 : vector<1x2048xf32> to vector<8x2048xf32>
    %227 = arith.addf %223, %226 : vector<8x2048xf32>
    %cst_158 = arith.constant 0.000000e+00 : f32
    %228 = vector.broadcast %cst_158 : f32 to vector<8x2048xf32>
    %229 = arith.maximumf %227, %228 : vector<8x2048xf32>
    %230 = arith.truncf %229 : vector<8x2048xf32> to vector<8x2048xbf16>
    %c0_159 = arith.constant 0 : index
    %c0_160 = arith.constant 0 : index
    %c0_161 = arith.constant 0 : index
    %231 = vector.load %arg14[%c0_159, %c0_160, %c0_161] : memref<1x2048x32xbf16, #tpu.memory_space<vmem>>, vector<1x2048x32xbf16>
    %232 = vector.shape_cast %231 : vector<1x2048x32xbf16> to vector<2048x32xbf16>
    %cst_162 = arith.constant dense<0.000000e+00> : vector<8x32xf32>
    %233 = tpu.matmul %230, %232, %cst_162 {dimension_numbers = #tpu.dot_dimension_numbers<[1], [0], [0], [1], [0, 0, 1, 1], [], []>} : vector<8x2048xbf16>, vector<2048x32xbf16>, vector<8x32xf32> -> vector<8x32xf32>
    %c0_163 = arith.constant 0 : index
    %c0_164 = arith.constant 0 : index
    %c0_165 = arith.constant 0 : index
    %234 = vector.load %arg15[%c0_163, %c0_164, %c0_165] : memref<1x1x32xf32, #tpu.memory_space<vmem>>, vector<1x1x32xf32>
    %235 = vector.shape_cast %234 : vector<1x1x32xf32> to vector<1x32xf32>
    %236 = vector.broadcast %235 : vector<1x32xf32> to vector<8x32xf32>
    %237 = arith.addf %233, %236 : vector<8x32xf32>
    %238 = arith.addf %219, %237 : vector<8x32xf32>
    %c0_166 = arith.constant 0 : index
    %c0_167 = arith.constant 0 : index
    %c0_168 = arith.constant 0 : index
    %239 = vector.load %arg16[%c0_166, %c0_167, %c0_168] : memref<1x1x32xf32, #tpu.memory_space<vmem>>, vector<1x1x32xf32>
    %240 = vector.shape_cast %239 : vector<1x1x32xf32> to vector<1x32xf32>
    %c0_169 = arith.constant 0 : index
    %c0_170 = arith.constant 0 : index
    %c0_171 = arith.constant 0 : index
    %241 = vector.load %arg17[%c0_169, %c0_170, %c0_171] : memref<1x1x32xf32, #tpu.memory_space<vmem>>, vector<1x1x32xf32>
    %242 = vector.shape_cast %241 : vector<1x1x32xf32> to vector<1x32xf32>
    %cst_172 = arith.constant dense<0.000000e+00> : vector<8xf32>
    %243 = vector.multi_reduction <add>, %238, %cst_172 [1] : vector<8x32xf32> to vector<8xf32>
    %244 = vector.shape_cast %243 : vector<8xf32> to vector<8x1xf32>
    %cst_173 = arith.constant 3.200000e+01 : f32
    %245 = vector.broadcast %cst_173 : f32 to vector<8x1xf32>
    %246 = arith.divf %244, %245 : vector<8x1xf32>
    %247 = vector.broadcast %246 : vector<8x1xf32> to vector<8x32xf32>
    %248 = arith.subf %238, %247 : vector<8x32xf32>
    %249 = arith.mulf %248, %248 : vector<8x32xf32>
    %cst_174 = arith.constant dense<0.000000e+00> : vector<8xf32>
    %250 = vector.multi_reduction <add>, %249, %cst_174 [1] : vector<8x32xf32> to vector<8xf32>
    %251 = vector.shape_cast %250 : vector<8xf32> to vector<8x1xf32>
    %cst_175 = arith.constant 3.200000e+01 : f32
    %252 = vector.broadcast %cst_175 : f32 to vector<8x1xf32>
    %253 = arith.divf %251, %252 : vector<8x1xf32>
    %cst_176 = arith.constant 9.99999974E-6 : f32
    %254 = vector.broadcast %cst_176 : f32 to vector<8x1xf32>
    %255 = arith.addf %253, %254 : vector<8x1xf32>
    %256 = math.rsqrt %255 : vector<8x1xf32>
    %257 = vector.broadcast %256 : vector<8x1xf32> to vector<8x32xf32>
    %258 = arith.mulf %248, %257 : vector<8x32xf32>
    %259 = vector.broadcast %240 : vector<1x32xf32> to vector<8x32xf32>
    %260 = arith.mulf %258, %259 : vector<8x32xf32>
    %261 = vector.broadcast %242 : vector<1x32xf32> to vector<8x32xf32>
    %262 = arith.addf %260, %261 : vector<8x32xf32>
    %c0_177 = arith.constant 0 : index
    %c0_178 = arith.constant 0 : index
    %263 = vector.load %arg21[%c0_177, %c0_178] : memref<8x32xf32, #tpu.memory_space<vmem>>, vector<8x32xf32>
    tpu.vector_store %arg21[%c0_177, %c0_178], %262 {strides = array<i32>} : memref<8x32xf32, #tpu.memory_space<vmem>>, vector<8x32xf32>,
    %c1_i32_179 = arith.constant 1 : i32
    %264 = arith.cmpi eq, %arg1, %c1_i32_179 : i32
    %265 = arith.extui %264 : i1 to i32
    %c0_i32_180 = arith.constant 0 : i32
    %266 = arith.cmpi ne, %265, %c0_i32_180 : i32
    scf.if %266 {
      %267 = arith.truncf %262 : vector<8x32xf32> to vector<8x32xbf16>
      %c0_181 = arith.constant 0 : index
      %c0_182 = arith.constant 0 : index
      %268 = vector.load %arg18[%c0_181, %c0_182] : memref<32x128xbf16, #tpu.memory_space<vmem>>, vector<32x128xbf16>
      %cst_183 = arith.constant dense<0.000000e+00> : vector<8x128xf32>
      %269 = tpu.matmul %267, %268, %cst_183 {dimension_numbers = #tpu.dot_dimension_numbers<[1], [0], [0], [1], [0, 0, 1, 1], [], []>} : vector<8x32xbf16>, vector<32x128xbf16>, vector<8x128xf32> -> vector<8x128xf32>
      %c0_184 = arith.constant 0 : index
      %c0_185 = arith.constant 0 : index
      %270 = vector.load %arg19[%c0_184, %c0_185] : memref<1x128xf32, #tpu.memory_space<vmem>>, vector<1x128xf32>
      %271 = vector.broadcast %270 : vector<1x128xf32> to vector<8x128xf32>
      %272 = arith.addf %269, %271 : vector<8x128xf32>
      %cst_186 = arith.constant 0.000000e+00 : f32
      %273 = vector.broadcast %cst_186 : f32 to vector<8x128xf32>
      %274 = arith.maximumf %272, %273 : vector<8x128xf32>
      %275 = tpu.iota {dimensions = array<i32: 0>} : vector<8x1xi32>
      %c1_i32_187 = arith.constant 1 : i32
      %276 = arith.subi %1, %c1_i32_187 : i32
      %277 = vector.broadcast %276 : i32 to vector<8x1xi32>
      %278 = arith.cmpi slt, %275, %277 : vector<8x1xi32>
      %279 = arith.extui %278 : vector<8x1xi1> to vector<8x1xi32>
      %280 = arith.sitofp %279 : vector<8x1xi32> to vector<8x1xf32>
      %281 = vector.broadcast %280 : vector<8x1xf32> to vector<8x128xf32>
      %282 = arith.mulf %274, %281 : vector<8x128xf32>
      %283 = vector.shape_cast %282 : vector<8x128xf32> to vector<1x8x128xf32>
      %c0_188 = arith.constant 0 : index
      %c0_189 = arith.constant 0 : index
      %c0_190 = arith.constant 0 : index
      %284 = vector.load %arg20[%c0_188, %c0_189, %c0_190] : memref<1x8x128xf32, #tpu.memory_space<vmem>>, vector<1x8x128xf32>
      tpu.vector_store %arg20[%c0_188, %c0_189, %c0_190], %283 {strides = array<i32>} : memref<1x8x128xf32, #tpu.memory_space<vmem>>, vector<1x8x128xf32>,
    } else {
    }
    return
  }
  func.func @transform_0(%arg0: i32, %arg1: i32, %arg2: memref<2xi32, #tpu.memory_space<smem>>) -> (i32, i32, i32) {
    %c0_i32 = arith.constant 0 : i32
    %c0_i32_0 = arith.constant 0 : i32
    %c0_i32_1 = arith.constant 0 : i32
    return %arg0, %c0_i32, %c0_i32_0 : i32, i32, i32
  }
  func.func @transform_1(%arg0: i32, %arg1: i32, %arg2: memref<2xi32, #tpu.memory_space<smem>>) -> (i32, i32) {
    %c0_i32 = arith.constant 0 : i32
    %c0_i32_0 = arith.constant 0 : i32
    %c0_i32_1 = arith.constant 0 : i32
    return %c0_i32, %c0_i32_0 : i32, i32
  }
  func.func @transform_2(%arg0: i32, %arg1: i32, %arg2: memref<2xi32, #tpu.memory_space<smem>>) -> (i32, i32) {
    %c0_i32 = arith.constant 0 : i32
    %c0_i32_0 = arith.constant 0 : i32
    %c0_i32_1 = arith.constant 0 : i32
    return %c0_i32, %c0_i32_0 : i32, i32
  }
  func.func @transform_3(%arg0: i32, %arg1: i32, %arg2: memref<2xi32, #tpu.memory_space<smem>>) -> (i32, i32, i32, i32) {
    %c0_i32 = arith.constant 0 : i32
    %c0_i32_0 = arith.constant 0 : i32
    %c0_i32_1 = arith.constant 0 : i32
    %c0_i32_2 = arith.constant 0 : i32
    return %arg1, %c0_i32, %c0_i32_0, %c0_i32_1 : i32, i32, i32, i32
  }
  func.func @transform_4(%arg0: i32, %arg1: i32, %arg2: memref<2xi32, #tpu.memory_space<smem>>) -> (i32, i32, i32, i32) {
    %c0_i32 = arith.constant 0 : i32
    %c0_i32_0 = arith.constant 0 : i32
    %c0_i32_1 = arith.constant 0 : i32
    %c0_i32_2 = arith.constant 0 : i32
    return %arg1, %c0_i32, %c0_i32_0, %c0_i32_1 : i32, i32, i32, i32
  }
  func.func @transform_5(%arg0: i32, %arg1: i32, %arg2: memref<2xi32, #tpu.memory_space<smem>>) -> (i32, i32, i32, i32) {
    %c0_i32 = arith.constant 0 : i32
    %c0_i32_0 = arith.constant 0 : i32
    %c0_i32_1 = arith.constant 0 : i32
    %c0_i32_2 = arith.constant 0 : i32
    return %arg1, %c0_i32, %c0_i32_0, %c0_i32_1 : i32, i32, i32, i32
  }
  func.func @transform_6(%arg0: i32, %arg1: i32, %arg2: memref<2xi32, #tpu.memory_space<smem>>) -> (i32, i32, i32) {
    %c0_i32 = arith.constant 0 : i32
    %c0_i32_0 = arith.constant 0 : i32
    %c0_i32_1 = arith.constant 0 : i32
    return %arg1, %c0_i32, %c0_i32_0 : i32, i32, i32
  }
  func.func @transform_7(%arg0: i32, %arg1: i32, %arg2: memref<2xi32, #tpu.memory_space<smem>>) -> (i32, i32, i32) {
    %c0_i32 = arith.constant 0 : i32
    %c0_i32_0 = arith.constant 0 : i32
    %c0_i32_1 = arith.constant 0 : i32
    return %arg1, %c0_i32, %c0_i32_0 : i32, i32, i32
  }
  func.func @transform_8(%arg0: i32, %arg1: i32, %arg2: memref<2xi32, #tpu.memory_space<smem>>) -> (i32, i32, i32) {
    %c0_i32 = arith.constant 0 : i32
    %c0_i32_0 = arith.constant 0 : i32
    %c0_i32_1 = arith.constant 0 : i32
    return %arg1, %c0_i32, %c0_i32_0 : i32, i32, i32
  }
  func.func @transform_9(%arg0: i32, %arg1: i32, %arg2: memref<2xi32, #tpu.memory_space<smem>>) -> (i32, i32, i32) {
    %c0_i32 = arith.constant 0 : i32
    %c0_i32_0 = arith.constant 0 : i32
    %c0_i32_1 = arith.constant 0 : i32
    return %arg1, %c0_i32, %c0_i32_0 : i32, i32, i32
  }
  func.func @transform_10(%arg0: i32, %arg1: i32, %arg2: memref<2xi32, #tpu.memory_space<smem>>) -> (i32, i32, i32) {
    %c0_i32 = arith.constant 0 : i32
    %c0_i32_0 = arith.constant 0 : i32
    %c0_i32_1 = arith.constant 0 : i32
    return %arg1, %c0_i32, %c0_i32_0 : i32, i32, i32
  }
  func.func @transform_11(%arg0: i32, %arg1: i32, %arg2: memref<2xi32, #tpu.memory_space<smem>>) -> (i32, i32, i32) {
    %c0_i32 = arith.constant 0 : i32
    %c0_i32_0 = arith.constant 0 : i32
    %c0_i32_1 = arith.constant 0 : i32
    return %arg1, %c0_i32, %c0_i32_0 : i32, i32, i32
  }
  func.func @transform_12(%arg0: i32, %arg1: i32, %arg2: memref<2xi32, #tpu.memory_space<smem>>) -> (i32, i32, i32) {
    %c0_i32 = arith.constant 0 : i32
    %c0_i32_0 = arith.constant 0 : i32
    %c0_i32_1 = arith.constant 0 : i32
    return %arg1, %c0_i32, %c0_i32_0 : i32, i32, i32
  }
  func.func @transform_13(%arg0: i32, %arg1: i32, %arg2: memref<2xi32, #tpu.memory_space<smem>>) -> (i32, i32, i32) {
    %c0_i32 = arith.constant 0 : i32
    %c0_i32_0 = arith.constant 0 : i32
    %c0_i32_1 = arith.constant 0 : i32
    return %arg1, %c0_i32, %c0_i32_0 : i32, i32, i32
  }
  func.func @transform_14(%arg0: i32, %arg1: i32, %arg2: memref<2xi32, #tpu.memory_space<smem>>) -> (i32, i32, i32) {
    %c0_i32 = arith.constant 0 : i32
    %c0_i32_0 = arith.constant 0 : i32
    %c0_i32_1 = arith.constant 0 : i32
    return %arg1, %c0_i32, %c0_i32_0 : i32, i32, i32
  }
  func.func @transform_15(%arg0: i32, %arg1: i32, %arg2: memref<2xi32, #tpu.memory_space<smem>>) -> (i32, i32) {
    %c0_i32 = arith.constant 0 : i32
    %c0_i32_0 = arith.constant 0 : i32
    %c0_i32_1 = arith.constant 0 : i32
    return %c0_i32, %c0_i32_0 : i32, i32
  }
  func.func @transform_16(%arg0: i32, %arg1: i32, %arg2: memref<2xi32, #tpu.memory_space<smem>>) -> (i32, i32) {
    %c0_i32 = arith.constant 0 : i32
    %c0_i32_0 = arith.constant 0 : i32
    %c0_i32_1 = arith.constant 0 : i32
    return %c0_i32, %c0_i32_0 : i32, i32
  }
  func.func @transform_17(%arg0: i32, %arg1: i32, %arg2: memref<2xi32, #tpu.memory_space<smem>>) -> (i32, i32, i32) {
    %c0_i32 = arith.constant 0 : i32
    %c0_i32_0 = arith.constant 0 : i32
    %c0_i32_1 = arith.constant 0 : i32
    return %arg0, %c0_i32, %c0_i32_0 : i32, i32, i32
  }
}

</mosaic_0001>

<llo_original>
// kernel: deepdia_ms2_forward.1
$region0: #{deepdia_ms2_forward.1}
  #allocation0 [shape = 'u32[]', space=smem, size = 0x4, offset = 0x4, fixed_abs, tag = 'smem constant byte address 0x4 - core index']
  #allocation1 [shape = 'u32[144,128]{1,0:T(1,128)}', space=vmem, size = 0x12000, scoped, tag = 'internal scratch']
  #allocation2 [shape = 'f32[8,32]{1,0:T(8,128)}', space=vmem, size = 0x1000, scoped, tag = 'scratch operand']
  #allocation3 [shape = 's32[1]{0}', space=sflag, size = 0x4, scoped, tag = 'scoped memory for deepdia_ms2_forward.1']
  #allocation4 [shape = 'u8[512]{0}', space=smem, size = 0x200, scoped, tag = 'prefetched SMEM operand 0']
  %s0 = inlined_call_operand.vmem [shape: s32[2], index: 0, kind: input, shape index: {}]
  %s1 = inlined_call_operand.vmem [shape: bf16[2,8,64], index: 1, kind: input, shape index: {}]
  %s2 = inlined_call_operand.vmem [shape: bf16[64,32], index: 2, kind: input, shape index: {}]
  %s3 = inlined_call_operand.vmem [shape: f32[1,32], index: 3, kind: input, shape index: {}]
  %s4 = inlined_call_operand.vmem [shape: bf16[2,12,32,8], index: 4, kind: input, shape index: {}]
  %s5 = inlined_call_operand.vmem [shape: f32[2,12,1,8], index: 5, kind: input, shape index: {}]
  %s6 = inlined_call_operand.vmem [shape: bf16[2,4,8,32], index: 6, kind: input, shape index: {}]
  %s7 = inlined_call_operand.vmem [shape: f32[2,1,32], index: 7, kind: input, shape index: {}]
  %s8 = inlined_call_operand.vmem [shape: f32[2,1,32], index: 8, kind: input, shape index: {}]
  %s9 = inlined_call_operand.vmem [shape: f32[2,1,32], index: 9, kind: input, shape index: {}]
  %s10 = inlined_call_operand.vmem [shape: bf16[2,32,2048], index: 10, kind: input, shape index: {}]
  %s11 = inlined_call_operand.vmem [shape: f32[2,1,2048], index: 11, kind: input, shape index: {}]
  %s12 = inlined_call_operand.vmem [shape: bf16[2,2048,32], index: 12, kind: input, shape index: {}]
  %s13 = inlined_call_operand.vmem [shape: f32[2,1,32], index: 13, kind: input, shape index: {}]
  %s14 = inlined_call_operand.vmem [shape: f32[2,1,32], index: 14, kind: input, shape index: {}]
  %s15 = inlined_call_operand.vmem [shape: f32[2,1,32], index: 15, kind: input, shape index: {}]
  %s16 = inlined_call_operand.vmem [shape: bf16[32,128], index: 16, kind: input, shape index: {}]
  %s17 = inlined_call_operand.vmem [shape: f32[1,128], index: 17, kind: input, shape index: {}]
  %s18 = inlined_call_operand.vmem [shape: f32[2,8,128], index: 18, kind: output, shape index: {}]
  %s19 = sld [smem:[#allocation0]]
  $region109: #{deepdia_ms2_forward.1} parent=0
    _
  %s21 = ssub.s32 1, %s19
  %s22 = scalar_select 0, %s21, %s19
  %s23 = sshll.u32 %s0, 4
  %s24 = int_to_ptr.vmem [resolvable:$true] %s23
  %26 = dma.vmem_to_smem %s24, 16, [#allocation4], [#allocation3]
  %27 = dma.done [#allocation3], 16
  %28 = sfence
  loop: start=0, step=1, limit=6
  $region2: #{deepdia_ms2_forward.1} parent=0 // loop_pre_header
    _
  $region3: #{deepdia_ms2_forward.1} parent=0 // loop_header
    %s30 = sphi 0, %s34
    %p31 = scmp.ge.s32.totalorder %s30, 6
    %s37 = sphi 0, %s49
    %s38 = sphi 0, %s45
    %s39 = sphi 0, %s37
    %s40 = sphi 0, %s38
    %s41 = sphi 0, %s39
    %s42 = sphi 0, %s40
    %s52 = sphi 0, %s54
    %s55 = sphi 0, %s52
    %s56 = sphi 0, %s55
    %s72 = sphi 0, %s56
    %s76 = sphi 0, %s76
    %s78 = sphi 0, %s76
    %s79 = sphi 0, %s78
    %s93 = sphi 0, %s79
    %s97 = sphi 0, %s97
    %s99 = sphi 0, %s97
    %s100 = sphi 0, %s99
    %s114 = sphi 0, %s100
    %s120 = sphi 0, %s122
    %s123 = sphi 0, %s120
    %s124 = sphi 0, %s123
    %s140 = sphi 0, %s124
    %s146 = sphi 0, %s148
    %s149 = sphi 0, %s146
    %s150 = sphi 0, %s149
    %s166 = sphi 0, %s150
    %s172 = sphi 0, %s174
    %s175 = sphi 0, %s172
    %s176 = sphi 0, %s175
    %s192 = sphi 0, %s176
    %s198 = sphi 0, %s200
    %s201 = sphi 0, %s198
    %s202 = sphi 0, %s201
    %s218 = sphi 0, %s202
    %s224 = sphi 0, %s226
    %s227 = sphi 0, %s224
    %s228 = sphi 0, %s227
    %s244 = sphi 0, %s228
    %s250 = sphi 0, %s252
    %s253 = sphi 0, %s250
    %s254 = sphi 0, %s253
    %s270 = sphi 0, %s254
    %s276 = sphi 0, %s278
    %s279 = sphi 0, %s276
    %s280 = sphi 0, %s279
    %s296 = sphi 0, %s280
    %s302 = sphi 0, %s304
    %s305 = sphi 0, %s302
    %s306 = sphi 0, %s305
    %s322 = sphi 0, %s306
    %s328 = sphi 0, %s330
    %s331 = sphi 0, %s328
    %s332 = sphi 0, %s331
    %s348 = sphi 0, %s332
    %s354 = sphi 0, %s356
    %s357 = sphi 0, %s354
    %s358 = sphi 0, %s357
    %s374 = sphi 0, %s358
    %s380 = sphi 0, %s382
    %s383 = sphi 0, %s380
    %s384 = sphi 0, %s383
    %s400 = sphi 0, %s384
    %s406 = sphi 0, %s408
    %s409 = sphi 0, %s406
    %s410 = sphi 0, %s409
    %s426 = sphi 0, %s410
    %s430 = sphi 0, %s430
    %s432 = sphi 0, %s430
    %s433 = sphi 0, %s432
    %s447 = sphi 0, %s433
    %s451 = sphi 0, %s451
    %s453 = sphi 0, %s451
    %s454 = sphi 0, %s453
    %s468 = sphi 0, %s454
    %s474 = sphi 0, %s476
    %s477 = sphi 0, %s474
    %s478 = sphi 0, %s477
    %s494 = sphi 0, %s478
  $region4: #{deepdia_ms2_forward.1} parent=0 // loop_header_branch
    %33 = sbr.rel (%p31) target = $region8
  $region5: #{deepdia_ms2_forward.1} parent=0 // loop_body
    %s35 = ssub.s32 %s30, 1
    %s36 = ssub.s32 %s30, 2
    %s43 = sadd.s32 1, %s38
    %p44 = scmp.ge.s32.totalorder %s43, 2
    %s45 = scalar_select %p44, 0, %s43
    %s46 = sadd.s32 1, %s37
    %s47 = scalar_select %p44, %s46, %s37
    %p48 = scmp.ge.s32.totalorder %s47, 2
    %s49 = scalar_select %p48, 0, %s47
    %s50 = ssub.s32 %s37, %s49
    %p51 = scmp.eq.s32.totalorder %s50, 0
    %s53 = sadd.s32 %s52, 1
    %s54 = scalar_select %p51, %s52, %s53
    %p57 = pneg %p51
    %p58 = scmp.eq.s32.totalorder %s30, 3
    %p59 = por %p57, %p58
    %p60 = scmp.ne.s32.totalorder %s52, %s55
    %p61 = scmp.eq.s32.totalorder %s30, 0
    %p62 = por %p60, %p61
    %p63 = scmp.ne.s32.totalorder %s52, %s55
    %p64 = scmp.eq.s32.totalorder %s35, 3
    %p65 = por %p63, %p64
    %p66 = scmp.ne.s32.totalorder %s55, %s56
    %p67 = scmp.eq.s32.totalorder %s35, 0
    %p68 = por %p66, %p67
    %p69 = scmp.ne.s32.totalorder %s55, %s56
    %p70 = scmp.eq.s32.totalorder %s36, 3
    %p71 = por %p69, %p70
    %p73 = scmp.ne.s32.totalorder %s56, %s72
    %p74 = scmp.eq.s32.totalorder %s36, 0
    %p75 = por %p73, %p74
    %s77 = sadd.s32 %s76, 1
    %p80 = scmp.eq.s32.totalorder %s30, 3
    %p81 = scmp.ne.s32.totalorder %s76, %s78
    %p82 = scmp.eq.s32.totalorder %s30, 0
    %p83 = por %p81, %p82
    %p84 = scmp.ne.s32.totalorder %s76, %s78
    %p85 = scmp.eq.s32.totalorder %s35, 3
    %p86 = por %p84, %p85
    %p87 = scmp.ne.s32.totalorder %s78, %s79
    %p88 = scmp.eq.s32.totalorder %s35, 0
    %p89 = por %p87, %p88
    %p90 = scmp.ne.s32.totalorder %s78, %s79
    %p91 = scmp.eq.s32.totalorder %s36, 3
    %p92 = por %p90, %p91
    %p94 = scmp.ne.s32.totalorder %s79, %s93
    %p95 = scmp.eq.s32.totalorder %s36, 0
    %p96 = por %p94, %p95
    %s98 = sadd.s32 %s97, 1
    %p101 = scmp.eq.s32.totalorder %s30, 3
    %p102 = scmp.ne.s32.totalorder %s97, %s99
    %p103 = scmp.eq.s32.totalorder %s30, 0
    %p104 = por %p102, %p103
    %p105 = scmp.ne.s32.totalorder %s97, %s99
    %p106 = scmp.eq.s32.totalorder %s35, 3
    %p107 = por %p105, %p106
    %p108 = scmp.ne.s32.totalorder %s99, %s100
    %p109 = scmp.eq.s32.totalorder %s35, 0
    %p110 = por %p108, %p109
    %p111 = scmp.ne.s32.totalorder %s99, %s100
    %p112 = scmp.eq.s32.totalorder %s36, 3
    %p113 = por %p111, %p112
    %p115 = scmp.ne.s32.totalorder %s100, %s114
    %p116 = scmp.eq.s32.totalorder %s36, 0
    %p117 = por %p115, %p116
    %s118 = ssub.s32 %s38, %s45
    %p119 = scmp.eq.s32.totalorder %s118, 0
    %s121 = sadd.s32 %s120, 1
    %s122 = scalar_select %p119, %s120, %s121
    %p125 = pneg %p119
    %p126 = scmp.eq.s32.totalorder %s30, 3
    %p127 = por %p125, %p126
    %p128 = scmp.ne.s32.totalorder %s120, %s123
    %p129 = scmp.eq.s32.totalorder %s30, 0
    %p130 = por %p128, %p129
    %p131 = scmp.ne.s32.totalorder %s120, %s123
    %p132 = scmp.eq.s32.totalorder %s35, 3
    %p133 = por %p131, %p132
    %p134 = scmp.ne.s32.totalorder %s123, %s124
    %p135 = scmp.eq.s32.totalorder %s35, 0
    %p136 = por %p134, %p135
    %p137 = scmp.ne.s32.totalorder %s123, %s124
    %p138 = scmp.eq.s32.totalorder %s36, 3
    %p139 = por %p137, %p138
    %p141 = scmp.ne.s32.totalorder %s124, %s140
    %p142 = scmp.eq.s32.totalorder %s36, 0
    %p143 = por %p141, %p142
    %s144 = ssub.s32 %s38, %s45
    %p145 = scmp.eq.s32.totalorder %s144, 0
    %s147 = sadd.s32 %s146, 1
    %s148 = scalar_select %p145, %s146, %s147
    %p151 = pneg %p145
    %p152 = scmp.eq.s32.totalorder %s30, 3
    %p153 = por %p151, %p152
    %p154 = scmp.ne.s32.totalorder %s146, %s149
    %p155 = scmp.eq.s32.totalorder %s30, 0
    %p156 = por %p154, %p155
    %p157 = scmp.ne.s32.totalorder %s146, %s149
    %p158 = scmp.eq.s32.totalorder %s35, 3
    %p159 = por %p157, %p158
    %p160 = scmp.ne.s32.totalorder %s149, %s150
    %p161 = scmp.eq.s32.totalorder %s35, 0
    %p162 = por %p160, %p161
    %p163 = scmp.ne.s32.totalorder %s149, %s150
    %p164 = scmp.eq.s32.totalorder %s36, 3
    %p165 = por %p163, %p164
    %p167 = scmp.ne.s32.totalorder %s150, %s166
    %p168 = scmp.eq.s32.totalorder %s36, 0
    %p169 = por %p167, %p168
    %s170 = ssub.s32 %s38, %s45
    %p171 = scmp.eq.s32.totalorder %s170, 0
    %s173 = sadd.s32 %s172, 1
    %s174 = scalar_select %p171, %s172, %s173
    %p177 = pneg %p171
    %p178 = scmp.eq.s32.totalorder %s30, 3
    %p179 = por %p177, %p178
    %p180 = scmp.ne.s32.totalorder %s172, %s175
    %p181 = scmp.eq.s32.totalorder %s30, 0
    %p182 = por %p180, %p181
    %p183 = scmp.ne.s32.totalorder %s172, %s175
    %p184 = scmp.eq.s32.totalorder %s35, 3
    %p185 = por %p183, %p184
    %p186 = scmp.ne.s32.totalorder %s175, %s176
    %p187 = scmp.eq.s32.totalorder %s35, 0
    %p188 = por %p186, %p187
    %p189 = scmp.ne.s32.totalorder %s175, %s176
    %p190 = scmp.eq.s32.totalorder %s36, 3
    %p191 = por %p189, %p190
    %p193 = scmp.ne.s32.totalorder %s176, %s192
    %p194 = scmp.eq.s32.totalorder %s36, 0
    %p195 = por %p193, %p194
    %s196 = ssub.s32 %s38, %s45
    %p197 = scmp.eq.s32.totalorder %s196, 0
    %s199 = sadd.s32 %s198, 1
    %s200 = scalar_select %p197, %s198, %s199
    %p203 = pneg %p197
    %p204 = scmp.eq.s32.totalorder %s30, 3
    %p205 = por %p203, %p204
    %p206 = scmp.ne.s32.totalorder %s198, %s201
    %p207 = scmp.eq.s32.totalorder %s30, 0
    %p208 = por %p206, %p207
    %p209 = scmp.ne.s32.totalorder %s198, %s201
    %p210 = scmp.eq.s32.totalorder %s35, 3
    %p211 = por %p209, %p210
    %p212 = scmp.ne.s32.totalorder %s201, %s202
    %p213 = scmp.eq.s32.totalorder %s35, 0
    %p214 = por %p212, %p213
    %p215 = scmp.ne.s32.totalorder %s201, %s202
    %p216 = scmp.eq.s32.totalorder %s36, 3
    %p217 = por %p215, %p216
    %p219 = scmp.ne.s32.totalorder %s202, %s218
    %p220 = scmp.eq.s32.totalorder %s36, 0
    %p221 = por %p219, %p220
    %s222 = ssub.s32 %s38, %s45
    %p223 = scmp.eq.s32.totalorder %s222, 0
    %s225 = sadd.s32 %s224, 1
    %s226 = scalar_select %p223, %s224, %s225
    %p229 = pneg %p223
    %p230 = scmp.eq.s32.totalorder %s30, 3
    %p231 = por %p229, %p230
    %p232 = scmp.ne.s32.totalorder %s224, %s227
    %p233 = scmp.eq.s32.totalorder %s30, 0
    %p234 = por %p232, %p233
    %p235 = scmp.ne.s32.totalorder %s224, %s227
    %p236 = scmp.eq.s32.totalorder %s35, 3
    %p237 = por %p235, %p236
    %p238 = scmp.ne.s32.totalorder %s227, %s228
    %p239 = scmp.eq.s32.totalorder %s35, 0
    %p240 = por %p238, %p239
    %p241 = scmp.ne.s32.totalorder %s227, %s228
    %p242 = scmp.eq.s32.totalorder %s36, 3
    %p243 = por %p241, %p242
    %p245 = scmp.ne.s32.totalorder %s228, %s244
    %p246 = scmp.eq.s32.totalorder %s36, 0
    %p247 = por %p245, %p246
    %s248 = ssub.s32 %s38, %s45
    %p249 = scmp.eq.s32.totalorder %s248, 0
    %s251 = sadd.s32 %s250, 1
    %s252 = scalar_select %p249, %s250, %s251
    %p255 = pneg %p249
    %p256 = scmp.eq.s32.totalorder %s30, 3
    %p257 = por %p255, %p256
    %p258 = scmp.ne.s32.totalorder %s250, %s253
    %p259 = scmp.eq.s32.totalorder %s30, 0
    %p260 = por %p258, %p259
    %p261 = scmp.ne.s32.totalorder %s250, %s253
    %p262 = scmp.eq.s32.totalorder %s35, 3
    %p263 = por %p261, %p262
    %p264 = scmp.ne.s32.totalorder %s253, %s254
    %p265 = scmp.eq.s32.totalorder %s35, 0
    %p266 = por %p264, %p265
    %p267 = scmp.ne.s32.totalorder %s253, %s254
    %p268 = scmp.eq.s32.totalorder %s36, 3
    %p269 = por %p267, %p268
    %p271 = scmp.ne.s32.totalorder %s254, %s270
    %p272 = scmp.eq.s32.totalorder %s36, 0
    %p273 = por %p271, %p272
    %s274 = ssub.s32 %s38, %s45
    %p275 = scmp.eq.s32.totalorder %s274, 0
    %s277 = sadd.s32 %s276, 1
    %s278 = scalar_select %p275, %s276, %s277
    %p281 = pneg %p275
    %p282 = scmp.eq.s32.totalorder %s30, 3
    %p283 = por %p281, %p282
    %p284 = scmp.ne.s32.totalorder %s276, %s279
    %p285 = scmp.eq.s32.totalorder %s30, 0
    %p286 = por %p284, %p285
    %p287 = scmp.ne.s32.totalorder %s276, %s279
    %p288 = scmp.eq.s32.totalorder %s35, 3
    %p289 = por %p287, %p288
    %p290 = scmp.ne.s32.totalorder %s279, %s280
    %p291 = scmp.eq.s32.totalorder %s35, 0
    %p292 = por %p290, %p291
    %p293 = scmp.ne.s32.totalorder %s279, %s280
    %p294 = scmp.eq.s32.totalorder %s36, 3
    %p295 = por %p293, %p294
    %p297 = scmp.ne.s32.totalorder %s280, %s296
    %p298 = scmp.eq.s32.totalorder %s36, 0
    %p299 = por %p297, %p298
    %s300 = ssub.s32 %s38, %s45
    %p301 = scmp.eq.s32.totalorder %s300, 0
    %s303 = sadd.s32 %s302, 1
    %s304 = scalar_select %p301, %s302, %s303
    %p307 = pneg %p301
    %p308 = scmp.eq.s32.totalorder %s30, 3
    %p309 = por %p307, %p308
    %p310 = scmp.ne.s32.totalorder %s302, %s305
    %p311 = scmp.eq.s32.totalorder %s30, 0
    %p312 = por %p310, %p311
    %p313 = scmp.ne.s32.totalorder %s302, %s305
    %p314 = scmp.eq.s32.totalorder %s35, 3
    %p315 = por %p313, %p314
    %p316 = scmp.ne.s32.totalorder %s305, %s306
    %p317 = scmp.eq.s32.totalorder %s35, 0
    %p318 = por %p316, %p317
    %p319 = scmp.ne.s32.totalorder %s305, %s306
    %p320 = scmp.eq.s32.totalorder %s36, 3
    %p321 = por %p319, %p320
    %p323 = scmp.ne.s32.totalorder %s306, %s322
    %p324 = scmp.eq.s32.totalorder %s36, 0
    %p325 = por %p323, %p324
    %s326 = ssub.s32 %s38, %s45
    %p327 = scmp.eq.s32.totalorder %s326, 0
    %s329 = sadd.s32 %s328, 1
    %s330 = scalar_select %p327, %s328, %s329
    %p333 = pneg %p327
    %p334 = scmp.eq.s32.totalorder %s30, 3
    %p335 = por %p333, %p334
    %p336 = scmp.ne.s32.totalorder %s328, %s331
    %p337 = scmp.eq.s32.totalorder %s30, 0
    %p338 = por %p336, %p337
    %p339 = scmp.ne.s32.totalorder %s328, %s331
    %p340 = scmp.eq.s32.totalorder %s35, 3
    %p341 = por %p339, %p340
    %p342 = scmp.ne.s32.totalorder %s331, %s332
    %p343 = scmp.eq.s32.totalorder %s35, 0
    %p344 = por %p342, %p343
    %p345 = scmp.ne.s32.totalorder %s331, %s332
    %p346 = scmp.eq.s32.totalorder %s36, 3
    %p347 = por %p345, %p346
    %p349 = scmp.ne.s32.totalorder %s332, %s348
    %p350 = scmp.eq.s32.totalorder %s36, 0
    %p351 = por %p349, %p350
    %s352 = ssub.s32 %s38, %s45
    %p353 = scmp.eq.s32.totalorder %s352, 0
    %s355 = sadd.s32 %s354, 1
    %s356 = scalar_select %p353, %s354, %s355
    %p359 = pneg %p353
    %p360 = scmp.eq.s32.totalorder %s30, 3
    %p361 = por %p359, %p360
    %p362 = scmp.ne.s32.totalorder %s354, %s357
    %p363 = scmp.eq.s32.totalorder %s30, 0
    %p364 = por %p362, %p363
    %p365 = scmp.ne.s32.totalorder %s354, %s357
    %p366 = scmp.eq.s32.totalorder %s35, 3
    %p367 = por %p365, %p366
    %p368 = scmp.ne.s32.totalorder %s357, %s358
    %p369 = scmp.eq.s32.totalorder %s35, 0
    %p370 = por %p368, %p369
    %p371 = scmp.ne.s32.totalorder %s357, %s358
    %p372 = scmp.eq.s32.totalorder %s36, 3
    %p373 = por %p371, %p372
    %p375 = scmp.ne.s32.totalorder %s358, %s374
    %p376 = scmp.eq.s32.totalorder %s36, 0
    %p377 = por %p375, %p376
    %s378 = ssub.s32 %s38, %s45
    %p379 = scmp.eq.s32.totalorder %s378, 0
    %s381 = sadd.s32 %s380, 1
    %s382 = scalar_select %p379, %s380, %s381
    %p385 = pneg %p379
    %p386 = scmp.eq.s32.totalorder %s30, 3
    %p387 = por %p385, %p386
    %p388 = scmp.ne.s32.totalorder %s380, %s383
    %p389 = scmp.eq.s32.totalorder %s30, 0
    %p390 = por %p388, %p389
    %p391 = scmp.ne.s32.totalorder %s380, %s383
    %p392 = scmp.eq.s32.totalorder %s35, 3
    %p393 = por %p391, %p392
    %p394 = scmp.ne.s32.totalorder %s383, %s384
    %p395 = scmp.eq.s32.totalorder %s35, 0
    %p396 = por %p394, %p395
    %p397 = scmp.ne.s32.totalorder %s383, %s384
    %p398 = scmp.eq.s32.totalorder %s36, 3
    %p399 = por %p397, %p398
    %p401 = scmp.ne.s32.totalorder %s384, %s400
    %p402 = scmp.eq.s32.totalorder %s36, 0
    %p403 = por %p401, %p402
    %s404 = ssub.s32 %s38, %s45
    %p405 = scmp.eq.s32.totalorder %s404, 0
    %s407 = sadd.s32 %s406, 1
    %s408 = scalar_select %p405, %s406, %s407
    %p411 = pneg %p405
    %p412 = scmp.eq.s32.totalorder %s30, 3
    %p413 = por %p411, %p412
    %p414 = scmp.ne.s32.totalorder %s406, %s409
    %p415 = scmp.eq.s32.totalorder %s30, 0
    %p416 = por %p414, %p415
    %p417 = scmp.ne.s32.totalorder %s406, %s409
    %p418 = scmp.eq.s32.totalorder %s35, 3
    %p419 = por %p417, %p418
    %p420 = scmp.ne.s32.totalorder %s409, %s410
    %p421 = scmp.eq.s32.totalorder %s35, 0
    %p422 = por %p420, %p421
    %p423 = scmp.ne.s32.totalorder %s409, %s410
    %p424 = scmp.eq.s32.totalorder %s36, 3
    %p425 = por %p423, %p424
    %p427 = scmp.ne.s32.totalorder %s410, %s426
    %p428 = scmp.eq.s32.totalorder %s36, 0
    %p429 = por %p427, %p428
    %s431 = sadd.s32 %s430, 1
    %p434 = scmp.eq.s32.totalorder %s30, 3
    %p435 = scmp.ne.s32.totalorder %s430, %s432
    %p436 = scmp.eq.s32.totalorder %s30, 0
    %p437 = por %p435, %p436
    %p438 = scmp.ne.s32.totalorder %s430, %s432
    %p439 = scmp.eq.s32.totalorder %s35, 3
    %p440 = por %p438, %p439
    %p441 = scmp.ne.s32.totalorder %s432, %s433
    %p442 = scmp.eq.s32.totalorder %s35, 0
    %p443 = por %p441, %p442
    %p444 = scmp.ne.s32.totalorder %s432, %s433
    %p445 = scmp.eq.s32.totalorder %s36, 3
    %p446 = por %p444, %p445
    %p448 = scmp.ne.s32.totalorder %s433, %s447
    %p449 = scmp.eq.s32.totalorder %s36, 0
    %p450 = por %p448, %p449
    %s452 = sadd.s32 %s451, 1
    %p455 = scmp.eq.s32.totalorder %s30, 3
    %p456 = scmp.ne.s32.totalorder %s451, %s453
    %p457 = scmp.eq.s32.totalorder %s30, 0
    %p458 = por %p456, %p457
    %p459 = scmp.ne.s32.totalorder %s451, %s453
    %p460 = scmp.eq.s32.totalorder %s35, 3
    %p461 = por %p459, %p460
    %p462 = scmp.ne.s32.totalorder %s453, %s454
    %p463 = scmp.eq.s32.totalorder %s35, 0
    %p464 = por %p462, %p463
    %p465 = scmp.ne.s32.totalorder %s453, %s454
    %p466 = scmp.eq.s32.totalorder %s36, 3
    %p467 = por %p465, %p466
    %p469 = scmp.ne.s32.totalorder %s454, %s468
    %p470 = scmp.eq.s32.totalorder %s36, 0
    %p471 = por %p469, %p470
    %s472 = ssub.s32 %s37, %s49
    %p473 = scmp.eq.s32.totalorder %s472, 0
    %s475 = sadd.s32 %s474, 1
    %s476 = scalar_select %p473, %s474, %s475
    %p479 = pneg %p473
    %p480 = scmp.eq.s32.totalorder %s30, 3
    %p481 = por %p479, %p480
    %p482 = scmp.ne.s32.totalorder %s474, %s477
    %p483 = scmp.eq.s32.totalorder %s30, 0
    %p484 = por %p482, %p483
    %p485 = scmp.ne.s32.totalorder %s474, %s477
    %p486 = scmp.eq.s32.totalorder %s35, 3
    %p487 = por %p485, %p486
    %p488 = scmp.ne.s32.totalorder %s477, %s478
    %p489 = scmp.eq.s32.totalorder %s35, 0
    %p490 = por %p488, %p489
    %p491 = scmp.ne.s32.totalorder %s477, %s478
    %p492 = scmp.eq.s32.totalorder %s36, 3
    %p493 = por %p491, %p492
    %p495 = scmp.ne.s32.totalorder %s478, %s494
    %p496 = scmp.eq.s32.totalorder %s36, 0
    %p497 = por %p495, %p496
    %p498 = scmp.le.s32.totalorder 1, %s30
    %p499 = scmp.lt.s32.totalorder %s30, 5
    %p500 = pnand %p498, %p499
    %p501 = pneg %p500
    // Predicated region
    $region9: #{deepdia_ms2_forward.1} parent=5 // pred_check
      _
    $region10: #{deepdia_ms2_forward.1} parent=5 // pred_check_branch
      %503 = sbr.rel (%p500) target = $region12
    $region11: #{deepdia_ms2_forward.1} parent=5 // pred_region
      %s504 = ssub.s32 %s30, 1
      // Predicated region
      $region13: #{deepdia_ms2_forward.1} parent=11 // pred_check
        %p505 = pneg %p89
      $region14: #{deepdia_ms2_forward.1} parent=11 // pred_check_branch
        %507 = sbr.rel (%p505) target = $region16
      $region15: #{deepdia_ms2_forward.1} parent=11 // pred_region
        _
      $region16: #{deepdia_ms2_forward.1} parent=11 // pred_fallthru
        _
      // Predicated region
      $region17: #{deepdia_ms2_forward.1} parent=11 // pred_check
        %p508 = pneg %p110
      $region18: #{deepdia_ms2_forward.1} parent=11 // pred_check_branch
        %510 = sbr.rel (%p508) target = $region20
      $region19: #{deepdia_ms2_forward.1} parent=11 // pred_region
        _
      $region20: #{deepdia_ms2_forward.1} parent=11 // pred_fallthru
        _
      // Predicated region
      $region21: #{deepdia_ms2_forward.1} parent=11 // pred_check
        %p511 = pneg %p443
      $region22: #{deepdia_ms2_forward.1} parent=11 // pred_check_branch
        %513 = sbr.rel (%p511) target = $region24
      $region23: #{deepdia_ms2_forward.1} parent=11 // pred_region
        _
      $region24: #{deepdia_ms2_forward.1} parent=11 // pred_fallthru
        _
      // Predicated region
      $region25: #{deepdia_ms2_forward.1} parent=11 // pred_check
        %p514 = pneg %p464
      $region26: #{deepdia_ms2_forward.1} parent=11 // pred_check_branch
        %516 = sbr.rel (%p514) target = $region28
      $region27: #{deepdia_ms2_forward.1} parent=11 // pred_region
        _
      $region28: #{deepdia_ms2_forward.1} parent=11 // pred_fallthru
        _
    $region12: #{deepdia_ms2_forward.1} parent=5 // pred_fallthru
      _
    %p517 = scmp.lt.s32.totalorder %s30, 4
    // Predicated region
    $region29: #{deepdia_ms2_forward.1} parent=5 // pred_check
      %p518 = pneg %p517
    $region30: #{deepdia_ms2_forward.1} parent=5 // pred_check_branch
      %520 = sbr.rel (%p518) target = $region32
    $region31: #{deepdia_ms2_forward.1} parent=5 // pred_region
      // Predicated region
      $region33: #{deepdia_ms2_forward.1} parent=31 // pred_check
        %p521 = pneg %p62
      $region34: #{deepdia_ms2_forward.1} parent=31 // pred_check_branch
        %523 = sbr.rel (%p521) target = $region36
      $region35: #{deepdia_ms2_forward.1} parent=31 // pred_region
        %p524 = scmp.lt.s32.totalorder %s37, 1
        %s525 = scalar_select %p524, %s37, 1
        %s526 = smul.addr %s525, 4
        %s527 = scalar_lea.vmem %s1, %s526
      $region36: #{deepdia_ms2_forward.1} parent=31 // pred_fallthru
        _
      // Predicated region
      $region37: #{deepdia_ms2_forward.1} parent=31 // pred_check
        %p528 = pneg %p130
      $region38: #{deepdia_ms2_forward.1} parent=31 // pred_check_branch
        %530 = sbr.rel (%p528) target = $region40
      $region39: #{deepdia_ms2_forward.1} parent=31 // pred_region
        %p531 = scmp.lt.s32.totalorder %s38, 1
        %s532 = scalar_select %p531, %s38, 1
        %s533 = smul.addr %s532, 48
        %s534 = smul.addr %s533, 4
        %s535 = scalar_lea.vmem %s4, %s534
      $region40: #{deepdia_ms2_forward.1} parent=31 // pred_fallthru
        _
      // Predicated region
      $region41: #{deepdia_ms2_forward.1} parent=31 // pred_check
        %p536 = pneg %p156
      $region42: #{deepdia_ms2_forward.1} parent=31 // pred_check_branch
        %538 = sbr.rel (%p536) target = $region44
      $region43: #{deepdia_ms2_forward.1} parent=31 // pred_region
        %p539 = scmp.lt.s32.totalorder %s38, 1
        %s540 = scalar_select %p539, %s38, 1
        %s541 = smul.addr %s540, 12
        %s542 = scalar_lea.vmem %s5, %s541
      $region44: #{deepdia_ms2_forward.1} parent=31 // pred_fallthru
        _
      // Predicated region
      $region45: #{deepdia_ms2_forward.1} parent=31 // pred_check
        %p543 = pneg %p182
      $region46: #{deepdia_ms2_forward.1} parent=31 // pred_check_branch
        %545 = sbr.rel (%p543) target = $region48
      $region47: #{deepdia_ms2_forward.1} parent=31 // pred_region
        %p546 = scmp.lt.s32.totalorder %s38, 1
        %s547 = scalar_select %p546, %s38, 1
        %s548 = smul.addr %s547, 4
        %s549 = smul.addr %s548, 4
        %s550 = scalar_lea.vmem %s6, %s549
      $region48: #{deepdia_ms2_forward.1} parent=31 // pred_fallthru
        _
      // Predicated region
      $region49: #{deepdia_ms2_forward.1} parent=31 // pred_check
        %p551 = pneg %p208
      $region50: #{deepdia_ms2_forward.1} parent=31 // pred_check_branch
        %553 = sbr.rel (%p551) target = $region52
      $region51: #{deepdia_ms2_forward.1} parent=31 // pred_region
        %p554 = scmp.lt.s32.totalorder %s38, 1
        %s555 = scalar_select %p554, %s38, 1
        %s556 = scalar_lea.vmem %s7, %s555
      $region52: #{deepdia_ms2_forward.1} parent=31 // pred_fallthru
        _
      // Predicated region
      $region53: #{deepdia_ms2_forward.1} parent=31 // pred_check
        %p557 = pneg %p234
      $region54: #{deepdia_ms2_forward.1} parent=31 // pred_check_branch
        %559 = sbr.rel (%p557) target = $region56
      $region55: #{deepdia_ms2_forward.1} parent=31 // pred_region
        %p560 = scmp.lt.s32.totalorder %s38, 1
        %s561 = scalar_select %p560, %s38, 1
        %s562 = scalar_lea.vmem %s8, %s561
      $region56: #{deepdia_ms2_forward.1} parent=31 // pred_fallthru
        _
      // Predicated region
      $region57: #{deepdia_ms2_forward.1} parent=31 // pred_check
        %p563 = pneg %p260
      $region58: #{deepdia_ms2_forward.1} parent=31 // pred_check_branch
        %565 = sbr.rel (%p563) target = $region60
      $region59: #{deepdia_ms2_forward.1} parent=31 // pred_region
        %p566 = scmp.lt.s32.totalorder %s38, 1
        %s567 = scalar_select %p566, %s38, 1
        %s568 = scalar_lea.vmem %s9, %s567
      $region60: #{deepdia_ms2_forward.1} parent=31 // pred_fallthru
        _
      // Predicated region
      $region61: #{deepdia_ms2_forward.1} parent=31 // pred_check
        %p569 = pneg %p286
      $region62: #{deepdia_ms2_forward.1} parent=31 // pred_check_branch
        %571 = sbr.rel (%p569) target = $region64
      $region63: #{deepdia_ms2_forward.1} parent=31 // pred_region
        %p572 = scmp.lt.s32.totalorder %s38, 1
        %s573 = scalar_select %p572, %s38, 1
        %s574 = smul.addr %s573, 64
        %s575 = smul.addr %s574, 4
        %s576 = scalar_lea.vmem %s10, %s575
      $region64: #{deepdia_ms2_forward.1} parent=31 // pred_fallthru
        _
      // Predicated region
      $region65: #{deepdia_ms2_forward.1} parent=31 // pred_check
        %p577 = pneg %p312
      $region66: #{deepdia_ms2_forward.1} parent=31 // pred_check_branch
        %579 = sbr.rel (%p577) target = $region68
      $region67: #{deepdia_ms2_forward.1} parent=31 // pred_region
        %p580 = scmp.lt.s32.totalorder %s38, 1
        %s581 = scalar_select %p580, %s38, 1
        %s582 = smul.addr %s581, 16
        %s583 = scalar_lea.vmem %s11, %s582
      $region68: #{deepdia_ms2_forward.1} parent=31 // pred_fallthru
        _
      // Predicated region
      $region69: #{deepdia_ms2_forward.1} parent=31 // pred_check
        %p584 = pneg %p338
      $region70: #{deepdia_ms2_forward.1} parent=31 // pred_check_branch
        %586 = sbr.rel (%p584) target = $region72
      $region71: #{deepdia_ms2_forward.1} parent=31 // pred_region
        %p587 = scmp.lt.s32.totalorder %s38, 1
        %s588 = scalar_select %p587, %s38, 1
        %s589 = smul.addr %s588, 256
        %s590 = smul.addr %s589, 4
        %s591 = scalar_lea.vmem %s12, %s590
      $region72: #{deepdia_ms2_forward.1} parent=31 // pred_fallthru
        _
      // Predicated region
      $region73: #{deepdia_ms2_forward.1} parent=31 // pred_check
        %p592 = pneg %p364
      $region74: #{deepdia_ms2_forward.1} parent=31 // pred_check_branch
        %594 = sbr.rel (%p592) target = $region76
      $region75: #{deepdia_ms2_forward.1} parent=31 // pred_region
        %p595 = scmp.lt.s32.totalorder %s38, 1
        %s596 = scalar_select %p595, %s38, 1
        %s597 = scalar_lea.vmem %s13, %s596
      $region76: #{deepdia_ms2_forward.1} parent=31 // pred_fallthru
        _
      // Predicated region
      $region77: #{deepdia_ms2_forward.1} parent=31 // pred_check
        %p598 = pneg %p390
      $region78: #{deepdia_ms2_forward.1} parent=31 // pred_check_branch
        %600 = sbr.rel (%p598) target = $region80
      $region79: #{deepdia_ms2_forward.1} parent=31 // pred_region
        %p601 = scmp.lt.s32.totalorder %s38, 1
        %s602 = scalar_select %p601, %s38, 1
        %s603 = scalar_lea.vmem %s14, %s602
      $region80: #{deepdia_ms2_forward.1} parent=31 // pred_fallthru
        _
      // Predicated region
      $region81: #{deepdia_ms2_forward.1} parent=31 // pred_check
        %p604 = pneg %p416
      $region82: #{deepdia_ms2_forward.1} parent=31 // pred_check_branch
        %606 = sbr.rel (%p604) target = $region84
      $region83: #{deepdia_ms2_forward.1} parent=31 // pred_region
        %p607 = scmp.lt.s32.totalorder %s38, 1
        %s608 = scalar_select %p607, %s38, 1
        %s609 = scalar_lea.vmem %s15, %s608
      $region84: #{deepdia_ms2_forward.1} parent=31 // pred_fallthru
        _
    $region32: #{deepdia_ms2_forward.1} parent=5 // pred_fallthru
      _
    %p610 = scmp.le.s32.totalorder 1, %s30
    %p611 = scmp.lt.s32.totalorder %s30, 5
    %p612 = pnand %p610, %p611
    %p613 = pneg %p612
    // Predicated region
    $region85: #{deepdia_ms2_forward.1} parent=5 // pred_check
      _
    $region86: #{deepdia_ms2_forward.1} parent=5 // pred_check_branch
      %615 = sbr.rel (%p612) target = $region88
    $region87: #{deepdia_ms2_forward.1} parent=5 // pred_region
      %s616 = ssub.s32 %s30, 1
      %p617 = scmp.lt.s32.totalorder %s39, 1
      %s618 = scalar_select %p617, %s39, 1
      %s619 = smul.addr %s618, 4
      %s620 = scalar_lea.vmem %s1, %s619
      %p621 = pneg %p68
      %p622 = pneg %p65
      %p623 = pneg %p89
      %p624 = pneg %p86
      %p625 = pneg %p110
      %p626 = pneg %p107
      %p627 = scmp.lt.s32.totalorder %s40, 1
      %s628 = scalar_select %p627, %s40, 1
      %s629 = smul.addr %s628, 48
      %s630 = smul.addr %s629, 4
      %s631 = scalar_lea.vmem %s4, %s630
      %p632 = pneg %p136
      %p633 = pneg %p133
      %p634 = scmp.lt.s32.totalorder %s40, 1
      %s635 = scalar_select %p634, %s40, 1
      %s636 = smul.addr %s635, 12
      %s637 = scalar_lea.vmem %s5, %s636
      %p638 = pneg %p162
      %p639 = pneg %p159
      %p640 = scmp.lt.s32.totalorder %s40, 1
      %s641 = scalar_select %p640, %s40, 1
      %s642 = smul.addr %s641, 4
      %s643 = smul.addr %s642, 4
      %s644 = scalar_lea.vmem %s6, %s643
      %p645 = pneg %p188
      %p646 = pneg %p185
      %p647 = scmp.lt.s32.totalorder %s40, 1
      %s648 = scalar_select %p647, %s40, 1
      %s649 = scalar_lea.vmem %s7, %s648
      %p650 = pneg %p214
      %p651 = pneg %p211
      %p652 = scmp.lt.s32.totalorder %s40, 1
      %s653 = scalar_select %p652, %s40, 1
      %s654 = scalar_lea.vmem %s8, %s653
      %p655 = pneg %p240
      %p656 = pneg %p237
      %p657 = scmp.lt.s32.totalorder %s40, 1
      %s658 = scalar_select %p657, %s40, 1
      %s659 = scalar_lea.vmem %s9, %s658
      %p660 = pneg %p266
      %p661 = pneg %p263
      %p662 = scmp.lt.s32.totalorder %s40, 1
      %s663 = scalar_select %p662, %s40, 1
      %s664 = smul.addr %s663, 64
      %s665 = smul.addr %s664, 4
      %s666 = scalar_lea.vmem %s10, %s665
      %p667 = pneg %p292
      %p668 = pneg %p289
      %p669 = scmp.lt.s32.totalorder %s40, 1
      %s670 = scalar_select %p669, %s40, 1
      %s671 = smul.addr %s670, 16
      %s672 = scalar_lea.vmem %s11, %s671
      %p673 = pneg %p318
      %p674 = pneg %p315
      %p675 = scmp.lt.s32.totalorder %s40, 1
      %s676 = scalar_select %p675, %s40, 1
      %s677 = smul.addr %s676, 256
      %s678 = smul.addr %s677, 4
      %s679 = scalar_lea.vmem %s12, %s678
      %p680 = pneg %p344
      %p681 = pneg %p341
      %p682 = scmp.lt.s32.totalorder %s40, 1
      %s683 = scalar_select %p682, %s40, 1
      %s684 = scalar_lea.vmem %s13, %s683
      %p685 = pneg %p370
      %p686 = pneg %p367
      %p687 = scmp.lt.s32.totalorder %s40, 1
      %s688 = scalar_select %p687, %s40, 1
      %s689 = scalar_lea.vmem %s14, %s688
      %p690 = pneg %p396
      %p691 = pneg %p393
      %p692 = scmp.lt.s32.totalorder %s40, 1
      %s693 = scalar_select %p692, %s40, 1
      %s694 = scalar_lea.vmem %s15, %s693
      %p695 = pneg %p422
      %p696 = pneg %p419
      %p697 = pneg %p443
      %p698 = pneg %p440
      %p699 = pneg %p464
      %p700 = pneg %p461
      %p701 = pneg %p490
      %p702 = pneg %p487
      %p703 = scmp.lt.s32.totalorder %s39, 1
      %s704 = scalar_select %p703, %s39, 1
      %s705 = smul.addr %s704, 8
      %s706 = scalar_lea.vmem %s18, %s705
      %p707 = scmp.lt.s32.totalorder %s39, 1
      %s708 = scalar_select %p707, %s39, 1
      %s709 = smul.addr %s708, 4
      %s710 = scalar_lea.vmem %s1, %s709
      %p711 = scmp.lt.s32.totalorder %s40, 1
      %s712 = scalar_select %p711, %s40, 1
      %s713 = smul.addr %s712, 48
      %s714 = smul.addr %s713, 4
      %s715 = scalar_lea.vmem %s4, %s714
      %p716 = scmp.lt.s32.totalorder %s40, 1
      %s717 = scalar_select %p716, %s40, 1
      %s718 = smul.addr %s717, 12
      %s719 = scalar_lea.vmem %s5, %s718
      %p720 = scmp.lt.s32.totalorder %s40, 1
      %s721 = scalar_select %p720, %s40, 1
      %s722 = smul.addr %s721, 4
      %s723 = smul.addr %s722, 4
      %s724 = scalar_lea.vmem %s6, %s723
      %p725 = scmp.lt.s32.totalorder %s40, 1
      %s726 = scalar_select %p725, %s40, 1
      %s727 = scalar_lea.vmem %s7, %s726
      %p728 = scmp.lt.s32.totalorder %s40, 1
      %s729 = scalar_select %p728, %s40, 1
      %s730 = scalar_lea.vmem %s8, %s729
      %p731 = scmp.lt.s32.totalorder %s40, 1
      %s732 = scalar_select %p731, %s40, 1
      %s733 = scalar_lea.vmem %s9, %s732
      %p734 = scmp.lt.s32.totalorder %s40, 1
      %s735 = scalar_select %p734, %s40, 1
      %s736 = smul.addr %s735, 64
      %s737 = smul.addr %s736, 4
      %s738 = scalar_lea.vmem %s10, %s737
      %p739 = scmp.lt.s32.totalorder %s40, 1
      %s740 = scalar_select %p739, %s40, 1
      %s741 = smul.addr %s740, 16
      %s742 = scalar_lea.vmem %s11, %s741
      %p743 = scmp.lt.s32.totalorder %s40, 1
      %s744 = scalar_select %p743, %s40, 1
      %s745 = smul.addr %s744, 256
      %s746 = smul.addr %s745, 4
      %s747 = scalar_lea.vmem %s12, %s746
      %p748 = scmp.lt.s32.totalorder %s40, 1
      %s749 = scalar_select %p748, %s40, 1
      %s750 = scalar_lea.vmem %s13, %s749
      %p751 = scmp.lt.s32.totalorder %s40, 1
      %s752 = scalar_select %p751, %s40, 1
      %s753 = scalar_lea.vmem %s14, %s752
      %p754 = scmp.lt.s32.totalorder %s40, 1
      %s755 = scalar_select %p754, %s40, 1
      %s756 = scalar_lea.vmem %s15, %s755
      %p757 = scmp.lt.s32.totalorder %s39, 1
      %s758 = scalar_select %p757, %s39, 1
      %s759 = smul.addr %s758, 8
      %s760 = scalar_lea.vmem %s18, %s759
      %s762 = sld [smem:[#allocation4 + %s39]]
      %p763 = scmp.eq.s32.totalorder %s40, 0
      // Predicated region
      $region89: #{deepdia_ms2_forward.1} parent=87 // pred_check
        %p764 = pneg %p763
      $region90: #{deepdia_ms2_forward.1} parent=87 // pred_check_branch
        %766 = sbr.rel (%p764) target = $region92
      $region91: #{deepdia_ms2_forward.1} parent=87 // pred_region
        %v767 = vld [vmem:[%s710] sm:$0xf]
        %v768 = vld [vmem:[%s2] sm:$0xf]
        %v769 = vld [vmem:[%s2 + $0x4] sm:$0xf]
        %v770 = vld [vmem:[%s2 + $0x8] sm:$0xf]
        %v771 = vld [vmem:[%s2 + $0xc] sm:$0xf]
        %v772 = vld [vmem:[%s2 + $0x10] sm:$0xf]
        %v773 = vld [vmem:[%s2 + $0x14] sm:$0xf]
        %v774 = vld [vmem:[%s2 + $0x18] sm:$0xf]
        %v775 = vld [vmem:[%s2 + $0x1c] sm:$0xf]
        %v776 = vld [vmem:[%s3] sm:$0x1]
        %v778 = vlaneseq
        %v779 = vshrl.u32 %v778, 7
        %v780 = vsub.s32 0, %v779
        %v781 = vrot.slane %v776, %v780
        %v791 = vunpack.c.l.b16 %v768
        %v792 = vunpack.c.l.b16 %v769
        %v793 = vunpack.c.l.b16 %v770
        %v794 = vunpack.c.l.b16 %v771
        %v795 = vunpack.c.l.b16 %v772
        %v796 = vunpack.c.l.b16 %v773
        %v797 = vunpack.c.l.b16 %v774
        %v798 = vunpack.c.l.b16 %v775
        %v799 = vpack.c.b16 %v792, %v791
        %v800 = vpack.c.b16 %v794, %v793
        %v801 = vpack.c.b16 %v796, %v795
        %v802 = vpack.c.b16 %v798, %v797
        %vm807 = vcmask 523264
        %v809 = vsel %vm807, %v767, 0
        %811 = vmatprep.subr.bf16.mxu0 0
        %812 = vmatpush1.bf16.msra.mxu0 %v799
        %813 = vmatprep.subr.bf16.mxu0 0
        %814 = vmatpush1.bf16.msra.mxu0 %v800
        %815 = vmatprep.subr.bf16.mxu0 0
        %816 = vmatpush1.bf16.msra.mxu0 %v801
        %817 = vmatprep.subr.bf16.mxu0 0
        %818 = vmatpush1.bf16.msra.mxu0 %v802
        %819 = vmatprep.subr.bf16.mxu0 0
        %820 = vmatpush1.bf16.msra.mxu0 0
        %821 = vmatprep.subr.bf16.mxu0 0
        %822 = vmatpush1.bf16.msra.mxu0 0
        %823 = vmatprep.subr.bf16.mxu0 0
        %824 = vmatpush1.bf16.msra.mxu0 0
        %825 = vmatprep.subr.bf16.mxu0 0
        %826 = vmatpush1.bf16.msra.mxu0 0
        %827 = vmatprep.subr.bf16.mxu0 0
        %828 = vmatpush1.bf16.msra.mxu0 0
        %829 = vmatprep.subr.bf16.mxu0 0
        %830 = vmatpush1.bf16.msra.mxu0 0
        %831 = vmatprep.subr.bf16.mxu0 0
        %832 = vmatpush1.bf16.msra.mxu0 0
        %833 = vmatprep.subr.bf16.mxu0 0
        %834 = vmatpush1.bf16.msra.mxu0 0
        %835 = vmatprep.subr.bf16.mxu0 0
        %836 = vmatpush1.bf16.msra.mxu0 0
        %837 = vmatprep.subr.bf16.mxu0 0
        %838 = vmatpush1.bf16.msra.mxu0 0
        %839 = vmatprep.subr.bf16.mxu0 0
        %840 = vmatpush1.bf16.msra.mxu0 0
        %841 = vmatprep.subr.bf16.mxu0 0
        %842 = vmatpush1.bf16.msra.mxu0 0
        %843 = vmatprep.mubr.bf16.mxu0 0
        %844 = vmatmul.mubr.bf16.gmra.mrb[0].mxu0 %v809
        %v845 = vpop.f32.mrb[0].mxu0
        %v846 = vadd.f32 %v781, %v845
        %v847 = vpop.f32.mrb[0].mxu0
        %v848 = vpop.f32.mrb[0].mxu0
        %v849 = vpop.f32.mrb[0].mxu0
        %850 = vdwg.mxu0
        %v851 = vmax.f32 %v846, 0.0
        %vm852 = vcmask 261120
        %853 = vst.msk [vmem:[#allocation2] sm:$0xff] %vm852, %v851
      $region92: #{deepdia_ms2_forward.1} parent=87 // pred_fallthru
        _
      %v854 = vlaneseq
      %v855 = vand.u32 %v854, 127
      %s856 = ssub.s32 %s762, 1
      %v857 = vstv %s856
      %vm858 = vcmp.lt.s32.totalorder %v855, %v857
      %v859 = vsel %vm858, 0.0, -1e+30
      %v860 = vld [vmem:[#allocation2] sm:$0xff]
      %v861 = vpack.c.bf16 %v860, %v860
      %v862 = vld [vmem:[%s715] sm:$0xf]
      %v863 = vld [vmem:[%s715 + $0x4] sm:$0xf]
      %v864 = vld [vmem:[%s715 + $0x8] sm:$0xf]
      %v865 = vld [vmem:[%s715 + $0xc] sm:$0xf]
      %v866 = vld [vmem:[%s719] sm:$0x1]
      %v868 = vlaneseq
      %v869 = vshrl.u32 %v868, 7
      %v870 = vsub.s32 0, %v869
      %v871 = vrot.slane %v866, %v870
      %v877 = vunpack.c.l.b16 %v862
      %v878 = vunpack.c.l.b16 %v863
      %v879 = vunpack.c.l.b16 %v864
      %v880 = vunpack.c.l.b16 %v865
      %v881 = vpack.c.b16 %v878, %v877
      %v882 = vpack.c.b16 %v880, %v879
      %vm885 = vcmask 261120
      %v887 = vsel %vm885, %v861, 0
      %889 = vmatprep.subr.bf16.mxu0 0
      %890 = vmatpush1.bf16.msra.mxu0 %v881
      %891 = vmatprep.subr.bf16.mxu0 0
      %892 = vmatpush1.bf16.msra.mxu0 %v882
      %893 = vmatprep.subr.bf16.mxu0 0
      %894 = vmatpush1.bf16.msra.mxu0 0
      %895 = vmatprep.subr.bf16.mxu0 0
      %896 = vmatpush1.bf16.msra.mxu0 0
      %897 = vmatprep.subr.bf16.mxu0 0
      %898 = vmatpush1.bf16.msra.mxu0 0
      %899 = vmatprep.subr.bf16.mxu0 0
      %900 = vmatpush1.bf16.msra.mxu0 0
      %901 = vmatprep.subr.bf16.mxu0 0
      %902 = vmatpush1.bf16.msra.mxu0 0
      %903 = vmatprep.subr.bf16.mxu0 0
      %904 = vmatpush1.bf16.msra.mxu0 0
      %905 = vmatprep.subr.bf16.mxu0 0
      %906 = vmatpush1.bf16.msra.mxu0 0
      %907 = vmatprep.subr.bf16.mxu0 0
      %908 = vmatpush1.bf16.msra.mxu0 0
      %909 = vmatprep.subr.bf16.mxu0 0
      %910 = vmatpush1.bf16.msra.mxu0 0
      %911 = vmatprep.subr.bf16.mxu0 0
      %912 = vmatpush1.bf16.msra.mxu0 0
      %913 = vmatprep.subr.bf16.mxu0 0
      %914 = vmatpush1.bf16.msra.mxu0 0
      %915 = vmatprep.subr.bf16.mxu0 0
      %916 = vmatpush1.bf16.msra.mxu0 0
      %917 = vmatprep.subr.bf16.mxu0 0
      %918 = vmatpush1.bf16.msra.mxu0 0
      %919 = vmatprep.subr.bf16.mxu0 0
      %920 = vmatpush1.bf16.msra.mxu0 0
      %921 = vmatprep.mubr.bf16.mxu0 0
      %922 = vmatmul.mubr.bf16.gmra.mrb[0].mxu0 %v887
      %v923 = vpop.f32.mrb[0].mxu0
      %v924 = vadd.f32 %v871, %v923
      %v925 = vpop.f32.mrb[0].mxu0
      %v926 = vpop.f32.mrb[0].mxu0
      %v927 = vpop.f32.mrb[0].mxu0
      %928 = vdwg.mxu0
      %s929 = scalar_lea.vmem %s715, 64
      %v930 = vld [vmem:[%s929] sm:$0xf]
      %v931 = vld [vmem:[%s929 + $0x4] sm:$0xf]
      %v932 = vld [vmem:[%s929 + $0x8] sm:$0xf]
      %v933 = vld [vmem:[%s929 + $0xc] sm:$0xf]
      %s934 = scalar_lea.vmem %s719, 4
      %v935 = vld [vmem:[%s934] sm:$0x1]
      %v937 = vlaneseq
      %v938 = vshrl.u32 %v937, 7
      %v939 = vsub.s32 0, %v938
      %v940 = vrot.slane %v935, %v939
      %v946 = vunpack.c.l.b16 %v930
      %v947 = vunpack.c.l.b16 %v931
      %v948 = vunpack.c.l.b16 %v932
      %v949 = vunpack.c.l.b16 %v933
      %v950 = vpack.c.b16 %v947, %v946
      %v951 = vpack.c.b16 %v949, %v948
      %954 = vmatprep.subr.bf16.mxu0 0
      %955 = vmatpush1.bf16.msra.mxu0 %v950
      %956 = vmatprep.subr.bf16.mxu0 0
      %957 = vmatpush1.bf16.msra.mxu0 %v951
      %958 = vmatprep.subr.bf16.mxu0 0
      %959 = vmatpush1.bf16.msra.mxu0 0
      %960 = vmatprep.subr.bf16.mxu0 0
      %961 = vmatpush1.bf16.msra.mxu0 0
      %962 = vmatprep.subr.bf16.mxu0 0
      %963 = vmatpush1.bf16.msra.mxu0 0
      %964 = vmatprep.subr.bf16.mxu0 0
      %965 = vmatpush1.bf16.msra.mxu0 0
      %966 = vmatprep.subr.bf16.mxu0 0
      %967 = vmatpush1.bf16.msra.mxu0 0
      %968 = vmatprep.subr.bf16.mxu0 0
      %969 = vmatpush1.bf16.msra.mxu0 0
      %970 = vmatprep.subr.bf16.mxu0 0
      %971 = vmatpush1.bf16.msra.mxu0 0
      %972 = vmatprep.subr.bf16.mxu0 0
      %973 = vmatpush1.bf16.msra.mxu0 0
      %974 = vmatprep.subr.bf16.mxu0 0
      %975 = vmatpush1.bf16.msra.mxu0 0
      %976 = vmatprep.subr.bf16.mxu0 0
      %977 = vmatpush1.bf16.msra.mxu0 0
      %978 = vmatprep.subr.bf16.mxu0 0
      %979 = vmatpush1.bf16.msra.mxu0 0
      %980 = vmatprep.subr.bf16.mxu0 0
      %981 = vmatpush1.bf16.msra.mxu0 0
      %982 = vmatprep.subr.bf16.mxu0 0
      %983 = vmatpush1.bf16.msra.mxu0 0
      %984 = vmatprep.subr.bf16.mxu0 0
      %985 = vmatpush1.bf16.msra.mxu0 0
      %986 = vmatprep.mubr.bf16.mxu0 0
      %987 = vmatmul.mubr.bf16.gmra.mrb[0].mxu0 %v887
      %v988 = vpop.f32.mrb[0].mxu0
      %v989 = vadd.f32 %v940, %v988
      %v990 = vpop.f32.mrb[0].mxu0
      %v991 = vpop.f32.mrb[0].mxu0
      %v992 = vpop.f32.mrb[0].mxu0
      %993 = vdwg.mxu0
      %s994 = scalar_lea.vmem %s715, 128
      %v995 = vld [vmem:[%s994] sm:$0xf]
      %v996 = vld [vmem:[%s994 + $0x4] sm:$0xf]
      %v997 = vld [vmem:[%s994 + $0x8] sm:$0xf]
      %v998 = vld [vmem:[%s994 + $0xc] sm:$0xf]
      %s999 = scalar_lea.vmem %s719, 8
      %v1000 = vld [vmem:[%s999] sm:$0x1]
      %v1002 = vlaneseq
      %v1003 = vshrl.u32 %v1002, 7
      %v1004 = vsub.s32 0, %v1003
      %v1005 = vrot.slane %v1000, %v1004
      %v1011 = vunpack.c.l.b16 %v995
      %v1012 = vunpack.c.l.b16 %v996
      %v1013 = vunpack.c.l.b16 %v997
      %v1014 = vunpack.c.l.b16 %v998
      %v1015 = vpack.c.b16 %v1012, %v1011
      %v1016 = vpack.c.b16 %v1014, %v1013
      %1019 = vmatprep.subr.bf16.mxu0 0
      %1020 = vmatpush1.bf16.msra.mxu0 %v1015
      %1021 = vmatprep.subr.bf16.mxu0 0
      %1022 = vmatpush1.bf16.msra.mxu0 %v1016
      %1023 = vmatprep.subr.bf16.mxu0 0
      %1024 = vmatpush1.bf16.msra.mxu0 0
      %1025 = vmatprep.subr.bf16.mxu0 0
      %1026 = vmatpush1.bf16.msra.mxu0 0
      %1027 = vmatprep.subr.bf16.mxu0 0
      %1028 = vmatpush1.bf16.msra.mxu0 0
      %1029 = vmatprep.subr.bf16.mxu0 0
      %1030 = vmatpush1.bf16.msra.mxu0 0
      %1031 = vmatprep.subr.bf16.mxu0 0
      %1032 = vmatpush1.bf16.msra.mxu0 0
      %1033 = vmatprep.subr.bf16.mxu0 0
      %1034 = vmatpush1.bf16.msra.mxu0 0
      %1035 = vmatprep.subr.bf16.mxu0 0
      %1036 = vmatpush1.bf16.msra.mxu0 0
      %1037 = vmatprep.subr.bf16.mxu0 0
      %1038 = vmatpush1.bf16.msra.mxu0 0
      %1039 = vmatprep.subr.bf16.mxu0 0
      %1040 = vmatpush1.bf16.msra.mxu0 0
      %1041 = vmatprep.subr.bf16.mxu0 0
      %1042 = vmatpush1.bf16.msra.mxu0 0
      %1043 = vmatprep.subr.bf16.mxu0 0
      %1044 = vmatpush1.bf16.msra.mxu0 0
      %1045 = vmatprep.subr.bf16.mxu0 0
      %1046 = vmatpush1.bf16.msra.mxu0 0
      %1047 = vmatprep.subr.bf16.mxu0 0
      %1048 = vmatpush1.bf16.msra.mxu0 0
      %1049 = vmatprep.subr.bf16.mxu0 0
      %1050 = vmatpush1.bf16.msra.mxu0 0
      %1051 = vmatprep.mubr.bf16.mxu0 0
      %1052 = vmatmul.mubr.bf16.gmra.mrb[0].mxu0 %v887
      %v1053 = vpop.f32.mrb[0].mxu0
      %v1054 = vadd.f32 %v1005, %v1053
      %v1055 = vpop.f32.mrb[0].mxu0
      %v1056 = vpop.f32.mrb[0].mxu0
      %v1057 = vpop.f32.mrb[0].mxu0
      %1058 = vdwg.mxu0
      %v1059 = vpack.c.bf16 %v924, %v924
      %v1060 = vpack.c.bf16 %v989, %v989
      %vm1061 = vcmask 64512
      %v1063 = vsel %vm1061, %v1059, 0
      %v1066 = vsel %vm1061, %v1060, 0
      %1068 = vmatprep.subr.bf16.mxu0 0
      %1069 = vmatpush1.bf16.xpose.msra.mxu0 %v1066
      %1070 = vmatprep.subr.bf16.mxu0 0
      %1071 = vmatpush1.bf16.xpose.msra.mxu0 0
      %1072 = vmatprep.subr.bf16.mxu0 0
      %1073 = vmatpush1.bf16.xpose.msra.mxu0 0
      %1074 = vmatprep.subr.bf16.mxu0 0
      %1075 = vmatpush1.bf16.xpose.msra.mxu0 0
      %1076 = vmatprep.subr.bf16.mxu0 0
      %1077 = vmatpush1.bf16.xpose.msra.mxu0 0
      %1078 = vmatprep.subr.bf16.mxu0 0
      %1079 = vmatpush1.bf16.xpose.msra.mxu0 0
      %1080 = vmatprep.subr.bf16.mxu0 0
      %1081 = vmatpush1.bf16.xpose.msra.mxu0 0
      %1082 = vmatprep.subr.bf16.mxu0 0
      %1083 = vmatpush1.bf16.xpose.msra.mxu0 0
      %1084 = vmatprep.subr.bf16.mxu0 0
      %1085 = vmatpush1.bf16.xpose.msra.mxu0 0
      %1086 = vmatprep.subr.bf16.mxu0 0
      %1087 = vmatpush1.bf16.xpose.msra.mxu0 0
      %1088 = vmatprep.subr.bf16.mxu0 0
      %1089 = vmatpush1.bf16.xpose.msra.mxu0 0
      %1090 = vmatprep.subr.bf16.mxu0 0
      %1091 = vmatpush1.bf16.xpose.msra.mxu0 0
      %1092 = vmatprep.subr.bf16.mxu0 0
      %1093 = vmatpush1.bf16.xpose.msra.mxu0 0
      %1094 = vmatprep.subr.bf16.mxu0 0
      %1095 = vmatpush1.bf16.xpose.msra.mxu0 0
      %1096 = vmatprep.subr.bf16.mxu0 0
      %1097 = vmatpush1.bf16.xpose.msra.mxu0 0
      %1098 = vmatprep.subr.bf16.mxu0 0
      %1099 = vmatpush1.bf16.xpose.msra.mxu0 0
      %1100 = vmatprep.mubr.bf16.mxu0 0
      %1101 = vmatmul.mubr.bf16.gmra.mrb[0].mxu0 %v1063
      %v1102 = vpop.f32.mrb[0].mxu0
      %v1103 = vadd.f32 %v859, %v1102
      %v1104 = vpop.f32.mrb[0].mxu0
      %v1105 = vpop.f32.mrb[0].mxu0
      %v1106 = vpop.f32.mrb[0].mxu0
      %1107 = vdwg.mxu0
      %v1108 = vsel %vm1061, %v1103, -inf
      %1109 = vmax.xlane.f32.xlu0 %v1108
      %v1110 = vpop.xlane.xlu0 %1109
      %v1111 = vsub.f32 %v1103, %v1110
      %v1112 = vmul.f32 %v1111, 1.442695
      %v1113 = vpow.pop %v1112
      %v1114 = vsel %vm1061, %v1113, 0.0
      %1115 = vadd.xlane.f32.xlu0 %v1114
      %v1116 = vpop.xlane.xlu0 %1115
      %v1117 = vrcp.pop %v1116
      %v1118 = vmul.f32 %v1113, %v1117
      %v1119 = vpack.c.bf16 %v1118, %v1118
      %v1120 = vpack.c.bf16 %v1054, %v1054
      %v1122 = vsel %vm1061, %v1119, 0
      %vm1124 = vcmask 1043456
      %v1126 = vsel %vm1124, %v1120, 0
      %1128 = vmatprep.subr.bf16.mxu0 0
      %1129 = vmatpush1.bf16.msra.mxu0 %v1126
      %1130 = vmatprep.subr.bf16.mxu0 0
      %1131 = vmatpush1.bf16.msra.mxu0 0
      %1132 = vmatprep.subr.bf16.mxu0 0
      %1133 = vmatpush1.bf16.msra.mxu0 0
      %1134 = vmatprep.subr.bf16.mxu0 0
      %1135 = vmatpush1.bf16.msra.mxu0 0
      %1136 = vmatprep.subr.bf16.mxu0 0
      %1137 = vmatpush1.bf16.msra.mxu0 0
      %1138 = vmatprep.subr.bf16.mxu0 0
      %1139 = vmatpush1.bf16.msra.mxu0 0
      %1140 = vmatprep.subr.bf16.mxu0 0
      %1141 = vmatpush1.bf16.msra.mxu0 0
      %1142 = vmatprep.subr.bf16.mxu0 0
      %1143 = vmatpush1.bf16.msra.mxu0 0
      %1144 = vmatprep.subr.bf16.mxu0 0
      %1145 = vmatpush1.bf16.msra.mxu0 0
      %1146 = vmatprep.subr.bf16.mxu0 0
      %1147 = vmatpush1.bf16.msra.mxu0 0
      %1148 = vmatprep.subr.bf16.mxu0 0
      %1149 = vmatpush1.bf16.msra.mxu0 0
      %1150 = vmatprep.subr.bf16.mxu0 0
      %1151 = vmatpush1.bf16.msra.mxu0 0
      %1152 = vmatprep.subr.bf16.mxu0 0
      %1153 = vmatpush1.bf16.msra.mxu0 0
      %1154 = vmatprep.subr.bf16.mxu0 0
      %1155 = vmatpush1.bf16.msra.mxu0 0
      %1156 = vmatprep.subr.bf16.mxu0 0
      %1157 = vmatpush1.bf16.msra.mxu0 0
      %1158 = vmatprep.subr.bf16.mxu0 0
      %1159 = vmatpush1.bf16.msra.mxu0 0
      %1160 = vmatprep.mubr.bf16.mxu0 0
      %1161 = vmatmul.mubr.bf16.gmra.mrb[0].mxu0 %v1122
      %v1162 = vpop.f32.mrb[0].mxu0
      %v1163 = vadd.f32 0.0, %v1162
      %v1164 = vpop.f32.mrb[0].mxu0
      %v1165 = vpop.f32.mrb[0].mxu0
      %v1166 = vpop.f32.mrb[0].mxu0
      %1167 = vdwg.mxu0
      %v1168 = vpack.c.bf16 %v1163, %v1163
      %v1169 = vld [vmem:[%s724] sm:$0xf]
      %s1170 = scalar_lea.vmem %s715, 16
      %v1171 = vld [vmem:[%s1170] sm:$0xf]
      %v1172 = vld [vmem:[%s1170 + $0x4] sm:$0xf]
      %v1173 = vld [vmem:[%s1170 + $0x8] sm:$0xf]
      %v1174 = vld [vmem:[%s1170 + $0xc] sm:$0xf]
      %s1175 = scalar_lea.vmem %s719, 1
      %v1176 = vld [vmem:[%s1175] sm:$0x1]
      %v1178 = vlaneseq
      %v1179 = vshrl.u32 %v1178, 7
      %v1180 = vsub.s32 0, %v1179
      %v1181 = vrot.slane %v1176, %v1180
      %v1187 = vunpack.c.l.b16 %v1171
      %v1188 = vunpack.c.l.b16 %v1172
      %v1189 = vunpack.c.l.b16 %v1173
      %v1190 = vunpack.c.l.b16 %v1174
      %v1191 = vpack.c.b16 %v1188, %v1187
      %v1192 = vpack.c.b16 %v1190, %v1189
      %1195 = vmatprep.subr.bf16.mxu0 0
      %1196 = vmatpush1.bf16.msra.mxu0 %v1191
      %1197 = vmatprep.subr.bf16.mxu0 0
      %1198 = vmatpush1.bf16.msra.mxu0 %v1192
      %1199 = vmatprep.subr.bf16.mxu0 0
      %1200 = vmatpush1.bf16.msra.mxu0 0
      %1201 = vmatprep.subr.bf16.mxu0 0
      %1202 = vmatpush1.bf16.msra.mxu0 0
      %1203 = vmatprep.subr.bf16.mxu0 0
      %1204 = vmatpush1.bf16.msra.mxu0 0
      %1205 = vmatprep.subr.bf16.mxu0 0
      %1206 = vmatpush1.bf16.msra.mxu0 0
      %1207 = vmatprep.subr.bf16.mxu0 0
      %1208 = vmatpush1.bf16.msra.mxu0 0
      %1209 = vmatprep.subr.bf16.mxu0 0
      %1210 = vmatpush1.bf16.msra.mxu0 0
      %1211 = vmatprep.subr.bf16.mxu0 0
      %1212 = vmatpush1.bf16.msra.mxu0 0
      %1213 = vmatprep.subr.bf16.mxu0 0
      %1214 = vmatpush1.bf16.msra.mxu0 0
      %1215 = vmatprep.subr.bf16.mxu0 0
      %1216 = vmatpush1.bf16.msra.mxu0 0
      %1217 = vmatprep.subr.bf16.mxu0 0
      %1218 = vmatpush1.bf16.msra.mxu0 0
      %1219 = vmatprep.subr.bf16.mxu0 0
      %1220 = vmatpush1.bf16.msra.mxu0 0
      %1221 = vmatprep.subr.bf16.mxu0 0
      %1222 = vmatpush1.bf16.msra.mxu0 0
      %1223 = vmatprep.subr.bf16.mxu0 0
      %1224 = vmatpush1.bf16.msra.mxu0 0
      %1225 = vmatprep.subr.bf16.mxu0 0
      %1226 = vmatpush1.bf16.msra.mxu0 0
      %1227 = vmatprep.mubr.bf16.mxu0 0
      %1228 = vmatmul.mubr.bf16.gmra.mrb[0].mxu0 %v887
      %v1229 = vpop.f32.mrb[0].mxu0
      %v1230 = vadd.f32 %v1181, %v1229
      %v1231 = vpop.f32.mrb[0].mxu0
      %v1232 = vpop.f32.mrb[0].mxu0
      %v1233 = vpop.f32.mrb[0].mxu0
      %1234 = vdwg.mxu0
      %s1235 = scalar_lea.vmem %s715, 80
      %v1236 = vld [vmem:[%s1235] sm:$0xf]
      %v1237 = vld [vmem:[%s1235 + $0x4] sm:$0xf]
      %v1238 = vld [vmem:[%s1235 + $0x8] sm:$0xf]
      %v1239 = vld [vmem:[%s1235 + $0xc] sm:$0xf]
      %s1240 = scalar_lea.vmem %s719, 5
      %v1241 = vld [vmem:[%s1240] sm:$0x1]
      %v1243 = vlaneseq
      %v1244 = vshrl.u32 %v1243, 7
      %v1245 = vsub.s32 0, %v1244
      %v1246 = vrot.slane %v1241, %v1245
      %v1252 = vunpack.c.l.b16 %v1236
      %v1253 = vunpack.c.l.b16 %v1237
      %v1254 = vunpack.c.l.b16 %v1238
      %v1255 = vunpack.c.l.b16 %v1239
      %v1256 = vpack.c.b16 %v1253, %v1252
      %v1257 = vpack.c.b16 %v1255, %v1254
      %1260 = vmatprep.subr.bf16.mxu0 0
      %1261 = vmatpush1.bf16.msra.mxu0 %v1256
      %1262 = vmatprep.subr.bf16.mxu0 0
      %1263 = vmatpush1.bf16.msra.mxu0 %v1257
      %1264 = vmatprep.subr.bf16.mxu0 0
      %1265 = vmatpush1.bf16.msra.mxu0 0
      %1266 = vmatprep.subr.bf16.mxu0 0
      %1267 = vmatpush1.bf16.msra.mxu0 0
      %1268 = vmatprep.subr.bf16.mxu0 0
      %1269 = vmatpush1.bf16.msra.mxu0 0
      %1270 = vmatprep.subr.bf16.mxu0 0
      %1271 = vmatpush1.bf16.msra.mxu0 0
      %1272 = vmatprep.subr.bf16.mxu0 0
      %1273 = vmatpush1.bf16.msra.mxu0 0
      %1274 = vmatprep.subr.bf16.mxu0 0
      %1275 = vmatpush1.bf16.msra.mxu0 0
      %1276 = vmatprep.subr.bf16.mxu0 0
      %1277 = vmatpush1.bf16.msra.mxu0 0
      %1278 = vmatprep.subr.bf16.mxu0 0
      %1279 = vmatpush1.bf16.msra.mxu0 0
      %1280 = vmatprep.subr.bf16.mxu0 0
      %1281 = vmatpush1.bf16.msra.mxu0 0
      %1282 = vmatprep.subr.bf16.mxu0 0
      %1283 = vmatpush1.bf16.msra.mxu0 0
      %1284 = vmatprep.subr.bf16.mxu0 0
      %1285 = vmatpush1.bf16.msra.mxu0 0
      %1286 = vmatprep.subr.bf16.mxu0 0
      %1287 = vmatpush1.bf16.msra.mxu0 0
      %1288 = vmatprep.subr.bf16.mxu0 0
      %1289 = vmatpush1.bf16.msra.mxu0 0
      %1290 = vmatprep.subr.bf16.mxu0 0
      %1291 = vmatpush1.bf16.msra.mxu0 0
      %1292 = vmatprep.mubr.bf16.mxu0 0
      %1293 = vmatmul.mubr.bf16.gmra.mrb[0].mxu0 %v887
      %v1294 = vpop.f32.mrb[0].mxu0
      %v1295 = vadd.f32 %v1246, %v1294
      %v1296 = vpop.f32.mrb[0].mxu0
      %v1297 = vpop.f32.mrb[0].mxu0
      %v1298 = vpop.f32.mrb[0].mxu0
      %1299 = vdwg.mxu0
      %s1300 = scalar_lea.vmem %s715, 144
      %v1301 = vld [vmem:[%s1300] sm:$0xf]
      %v1302 = vld [vmem:[%s1300 + $0x4] sm:$0xf]
      %v1303 = vld [vmem:[%s1300 + $0x8] sm:$0xf]
      %v1304 = vld [vmem:[%s1300 + $0xc] sm:$0xf]
      %s1305 = scalar_lea.vmem %s719, 9
      %v1306 = vld [vmem:[%s1305] sm:$0x1]
      %v1308 = vlaneseq
      %v1309 = vshrl.u32 %v1308, 7
      %v1310 = vsub.s32 0, %v1309
      %v1311 = vrot.slane %v1306, %v1310
      %v1317 = vunpack.c.l.b16 %v1301
      %v1318 = vunpack.c.l.b16 %v1302
      %v1319 = vunpack.c.l.b16 %v1303
      %v1320 = vunpack.c.l.b16 %v1304
      %v1321 = vpack.c.b16 %v1318, %v1317
      %v1322 = vpack.c.b16 %v1320, %v1319
      %1325 = vmatprep.subr.bf16.mxu0 0
      %1326 = vmatpush1.bf16.msra.mxu0 %v1321
      %1327 = vmatprep.subr.bf16.mxu0 0
      %1328 = vmatpush1.bf16.msra.mxu0 %v1322
      %1329 = vmatprep.subr.bf16.mxu0 0
      %1330 = vmatpush1.bf16.msra.mxu0 0
      %1331 = vmatprep.subr.bf16.mxu0 0
      %1332 = vmatpush1.bf16.msra.mxu0 0
      %1333 = vmatprep.subr.bf16.mxu0 0
      %1334 = vmatpush1.bf16.msra.mxu0 0
      %1335 = vmatprep.subr.bf16.mxu0 0
      %1336 = vmatpush1.bf16.msra.mxu0 0
      %1337 = vmatprep.subr.bf16.mxu0 0
      %1338 = vmatpush1.bf16.msra.mxu0 0
      %1339 = vmatprep.subr.bf16.mxu0 0
      %1340 = vmatpush1.bf16.msra.mxu0 0
      %1341 = vmatprep.subr.bf16.mxu0 0
      %1342 = vmatpush1.bf16.msra.mxu0 0
      %1343 = vmatprep.subr.bf16.mxu0 0
      %1344 = vmatpush1.bf16.msra.mxu0 0
      %1345 = vmatprep.subr.bf16.mxu0 0
      %1346 = vmatpush1.bf16.msra.mxu0 0
      %1347 = vmatprep.subr.bf16.mxu0 0
      %1348 = vmatpush1.bf16.msra.mxu0 0
      %1349 = vmatprep.subr.bf16.mxu0 0
      %1350 = vmatpush1.bf16.msra.mxu0 0
      %1351 = vmatprep.subr.bf16.mxu0 0
      %1352 = vmatpush1.bf16.msra.mxu0 0
      %1353 = vmatprep.subr.bf16.mxu0 0
      %1354 = vmatpush1.bf16.msra.mxu0 0
      %1355 = vmatprep.subr.bf16.mxu0 0
      %1356 = vmatpush1.bf16.msra.mxu0 0
      %1357 = vmatprep.mubr.bf16.mxu0 0
      %1358 = vmatmul.mubr.bf16.gmra.mrb[0].mxu0 %v887
      %v1359 = vpop.f32.mrb[0].mxu0
      %v1360 = vadd.f32 %v1311, %v1359
      %v1361 = vpop.f32.mrb[0].mxu0
      %v1362 = vpop.f32.mrb[0].mxu0
      %v1363 = vpop.f32.mrb[0].mxu0
      %1364 = vdwg.mxu0
      %v1365 = vpack.c.bf16 %v1230, %v1230
      %v1366 = vpack.c.bf16 %v1295, %v1295
      %v1368 = vsel %vm1061, %v1365, 0
      %v1371 = vsel %vm1061, %v1366, 0
      %1373 = vmatprep.subr.bf16.mxu0 0
      %1374 = vmatpush1.bf16.xpose.msra.mxu0 %v1371
      %1375 = vmatprep.subr.bf16.mxu0 0
      %1376 = vmatpush1.bf16.xpose.msra.mxu0 0
      %1377 = vmatprep.subr.bf16.mxu0 0
      %1378 = vmatpush1.bf16.xpose.msra.mxu0 0
      %1379 = vmatprep.subr.bf16.mxu0 0
      %1380 = vmatpush1.bf16.xpose.msra.mxu0 0
      %1381 = vmatprep.subr.bf16.mxu0 0
      %1382 = vmatpush1.bf16.xpose.msra.mxu0 0
      %1383 = vmatprep.subr.bf16.mxu0 0
      %1384 = vmatpush1.bf16.xpose.msra.mxu0 0
      %1385 = vmatprep.subr.bf16.mxu0 0
      %1386 = vmatpush1.bf16.xpose.msra.mxu0 0
      %1387 = vmatprep.subr.bf16.mxu0 0
      %1388 = vmatpush1.bf16.xpose.msra.mxu0 0
      %1389 = vmatprep.subr.bf16.mxu0 0
      %1390 = vmatpush1.bf16.xpose.msra.mxu0 0
      %1391 = vmatprep.subr.bf16.mxu0 0
      %1392 = vmatpush1.bf16.xpose.msra.mxu0 0
      %1393 = vmatprep.subr.bf16.mxu0 0
      %1394 = vmatpush1.bf16.xpose.msra.mxu0 0
      %1395 = vmatprep.subr.bf16.mxu0 0
      %1396 = vmatpush1.bf16.xpose.msra.mxu0 0
      %1397 = vmatprep.subr.bf16.mxu0 0
      %1398 = vmatpush1.bf16.xpose.msra.mxu0 0
      %1399 = vmatprep.subr.bf16.mxu0 0
      %1400 = vmatpush1.bf16.xpose.msra.mxu0 0
      %1401 = vmatprep.subr.bf16.mxu0 0
      %1402 = vmatpush1.bf16.xpose.msra.mxu0 0
      %1403 = vmatprep.subr.bf16.mxu0 0
      %1404 = vmatpush1.bf16.xpose.msra.mxu0 0
      %1405 = vmatprep.mubr.bf16.mxu0 0
      %1406 = vmatmul.mubr.bf16.gmra.mrb[0].mxu0 %v1368
      %v1407 = vpop.f32.mrb[0].mxu0
      %v1408 = vadd.f32 %v859, %v1407
      %v1409 = vpop.f32.mrb[0].mxu0
      %v1410 = vpop.f32.mrb[0].mxu0
      %v1411 = vpop.f32.mrb[0].mxu0
      %1412 = vdwg.mxu0
      %v1413 = vsel %vm1061, %v1408, -inf
      %1414 = vmax.xlane.f32.xlu0 %v1413
      %v1415 = vpop.xlane.xlu0 %1414
      %v1416 = vsub.f32 %v1408, %v1415
      %v1417 = vmul.f32 %v1416, 1.442695
      %v1418 = vpow.pop %v1417
      %v1419 = vsel %vm1061, %v1418, 0.0
      %1420 = vadd.xlane.f32.xlu0 %v1419
      %v1421 = vpop.xlane.xlu0 %1420
      %v1422 = vrcp.pop %v1421
      %v1423 = vmul.f32 %v1418, %v1422
      %v1424 = vpack.c.bf16 %v1423, %v1423
      %v1425 = vpack.c.bf16 %v1360, %v1360
      %v1427 = vsel %vm1061, %v1424, 0
      %v1430 = vsel %vm1124, %v1425, 0
      %1432 = vmatprep.subr.bf16.mxu0 0
      %1433 = vmatpush1.bf16.msra.mxu0 %v1430
      %1434 = vmatprep.subr.bf16.mxu0 0
      %1435 = vmatpush1.bf16.msra.mxu0 0
      %1436 = vmatprep.subr.bf16.mxu0 0
      %1437 = vmatpush1.bf16.msra.mxu0 0
      %1438 = vmatprep.subr.bf16.mxu0 0
      %1439 = vmatpush1.bf16.msra.mxu0 0
      %1440 = vmatprep.subr.bf16.mxu0 0
      %1441 = vmatpush1.bf16.msra.mxu0 0
      %1442 = vmatprep.subr.bf16.mxu0 0
      %1443 = vmatpush1.bf16.msra.mxu0 0
      %1444 = vmatprep.subr.bf16.mxu0 0
      %1445 = vmatpush1.bf16.msra.mxu0 0
      %1446 = vmatprep.subr.bf16.mxu0 0
      %1447 = vmatpush1.bf16.msra.mxu0 0
      %1448 = vmatprep.subr.bf16.mxu0 0
      %1449 = vmatpush1.bf16.msra.mxu0 0
      %1450 = vmatprep.subr.bf16.mxu0 0
      %1451 = vmatpush1.bf16.msra.mxu0 0
      %1452 = vmatprep.subr.bf16.mxu0 0
      %1453 = vmatpush1.bf16.msra.mxu0 0
      %1454 = vmatprep.subr.bf16.mxu0 0
      %1455 = vmatpush1.bf16.msra.mxu0 0
      %1456 = vmatprep.subr.bf16.mxu0 0
      %1457 = vmatpush1.bf16.msra.mxu0 0
      %1458 = vmatprep.subr.bf16.mxu0 0
      %1459 = vmatpush1.bf16.msra.mxu0 0
      %1460 = vmatprep.subr.bf16.mxu0 0
      %1461 = vmatpush1.bf16.msra.mxu0 0
      %1462 = vmatprep.subr.bf16.mxu0 0
      %1463 = vmatpush1.bf16.msra.mxu0 0
      %1464 = vmatprep.mubr.bf16.mxu0 0
      %1465 = vmatmul.mubr.bf16.gmra.mrb[0].mxu0 %v1427
      %v1466 = vpop.f32.mrb[0].mxu0
      %v1467 = vadd.f32 0.0, %v1466
      %v1468 = vpop.f32.mrb[0].mxu0
      %v1469 = vpop.f32.mrb[0].mxu0
      %v1470 = vpop.f32.mrb[0].mxu0
      %1471 = vdwg.mxu0
      %v1472 = vpack.c.bf16 %v1467, %v1467
      %s1473 = scalar_lea.vmem %s724, 4
      %v1474 = vld [vmem:[%s1473] sm:$0xf]
      %v1476 = vsel %vm1061, %v1472, 0
      %v1479 = vsel %vm1124, %v1474, 0
      %1481 = vmatprep.subr.bf16.mxu0 0
      %1482 = vmatpush1.bf16.msra.mxu0 %v1479
      %1483 = vmatprep.subr.bf16.mxu0 0
      %1484 = vmatpush1.bf16.msra.mxu0 0
      %1485 = vmatprep.subr.bf16.mxu0 0
      %1486 = vmatpush1.bf16.msra.mxu0 0
      %1487 = vmatprep.subr.bf16.mxu0 0
      %1488 = vmatpush1.bf16.msra.mxu0 0
      %1489 = vmatprep.subr.bf16.mxu0 0
      %1490 = vmatpush1.bf16.msra.mxu0 0
      %1491 = vmatprep.subr.bf16.mxu0 0
      %1492 = vmatpush1.bf16.msra.mxu0 0
      %1493 = vmatprep.subr.bf16.mxu0 0
      %1494 = vmatpush1.bf16.msra.mxu0 0
      %1495 = vmatprep.subr.bf16.mxu0 0
      %1496 = vmatpush1.bf16.msra.mxu0 0
      %1497 = vmatprep.subr.bf16.mxu0 0
      %1498 = vmatpush1.bf16.msra.mxu0 0
      %1499 = vmatprep.subr.bf16.mxu0 0
      %1500 = vmatpush1.bf16.msra.mxu0 0
      %1501 = vmatprep.subr.bf16.mxu0 0
      %1502 = vmatpush1.bf16.msra.mxu0 0
      %1503 = vmatprep.subr.bf16.mxu0 0
      %1504 = vmatpush1.bf16.msra.mxu0 0
      %1505 = vmatprep.subr.bf16.mxu0 0
      %1506 = vmatpush1.bf16.msra.mxu0 0
      %1507 = vmatprep.subr.bf16.mxu0 0
      %1508 = vmatpush1.bf16.msra.mxu0 0
      %1509 = vmatprep.subr.bf16.mxu0 0
      %1510 = vmatpush1.bf16.msra.mxu0 0
      %1511 = vmatprep.subr.bf16.mxu0 0
      %1512 = vmatpush1.bf16.msra.mxu0 0
      %1513 = vmatprep.mubr.bf16.mxu0 0
      %1514 = vmatmul.mubr.bf16.gmra.mrb[0].mxu0 %v1476
      %v1515 = vpop.f32.mrb[0].mxu0
      %v1516 = vadd.f32 0.0, %v1515
      %v1517 = vpop.f32.mrb[0].mxu0
      %v1518 = vpop.f32.mrb[0].mxu0
      %v1519 = vpop.f32.mrb[0].mxu0
      %1520 = vdwg.mxu0
      %v1522 = vsel %vm1061, %v1168, 0
      %v1525 = vsel %vm1124, %v1169, 0
      %1527 = vmatprep.subr.bf16.mxu0 0
      %1528 = vmatpush1.bf16.msra.mxu0 %v1525
      %1529 = vmatprep.subr.bf16.mxu0 0
      %1530 = vmatpush1.bf16.msra.mxu0 0
      %1531 = vmatprep.subr.bf16.mxu0 0
      %1532 = vmatpush1.bf16.msra.mxu0 0
      %1533 = vmatprep.subr.bf16.mxu0 0
      %1534 = vmatpush1.bf16.msra.mxu0 0
      %1535 = vmatprep.subr.bf16.mxu0 0
      %1536 = vmatpush1.bf16.msra.mxu0 0
      %1537 = vmatprep.subr.bf16.mxu0 0
      %1538 = vmatpush1.bf16.msra.mxu0 0
      %1539 = vmatprep.subr.bf16.mxu0 0
      %1540 = vmatpush1.bf16.msra.mxu0 0
      %1541 = vmatprep.subr.bf16.mxu0 0
      %1542 = vmatpush1.bf16.msra.mxu0 0
      %1543 = vmatprep.subr.bf16.mxu0 0
      %1544 = vmatpush1.bf16.msra.mxu0 0
      %1545 = vmatprep.subr.bf16.mxu0 0
      %1546 = vmatpush1.bf16.msra.mxu0 0
      %1547 = vmatprep.subr.bf16.mxu0 0
      %1548 = vmatpush1.bf16.msra.mxu0 0
      %1549 = vmatprep.subr.bf16.mxu0 0
      %1550 = vmatpush1.bf16.msra.mxu0 0
      %1551 = vmatprep.subr.bf16.mxu0 0
      %1552 = vmatpush1.bf16.msra.mxu0 0
      %1553 = vmatprep.subr.bf16.mxu0 0
      %1554 = vmatpush1.bf16.msra.mxu0 0
      %1555 = vmatprep.subr.bf16.mxu0 0
      %1556 = vmatpush1.bf16.msra.mxu0 0
      %1557 = vmatprep.subr.bf16.mxu0 0
      %1558 = vmatpush1.bf16.msra.mxu0 0
      %1559 = vmatprep.mubr.bf16.mxu0 0
      %1560 = vmatmul.mubr.bf16.gmra.mrb[0].mxu0 %v1522
      %v1561 = vpop.f32.mrb[0].mxu0
      %v1562 = vadd.f32 %v1516, %v1561
      %v1563 = vpop.f32.mrb[0].mxu0
      %v1564 = vpop.f32.mrb[0].mxu0
      %v1565 = vpop.f32.mrb[0].mxu0
      %1566 = vdwg.mxu0
      %s1567 = scalar_lea.vmem %s715, 32
      %v1568 = vld [vmem:[%s1567] sm:$0xf]
      %v1569 = vld [vmem:[%s1567 + $0x4] sm:$0xf]
      %v1570 = vld [vmem:[%s1567 + $0x8] sm:$0xf]
      %v1571 = vld [vmem:[%s1567 + $0xc] sm:$0xf]
      %s1572 = scalar_lea.vmem %s719, 2
      %v1573 = vld [vmem:[%s1572] sm:$0x1]
      %v1575 = vlaneseq
      %v1576 = vshrl.u32 %v1575, 7
      %v1577 = vsub.s32 0, %v1576
      %v1578 = vrot.slane %v1573, %v1577
      %v1584 = vunpack.c.l.b16 %v1568
      %v1585 = vunpack.c.l.b16 %v1569
      %v1586 = vunpack.c.l.b16 %v1570
      %v1587 = vunpack.c.l.b16 %v1571
      %v1588 = vpack.c.b16 %v1585, %v1584
      %v1589 = vpack.c.b16 %v1587, %v1586
      %1592 = vmatprep.subr.bf16.mxu0 0
      %1593 = vmatpush1.bf16.msra.mxu0 %v1588
      %1594 = vmatprep.subr.bf16.mxu0 0
      %1595 = vmatpush1.bf16.msra.mxu0 %v1589
      %1596 = vmatprep.subr.bf16.mxu0 0
      %1597 = vmatpush1.bf16.msra.mxu0 0
      %1598 = vmatprep.subr.bf16.mxu0 0
      %1599 = vmatpush1.bf16.msra.mxu0 0
      %1600 = vmatprep.subr.bf16.mxu0 0
      %1601 = vmatpush1.bf16.msra.mxu0 0
      %1602 = vmatprep.subr.bf16.mxu0 0
      %1603 = vmatpush1.bf16.msra.mxu0 0
      %1604 = vmatprep.subr.bf16.mxu0 0
      %1605 = vmatpush1.bf16.msra.mxu0 0
      %1606 = vmatprep.subr.bf16.mxu0 0
      %1607 = vmatpush1.bf16.msra.mxu0 0
      %1608 = vmatprep.subr.bf16.mxu0 0
      %1609 = vmatpush1.bf16.msra.mxu0 0
      %1610 = vmatprep.subr.bf16.mxu0 0
      %1611 = vmatpush1.bf16.msra.mxu0 0
      %1612 = vmatprep.subr.bf16.mxu0 0
      %1613 = vmatpush1.bf16.msra.mxu0 0
      %1614 = vmatprep.subr.bf16.mxu0 0
      %1615 = vmatpush1.bf16.msra.mxu0 0
      %1616 = vmatprep.subr.bf16.mxu0 0
      %1617 = vmatpush1.bf16.msra.mxu0 0
      %1618 = vmatprep.subr.bf16.mxu0 0
      %1619 = vmatpush1.bf16.msra.mxu0 0
      %1620 = vmatprep.subr.bf16.mxu0 0
      %1621 = vmatpush1.bf16.msra.mxu0 0
      %1622 = vmatprep.subr.bf16.mxu0 0
      %1623 = vmatpush1.bf16.msra.mxu0 0
      %1624 = vmatprep.mubr.bf16.mxu0 0
      %1625 = vmatmul.mubr.bf16.gmra.mrb[0].mxu0 %v887
      %v1626 = vpop.f32.mrb[0].mxu0
      %v1627 = vadd.f32 %v1578, %v1626
      %v1628 = vpop.f32.mrb[0].mxu0
      %v1629 = vpop.f32.mrb[0].mxu0
      %v1630 = vpop.f32.mrb[0].mxu0
      %1631 = vdwg.mxu0
      %s1632 = scalar_lea.vmem %s715, 96
      %v1633 = vld [vmem:[%s1632] sm:$0xf]
      %v1634 = vld [vmem:[%s1632 + $0x4] sm:$0xf]
      %v1635 = vld [vmem:[%s1632 + $0x8] sm:$0xf]
      %v1636 = vld [vmem:[%s1632 + $0xc] sm:$0xf]
      %s1637 = scalar_lea.vmem %s719, 6
      %v1638 = vld [vmem:[%s1637] sm:$0x1]
      %v1640 = vlaneseq
      %v1641 = vshrl.u32 %v1640, 7
      %v1642 = vsub.s32 0, %v1641
      %v1643 = vrot.slane %v1638, %v1642
      %v1649 = vunpack.c.l.b16 %v1633
      %v1650 = vunpack.c.l.b16 %v1634
      %v1651 = vunpack.c.l.b16 %v1635
      %v1652 = vunpack.c.l.b16 %v1636
      %v1653 = vpack.c.b16 %v1650, %v1649
      %v1654 = vpack.c.b16 %v1652, %v1651
      %1657 = vmatprep.subr.bf16.mxu0 0
      %1658 = vmatpush1.bf16.msra.mxu0 %v1653
      %1659 = vmatprep.subr.bf16.mxu0 0
      %1660 = vmatpush1.bf16.msra.mxu0 %v1654
      %1661 = vmatprep.subr.bf16.mxu0 0
      %1662 = vmatpush1.bf16.msra.mxu0 0
      %1663 = vmatprep.subr.bf16.mxu0 0
      %1664 = vmatpush1.bf16.msra.mxu0 0
      %1665 = vmatprep.subr.bf16.mxu0 0
      %1666 = vmatpush1.bf16.msra.mxu0 0
      %1667 = vmatprep.subr.bf16.mxu0 0
      %1668 = vmatpush1.bf16.msra.mxu0 0
      %1669 = vmatprep.subr.bf16.mxu0 0
      %1670 = vmatpush1.bf16.msra.mxu0 0
      %1671 = vmatprep.subr.bf16.mxu0 0
      %1672 = vmatpush1.bf16.msra.mxu0 0
      %1673 = vmatprep.subr.bf16.mxu0 0
      %1674 = vmatpush1.bf16.msra.mxu0 0
      %1675 = vmatprep.subr.bf16.mxu0 0
      %1676 = vmatpush1.bf16.msra.mxu0 0
      %1677 = vmatprep.subr.bf16.mxu0 0
      %1678 = vmatpush1.bf16.msra.mxu0 0
      %1679 = vmatprep.subr.bf16.mxu0 0
      %1680 = vmatpush1.bf16.msra.mxu0 0
      %1681 = vmatprep.subr.bf16.mxu0 0
      %1682 = vmatpush1.bf16.msra.mxu0 0
      %1683 = vmatprep.subr.bf16.mxu0 0
      %1684 = vmatpush1.bf16.msra.mxu0 0
      %1685 = vmatprep.subr.bf16.mxu0 0
      %1686 = vmatpush1.bf16.msra.mxu0 0
      %1687 = vmatprep.subr.bf16.mxu0 0
      %1688 = vmatpush1.bf16.msra.mxu0 0
      %1689 = vmatprep.mubr.bf16.mxu0 0
      %1690 = vmatmul.mubr.bf16.gmra.mrb[0].mxu0 %v887
      %v1691 = vpop.f32.mrb[0].mxu0
      %v1692 = vadd.f32 %v1643, %v1691
      %v1693 = vpop.f32.mrb[0].mxu0
      %v1694 = vpop.f32.mrb[0].mxu0
      %v1695 = vpop.f32.mrb[0].mxu0
      %1696 = vdwg.mxu0
      %s1697 = scalar_lea.vmem %s715, 160
      %v1698 = vld [vmem:[%s1697] sm:$0xf]
      %v1699 = vld [vmem:[%s1697 + $0x4] sm:$0xf]
      %v1700 = vld [vmem:[%s1697 + $0x8] sm:$0xf]
      %v1701 = vld [vmem:[%s1697 + $0xc] sm:$0xf]
      %s1702 = scalar_lea.vmem %s719, 10
      %v1703 = vld [vmem:[%s1702] sm:$0x1]
      %v1705 = vlaneseq
      %v1706 = vshrl.u32 %v1705, 7
      %v1707 = vsub.s32 0, %v1706
      %v1708 = vrot.slane %v1703, %v1707
      %v1714 = vunpack.c.l.b16 %v1698
      %v1715 = vunpack.c.l.b16 %v1699
      %v1716 = vunpack.c.l.b16 %v1700
      %v1717 = vunpack.c.l.b16 %v1701
      %v1718 = vpack.c.b16 %v1715, %v1714
      %v1719 = vpack.c.b16 %v1717, %v1716
      %1722 = vmatprep.subr.bf16.mxu0 0
      %1723 = vmatpush1.bf16.msra.mxu0 %v1718
      %1724 = vmatprep.subr.bf16.mxu0 0
      %1725 = vmatpush1.bf16.msra.mxu0 %v1719
      %1726 = vmatprep.subr.bf16.mxu0 0
      %1727 = vmatpush1.bf16.msra.mxu0 0
      %1728 = vmatprep.subr.bf16.mxu0 0
      %1729 = vmatpush1.bf16.msra.mxu0 0
      %1730 = vmatprep.subr.bf16.mxu0 0
      %1731 = vmatpush1.bf16.msra.mxu0 0
      %1732 = vmatprep.subr.bf16.mxu0 0
      %1733 = vmatpush1.bf16.msra.mxu0 0
      %1734 = vmatprep.subr.bf16.mxu0 0
      %1735 = vmatpush1.bf16.msra.mxu0 0
      %1736 = vmatprep.subr.bf16.mxu0 0
      %1737 = vmatpush1.bf16.msra.mxu0 0
      %1738 = vmatprep.subr.bf16.mxu0 0
      %1739 = vmatpush1.bf16.msra.mxu0 0
      %1740 = vmatprep.subr.bf16.mxu0 0
      %1741 = vmatpush1.bf16.msra.mxu0 0
      %1742 = vmatprep.subr.bf16.mxu0 0
      %1743 = vmatpush1.bf16.msra.mxu0 0
      %1744 = vmatprep.subr.bf16.mxu0 0
      %1745 = vmatpush1.bf16.msra.mxu0 0
      %1746 = vmatprep.subr.bf16.mxu0 0
      %1747 = vmatpush1.bf16.msra.mxu0 0
      %1748 = vmatprep.subr.bf16.mxu0 0
      %1749 = vmatpush1.bf16.msra.mxu0 0
      %1750 = vmatprep.subr.bf16.mxu0 0
      %1751 = vmatpush1.bf16.msra.mxu0 0
      %1752 = vmatprep.subr.bf16.mxu0 0
      %1753 = vmatpush1.bf16.msra.mxu0 0
      %1754 = vmatprep.mubr.bf16.mxu0 0
      %1755 = vmatmul.mubr.bf16.gmra.mrb[0].mxu0 %v887
      %v1756 = vpop.f32.mrb[0].mxu0
      %v1757 = vadd.f32 %v1708, %v1756
      %v1758 = vpop.f32.mrb[0].mxu0
      %v1759 = vpop.f32.mrb[0].mxu0
      %v1760 = vpop.f32.mrb[0].mxu0
      %1761 = vdwg.mxu0
      %v1762 = vpack.c.bf16 %v1627, %v1627
      %v1763 = vpack.c.bf16 %v1692, %v1692
      %v1765 = vsel %vm1061, %v1762, 0
      %v1768 = vsel %vm1061, %v1763, 0
      %1770 = vmatprep.subr.bf16.mxu0 0
      %1771 = vmatpush1.bf16.xpose.msra.mxu0 %v1768
      %1772 = vmatprep.subr.bf16.mxu0 0
      %1773 = vmatpush1.bf16.xpose.msra.mxu0 0
      %1774 = vmatprep.subr.bf16.mxu0 0
      %1775 = vmatpush1.bf16.xpose.msra.mxu0 0
      %1776 = vmatprep.subr.bf16.mxu0 0
      %1777 = vmatpush1.bf16.xpose.msra.mxu0 0
      %1778 = vmatprep.subr.bf16.mxu0 0
      %1779 = vmatpush1.bf16.xpose.msra.mxu0 0
      %1780 = vmatprep.subr.bf16.mxu0 0
      %1781 = vmatpush1.bf16.xpose.msra.mxu0 0
      %1782 = vmatprep.subr.bf16.mxu0 0
      %1783 = vmatpush1.bf16.xpose.msra.mxu0 0
      %1784 = vmatprep.subr.bf16.mxu0 0
      %1785 = vmatpush1.bf16.xpose.msra.mxu0 0
      %1786 = vmatprep.subr.bf16.mxu0 0
      %1787 = vmatpush1.bf16.xpose.msra.mxu0 0
      %1788 = vmatprep.subr.bf16.mxu0 0
      %1789 = vmatpush1.bf16.xpose.msra.mxu0 0
      %1790 = vmatprep.subr.bf16.mxu0 0
      %1791 = vmatpush1.bf16.xpose.msra.mxu0 0
      %1792 = vmatprep.subr.bf16.mxu0 0
      %1793 = vmatpush1.bf16.xpose.msra.mxu0 0
      %1794 = vmatprep.subr.bf16.mxu0 0
      %1795 = vmatpush1.bf16.xpose.msra.mxu0 0
      %1796 = vmatprep.subr.bf16.mxu0 0
      %1797 = vmatpush1.bf16.xpose.msra.mxu0 0
      %1798 = vmatprep.subr.bf16.mxu0 0
      %1799 = vmatpush1.bf16.xpose.msra.mxu0 0
      %1800 = vmatprep.subr.bf16.mxu0 0
      %1801 = vmatpush1.bf16.xpose.msra.mxu0 0
      %1802 = vmatprep.mubr.bf16.mxu0 0
      %1803 = vmatmul.mubr.bf16.gmra.mrb[0].mxu0 %v1765
      %v1804 = vpop.f32.mrb[0].mxu0
      %v1805 = vadd.f32 %v859, %v1804
      %v1806 = vpop.f32.mrb[0].mxu0
      %v1807 = vpop.f32.mrb[0].mxu0
      %v1808 = vpop.f32.mrb[0].mxu0
      %1809 = vdwg.mxu0
      %v1810 = vsel %vm1061, %v1805, -inf
      %1811 = vmax.xlane.f32.xlu0 %v1810
      %v1812 = vpop.xlane.xlu0 %1811
      %v1813 = vsub.f32 %v1805, %v1812
      %v1814 = vmul.f32 %v1813, 1.442695
      %v1815 = vpow.pop %v1814
      %v1816 = vsel %vm1061, %v1815, 0.0
      %1817 = vadd.xlane.f32.xlu0 %v1816
      %v1818 = vpop.xlane.xlu0 %1817
      %v1819 = vrcp.pop %v1818
      %v1820 = vmul.f32 %v1815, %v1819
      %v1821 = vpack.c.bf16 %v1820, %v1820
      %v1822 = vpack.c.bf16 %v1757, %v1757
      %v1824 = vsel %vm1061, %v1821, 0
      %v1827 = vsel %vm1124, %v1822, 0
      %1829 = vmatprep.subr.bf16.mxu0 0
      %1830 = vmatpush1.bf16.msra.mxu0 %v1827
      %1831 = vmatprep.subr.bf16.mxu0 0
      %1832 = vmatpush1.bf16.msra.mxu0 0
      %1833 = vmatprep.subr.bf16.mxu0 0
      %1834 = vmatpush1.bf16.msra.mxu0 0
      %1835 = vmatprep.subr.bf16.mxu0 0
      %1836 = vmatpush1.bf16.msra.mxu0 0
      %1837 = vmatprep.subr.bf16.mxu0 0
      %1838 = vmatpush1.bf16.msra.mxu0 0
      %1839 = vmatprep.subr.bf16.mxu0 0
      %1840 = vmatpush1.bf16.msra.mxu0 0
      %1841 = vmatprep.subr.bf16.mxu0 0
      %1842 = vmatpush1.bf16.msra.mxu0 0
      %1843 = vmatprep.subr.bf16.mxu0 0
      %1844 = vmatpush1.bf16.msra.mxu0 0
      %1845 = vmatprep.subr.bf16.mxu0 0
      %1846 = vmatpush1.bf16.msra.mxu0 0
      %1847 = vmatprep.subr.bf16.mxu0 0
      %1848 = vmatpush1.bf16.msra.mxu0 0
      %1849 = vmatprep.subr.bf16.mxu0 0
      %1850 = vmatpush1.bf16.msra.mxu0 0
      %1851 = vmatprep.subr.bf16.mxu0 0
      %1852 = vmatpush1.bf16.msra.mxu0 0
      %1853 = vmatprep.subr.bf16.mxu0 0
      %1854 = vmatpush1.bf16.msra.mxu0 0
      %1855 = vmatprep.subr.bf16.mxu0 0
      %1856 = vmatpush1.bf16.msra.mxu0 0
      %1857 = vmatprep.subr.bf16.mxu0 0
      %1858 = vmatpush1.bf16.msra.mxu0 0
      %1859 = vmatprep.subr.bf16.mxu0 0
      %1860 = vmatpush1.bf16.msra.mxu0 0
      %1861 = vmatprep.mubr.bf16.mxu0 0
      %1862 = vmatmul.mubr.bf16.gmra.mrb[0].mxu0 %v1824
      %v1863 = vpop.f32.mrb[0].mxu0
      %v1864 = vadd.f32 0.0, %v1863
      %v1865 = vpop.f32.mrb[0].mxu0
      %v1866 = vpop.f32.mrb[0].mxu0
      %v1867 = vpop.f32.mrb[0].mxu0
      %1868 = vdwg.mxu0
      %v1869 = vpack.c.bf16 %v1864, %v1864
      %s1870 = scalar_lea.vmem %s724, 8
      %v1871 = vld [vmem:[%s1870] sm:$0xf]
      %v1873 = vsel %vm1061, %v1869, 0
      %v1876 = vsel %vm1124, %v1871, 0
      %1878 = vmatprep.subr.bf16.mxu0 0
      %1879 = vmatpush1.bf16.msra.mxu0 %v1876
      %1880 = vmatprep.subr.bf16.mxu0 0
      %1881 = vmatpush1.bf16.msra.mxu0 0
      %1882 = vmatprep.subr.bf16.mxu0 0
      %1883 = vmatpush1.bf16.msra.mxu0 0
      %1884 = vmatprep.subr.bf16.mxu0 0
      %1885 = vmatpush1.bf16.msra.mxu0 0
      %1886 = vmatprep.subr.bf16.mxu0 0
      %1887 = vmatpush1.bf16.msra.mxu0 0
      %1888 = vmatprep.subr.bf16.mxu0 0
      %1889 = vmatpush1.bf16.msra.mxu0 0
      %1890 = vmatprep.subr.bf16.mxu0 0
      %1891 = vmatpush1.bf16.msra.mxu0 0
      %1892 = vmatprep.subr.bf16.mxu0 0
      %1893 = vmatpush1.bf16.msra.mxu0 0
      %1894 = vmatprep.subr.bf16.mxu0 0
      %1895 = vmatpush1.bf16.msra.mxu0 0
      %1896 = vmatprep.subr.bf16.mxu0 0
      %1897 = vmatpush1.bf16.msra.mxu0 0
      %1898 = vmatprep.subr.bf16.mxu0 0
      %1899 = vmatpush1.bf16.msra.mxu0 0
      %1900 = vmatprep.subr.bf16.mxu0 0
      %1901 = vmatpush1.bf16.msra.mxu0 0
      %1902 = vmatprep.subr.bf16.mxu0 0
      %1903 = vmatpush1.bf16.msra.mxu0 0
      %1904 = vmatprep.subr.bf16.mxu0 0
      %1905 = vmatpush1.bf16.msra.mxu0 0
      %1906 = vmatprep.subr.bf16.mxu0 0
      %1907 = vmatpush1.bf16.msra.mxu0 0
      %1908 = vmatprep.subr.bf16.mxu0 0
      %1909 = vmatpush1.bf16.msra.mxu0 0
      %1910 = vmatprep.mubr.bf16.mxu0 0
      %1911 = vmatmul.mubr.bf16.gmra.mrb[0].mxu0 %v1873
      %v1912 = vpop.f32.mrb[0].mxu0
      %v1913 = vadd.f32 0.0, %v1912
      %v1914 = vpop.f32.mrb[0].mxu0
      %v1915 = vpop.f32.mrb[0].mxu0
      %v1916 = vpop.f32.mrb[0].mxu0
      %1917 = vdwg.mxu0
      %v1918 = vadd.f32 %v1562, %v1913
      %s1919 = scalar_lea.vmem %s715, 48
      %v1920 = vld [vmem:[%s1919] sm:$0xf]
      %v1921 = vld [vmem:[%s1919 + $0x4] sm:$0xf]
      %v1922 = vld [vmem:[%s1919 + $0x8] sm:$0xf]
      %v1923 = vld [vmem:[%s1919 + $0xc] sm:$0xf]
      %s1924 = scalar_lea.vmem %s719, 3
      %v1925 = vld [vmem:[%s1924] sm:$0x1]
      %v1927 = vlaneseq
      %v1928 = vshrl.u32 %v1927, 7
      %v1929 = vsub.s32 0, %v1928
      %v1930 = vrot.slane %v1925, %v1929
      %v1936 = vunpack.c.l.b16 %v1920
      %v1937 = vunpack.c.l.b16 %v1921
      %v1938 = vunpack.c.l.b16 %v1922
      %v1939 = vunpack.c.l.b16 %v1923
      %v1940 = vpack.c.b16 %v1937, %v1936
      %v1941 = vpack.c.b16 %v1939, %v1938
      %1944 = vmatprep.subr.bf16.mxu0 0
      %1945 = vmatpush1.bf16.msra.mxu0 %v1940
      %1946 = vmatprep.subr.bf16.mxu0 0
      %1947 = vmatpush1.bf16.msra.mxu0 %v1941
      %1948 = vmatprep.subr.bf16.mxu0 0
      %1949 = vmatpush1.bf16.msra.mxu0 0
      %1950 = vmatprep.subr.bf16.mxu0 0
      %1951 = vmatpush1.bf16.msra.mxu0 0
      %1952 = vmatprep.subr.bf16.mxu0 0
      %1953 = vmatpush1.bf16.msra.mxu0 0
      %1954 = vmatprep.subr.bf16.mxu0 0
      %1955 = vmatpush1.bf16.msra.mxu0 0
      %1956 = vmatprep.subr.bf16.mxu0 0
      %1957 = vmatpush1.bf16.msra.mxu0 0
      %1958 = vmatprep.subr.bf16.mxu0 0
      %1959 = vmatpush1.bf16.msra.mxu0 0
      %1960 = vmatprep.subr.bf16.mxu0 0
      %1961 = vmatpush1.bf16.msra.mxu0 0
      %1962 = vmatprep.subr.bf16.mxu0 0
      %1963 = vmatpush1.bf16.msra.mxu0 0
      %1964 = vmatprep.subr.bf16.mxu0 0
      %1965 = vmatpush1.bf16.msra.mxu0 0
      %1966 = vmatprep.subr.bf16.mxu0 0
      %1967 = vmatpush1.bf16.msra.mxu0 0
      %1968 = vmatprep.subr.bf16.mxu0 0
      %1969 = vmatpush1.bf16.msra.mxu0 0
      %1970 = vmatprep.subr.bf16.mxu0 0
      %1971 = vmatpush1.bf16.msra.mxu0 0
      %1972 = vmatprep.subr.bf16.mxu0 0
      %1973 = vmatpush1.bf16.msra.mxu0 0
      %1974 = vmatprep.subr.bf16.mxu0 0
      %1975 = vmatpush1.bf16.msra.mxu0 0
      %1976 = vmatprep.mubr.bf16.mxu0 0
      %1977 = vmatmul.mubr.bf16.gmra.mrb[0].mxu0 %v887
      %v1978 = vpop.f32.mrb[0].mxu0
      %v1979 = vadd.f32 %v1930, %v1978
      %v1980 = vpop.f32.mrb[0].mxu0
      %v1981 = vpop.f32.mrb[0].mxu0
      %v1982 = vpop.f32.mrb[0].mxu0
      %1983 = vdwg.mxu0
      %s1984 = scalar_lea.vmem %s715, 112
      %v1985 = vld [vmem:[%s1984] sm:$0xf]
      %v1986 = vld [vmem:[%s1984 + $0x4] sm:$0xf]
      %v1987 = vld [vmem:[%s1984 + $0x8] sm:$0xf]
      %v1988 = vld [vmem:[%s1984 + $0xc] sm:$0xf]
      %s1989 = scalar_lea.vmem %s719, 7
      %v1990 = vld [vmem:[%s1989] sm:$0x1]
      %v1992 = vlaneseq
      %v1993 = vshrl.u32 %v1992, 7
      %v1994 = vsub.s32 0, %v1993
      %v1995 = vrot.slane %v1990, %v1994
      %v2001 = vunpack.c.l.b16 %v1985
      %v2002 = vunpack.c.l.b16 %v1986
      %v2003 = vunpack.c.l.b16 %v1987
      %v2004 = vunpack.c.l.b16 %v1988
      %v2005 = vpack.c.b16 %v2002, %v2001
      %v2006 = vpack.c.b16 %v2004, %v2003
      %2009 = vmatprep.subr.bf16.mxu0 0
      %2010 = vmatpush1.bf16.msra.mxu0 %v2005
      %2011 = vmatprep.subr.bf16.mxu0 0
      %2012 = vmatpush1.bf16.msra.mxu0 %v2006
      %2013 = vmatprep.subr.bf16.mxu0 0
      %2014 = vmatpush1.bf16.msra.mxu0 0
      %2015 = vmatprep.subr.bf16.mxu0 0
      %2016 = vmatpush1.bf16.msra.mxu0 0
      %2017 = vmatprep.subr.bf16.mxu0 0
      %2018 = vmatpush1.bf16.msra.mxu0 0
      %2019 = vmatprep.subr.bf16.mxu0 0
      %2020 = vmatpush1.bf16.msra.mxu0 0
      %2021 = vmatprep.subr.bf16.mxu0 0
      %2022 = vmatpush1.bf16.msra.mxu0 0
      %2023 = vmatprep.subr.bf16.mxu0 0
      %2024 = vmatpush1.bf16.msra.mxu0 0
      %2025 = vmatprep.subr.bf16.mxu0 0
      %2026 = vmatpush1.bf16.msra.mxu0 0
      %2027 = vmatprep.subr.bf16.mxu0 0
      %2028 = vmatpush1.bf16.msra.mxu0 0
      %2029 = vmatprep.subr.bf16.mxu0 0
      %2030 = vmatpush1.bf16.msra.mxu0 0
      %2031 = vmatprep.subr.bf16.mxu0 0
      %2032 = vmatpush1.bf16.msra.mxu0 0
      %2033 = vmatprep.subr.bf16.mxu0 0
      %2034 = vmatpush1.bf16.msra.mxu0 0
      %2035 = vmatprep.subr.bf16.mxu0 0
      %2036 = vmatpush1.bf16.msra.mxu0 0
      %2037 = vmatprep.subr.bf16.mxu0 0
      %2038 = vmatpush1.bf16.msra.mxu0 0
      %2039 = vmatprep.subr.bf16.mxu0 0
      %2040 = vmatpush1.bf16.msra.mxu0 0
      %2041 = vmatprep.mubr.bf16.mxu0 0
      %2042 = vmatmul.mubr.bf16.gmra.mrb[0].mxu0 %v887
      %v2043 = vpop.f32.mrb[0].mxu0
      %v2044 = vadd.f32 %v1995, %v2043
      %v2045 = vpop.f32.mrb[0].mxu0
      %v2046 = vpop.f32.mrb[0].mxu0
      %v2047 = vpop.f32.mrb[0].mxu0
      %2048 = vdwg.mxu0
      %s2049 = scalar_lea.vmem %s715, 176
      %v2050 = vld [vmem:[%s2049] sm:$0xf]
      %v2051 = vld [vmem:[%s2049 + $0x4] sm:$0xf]
      %v2052 = vld [vmem:[%s2049 + $0x8] sm:$0xf]
      %v2053 = vld [vmem:[%s2049 + $0xc] sm:$0xf]
      %s2054 = scalar_lea.vmem %s719, 11
      %v2055 = vld [vmem:[%s2054] sm:$0x1]
      %v2057 = vlaneseq
      %v2058 = vshrl.u32 %v2057, 7
      %v2059 = vsub.s32 0, %v2058
      %v2060 = vrot.slane %v2055, %v2059
      %v2066 = vunpack.c.l.b16 %v2050
      %v2067 = vunpack.c.l.b16 %v2051
      %v2068 = vunpack.c.l.b16 %v2052
      %v2069 = vunpack.c.l.b16 %v2053
      %v2070 = vpack.c.b16 %v2067, %v2066
      %v2071 = vpack.c.b16 %v2069, %v2068
      %2074 = vmatprep.subr.bf16.mxu0 0
      %2075 = vmatpush1.bf16.msra.mxu0 %v2070
      %2076 = vmatprep.subr.bf16.mxu0 0
      %2077 = vmatpush1.bf16.msra.mxu0 %v2071
      %2078 = vmatprep.subr.bf16.mxu0 0
      %2079 = vmatpush1.bf16.msra.mxu0 0
      %2080 = vmatprep.subr.bf16.mxu0 0
      %2081 = vmatpush1.bf16.msra.mxu0 0
      %2082 = vmatprep.subr.bf16.mxu0 0
      %2083 = vmatpush1.bf16.msra.mxu0 0
      %2084 = vmatprep.subr.bf16.mxu0 0
      %2085 = vmatpush1.bf16.msra.mxu0 0
      %2086 = vmatprep.subr.bf16.mxu0 0
      %2087 = vmatpush1.bf16.msra.mxu0 0
      %2088 = vmatprep.subr.bf16.mxu0 0
      %2089 = vmatpush1.bf16.msra.mxu0 0
      %2090 = vmatprep.subr.bf16.mxu0 0
      %2091 = vmatpush1.bf16.msra.mxu0 0
      %2092 = vmatprep.subr.bf16.mxu0 0
      %2093 = vmatpush1.bf16.msra.mxu0 0
      %2094 = vmatprep.subr.bf16.mxu0 0
      %2095 = vmatpush1.bf16.msra.mxu0 0
      %2096 = vmatprep.subr.bf16.mxu0 0
      %2097 = vmatpush1.bf16.msra.mxu0 0
      %2098 = vmatprep.subr.bf16.mxu0 0
      %2099 = vmatpush1.bf16.msra.mxu0 0
      %2100 = vmatprep.subr.bf16.mxu0 0
      %2101 = vmatpush1.bf16.msra.mxu0 0
      %2102 = vmatprep.subr.bf16.mxu0 0
      %2103 = vmatpush1.bf16.msra.mxu0 0
      %2104 = vmatprep.subr.bf16.mxu0 0
      %2105 = vmatpush1.bf16.msra.mxu0 0
      %2106 = vmatprep.mubr.bf16.mxu0 0
      %2107 = vmatmul.mubr.bf16.gmra.mrb[0].mxu0 %v887
      %v2108 = vpop.f32.mrb[0].mxu0
      %v2109 = vadd.f32 %v2060, %v2108
      %v2110 = vpop.f32.mrb[0].mxu0
      %v2111 = vpop.f32.mrb[0].mxu0
      %v2112 = vpop.f32.mrb[0].mxu0
      %2113 = vdwg.mxu0
      %v2114 = vpack.c.bf16 %v1979, %v1979
      %v2115 = vpack.c.bf16 %v2044, %v2044
      %v2117 = vsel %vm1061, %v2114, 0
      %v2120 = vsel %vm1061, %v2115, 0
      %2122 = vmatprep.subr.bf16.mxu0 0
      %2123 = vmatpush1.bf16.xpose.msra.mxu0 %v2120
      %2124 = vmatprep.subr.bf16.mxu0 0
      %2125 = vmatpush1.bf16.xpose.msra.mxu0 0
      %2126 = vmatprep.subr.bf16.mxu0 0
      %2127 = vmatpush1.bf16.xpose.msra.mxu0 0
      %2128 = vmatprep.subr.bf16.mxu0 0
      %2129 = vmatpush1.bf16.xpose.msra.mxu0 0
      %2130 = vmatprep.subr.bf16.mxu0 0
      %2131 = vmatpush1.bf16.xpose.msra.mxu0 0
      %2132 = vmatprep.subr.bf16.mxu0 0
      %2133 = vmatpush1.bf16.xpose.msra.mxu0 0
      %2134 = vmatprep.subr.bf16.mxu0 0
      %2135 = vmatpush1.bf16.xpose.msra.mxu0 0
      %2136 = vmatprep.subr.bf16.mxu0 0
      %2137 = vmatpush1.bf16.xpose.msra.mxu0 0
      %2138 = vmatprep.subr.bf16.mxu0 0
      %2139 = vmatpush1.bf16.xpose.msra.mxu0 0
      %2140 = vmatprep.subr.bf16.mxu0 0
      %2141 = vmatpush1.bf16.xpose.msra.mxu0 0
      %2142 = vmatprep.subr.bf16.mxu0 0
      %2143 = vmatpush1.bf16.xpose.msra.mxu0 0
      %2144 = vmatprep.subr.bf16.mxu0 0
      %2145 = vmatpush1.bf16.xpose.msra.mxu0 0
      %2146 = vmatprep.subr.bf16.mxu0 0
      %2147 = vmatpush1.bf16.xpose.msra.mxu0 0
      %2148 = vmatprep.subr.bf16.mxu0 0
      %2149 = vmatpush1.bf16.xpose.msra.mxu0 0
      %2150 = vmatprep.subr.bf16.mxu0 0
      %2151 = vmatpush1.bf16.xpose.msra.mxu0 0
      %2152 = vmatprep.subr.bf16.mxu0 0
      %2153 = vmatpush1.bf16.xpose.msra.mxu0 0
      %2154 = vmatprep.mubr.bf16.mxu0 0
      %2155 = vmatmul.mubr.bf16.gmra.mrb[0].mxu0 %v2117
      %v2156 = vpop.f32.mrb[0].mxu0
      %v2157 = vadd.f32 %v859, %v2156
      %v2158 = vpop.f32.mrb[0].mxu0
      %v2159 = vpop.f32.mrb[0].mxu0
      %v2160 = vpop.f32.mrb[0].mxu0
      %2161 = vdwg.mxu0
      %v2162 = vsel %vm1061, %v2157, -inf
      %2163 = vmax.xlane.f32.xlu0 %v2162
      %v2164 = vpop.xlane.xlu0 %2163
      %v2165 = vsub.f32 %v2157, %v2164
      %v2166 = vmul.f32 %v2165, 1.442695
      %v2167 = vpow.pop %v2166
      %v2168 = vsel %vm1061, %v2167, 0.0
      %2169 = vadd.xlane.f32.xlu0 %v2168
      %v2170 = vpop.xlane.xlu0 %2169
      %v2171 = vrcp.pop %v2170
      %v2172 = vmul.f32 %v2167, %v2171
      %v2173 = vpack.c.bf16 %v2172, %v2172
      %v2174 = vpack.c.bf16 %v2109, %v2109
      %v2176 = vsel %vm1061, %v2173, 0
      %v2179 = vsel %vm1124, %v2174, 0
      %2181 = vmatprep.subr.bf16.mxu0 0
      %2182 = vmatpush1.bf16.msra.mxu0 %v2179
      %2183 = vmatprep.subr.bf16.mxu0 0
      %2184 = vmatpush1.bf16.msra.mxu0 0
      %2185 = vmatprep.subr.bf16.mxu0 0
      %2186 = vmatpush1.bf16.msra.mxu0 0
      %2187 = vmatprep.subr.bf16.mxu0 0
      %2188 = vmatpush1.bf16.msra.mxu0 0
      %2189 = vmatprep.subr.bf16.mxu0 0
      %2190 = vmatpush1.bf16.msra.mxu0 0
      %2191 = vmatprep.subr.bf16.mxu0 0
      %2192 = vmatpush1.bf16.msra.mxu0 0
      %2193 = vmatprep.subr.bf16.mxu0 0
      %2194 = vmatpush1.bf16.msra.mxu0 0
      %2195 = vmatprep.subr.bf16.mxu0 0
      %2196 = vmatpush1.bf16.msra.mxu0 0
      %2197 = vmatprep.subr.bf16.mxu0 0
      %2198 = vmatpush1.bf16.msra.mxu0 0
      %2199 = vmatprep.subr.bf16.mxu0 0
      %2200 = vmatpush1.bf16.msra.mxu0 0
      %2201 = vmatprep.subr.bf16.mxu0 0
      %2202 = vmatpush1.bf16.msra.mxu0 0
      %2203 = vmatprep.subr.bf16.mxu0 0
      %2204 = vmatpush1.bf16.msra.mxu0 0
      %2205 = vmatprep.subr.bf16.mxu0 0
      %2206 = vmatpush1.bf16.msra.mxu0 0
      %2207 = vmatprep.subr.bf16.mxu0 0
      %2208 = vmatpush1.bf16.msra.mxu0 0
      %2209 = vmatprep.subr.bf16.mxu0 0
      %2210 = vmatpush1.bf16.msra.mxu0 0
      %2211 = vmatprep.subr.bf16.mxu0 0
      %2212 = vmatpush1.bf16.msra.mxu0 0
      %2213 = vmatprep.mubr.bf16.mxu0 0
      %2214 = vmatmul.mubr.bf16.gmra.mrb[0].mxu0 %v2176
      %v2215 = vpop.f32.mrb[0].mxu0
      %v2216 = vadd.f32 0.0, %v2215
      %v2217 = vpop.f32.mrb[0].mxu0
      %v2218 = vpop.f32.mrb[0].mxu0
      %v2219 = vpop.f32.mrb[0].mxu0
      %2220 = vdwg.mxu0
      %v2221 = vpack.c.bf16 %v2216, %v2216
      %s2222 = scalar_lea.vmem %s724, 12
      %v2223 = vld [vmem:[%s2222] sm:$0xf]
      %v2225 = vsel %vm1061, %v2221, 0
      %v2228 = vsel %vm1124, %v2223, 0
      %2230 = vmatprep.subr.bf16.mxu0 0
      %2231 = vmatpush1.bf16.msra.mxu0 %v2228
      %2232 = vmatprep.subr.bf16.mxu0 0
      %2233 = vmatpush1.bf16.msra.mxu0 0
      %2234 = vmatprep.subr.bf16.mxu0 0
      %2235 = vmatpush1.bf16.msra.mxu0 0
      %2236 = vmatprep.subr.bf16.mxu0 0
      %2237 = vmatpush1.bf16.msra.mxu0 0
      %2238 = vmatprep.subr.bf16.mxu0 0
      %2239 = vmatpush1.bf16.msra.mxu0 0
      %2240 = vmatprep.subr.bf16.mxu0 0
      %2241 = vmatpush1.bf16.msra.mxu0 0
      %2242 = vmatprep.subr.bf16.mxu0 0
      %2243 = vmatpush1.bf16.msra.mxu0 0
      %2244 = vmatprep.subr.bf16.mxu0 0
      %2245 = vmatpush1.bf16.msra.mxu0 0
      %2246 = vmatprep.subr.bf16.mxu0 0
      %2247 = vmatpush1.bf16.msra.mxu0 0
      %2248 = vmatprep.subr.bf16.mxu0 0
      %2249 = vmatpush1.bf16.msra.mxu0 0
      %2250 = vmatprep.subr.bf16.mxu0 0
      %2251 = vmatpush1.bf16.msra.mxu0 0
      %2252 = vmatprep.subr.bf16.mxu0 0
      %2253 = vmatpush1.bf16.msra.mxu0 0
      %2254 = vmatprep.subr.bf16.mxu0 0
      %2255 = vmatpush1.bf16.msra.mxu0 0
      %2256 = vmatprep.subr.bf16.mxu0 0
      %2257 = vmatpush1.bf16.msra.mxu0 0
      %2258 = vmatprep.subr.bf16.mxu0 0
      %2259 = vmatpush1.bf16.msra.mxu0 0
      %2260 = vmatprep.subr.bf16.mxu0 0
      %2261 = vmatpush1.bf16.msra.mxu0 0
      %2262 = vmatprep.mubr.bf16.mxu0 0
      %2263 = vmatmul.mubr.bf16.gmra.mrb[0].mxu0 %v2225
      %v2264 = vpop.f32.mrb[0].mxu0
      %v2265 = vadd.f32 0.0, %v2264
      %v2266 = vpop.f32.mrb[0].mxu0
      %v2267 = vpop.f32.mrb[0].mxu0
      %v2268 = vpop.f32.mrb[0].mxu0
      %2269 = vdwg.mxu0
      %v2270 = vadd.f32 %v1918, %v2265
      %v2271 = vld [vmem:[%s727] sm:$0x1]
      %v2273 = vlaneseq
      %v2274 = vshrl.u32 %v2273, 7
      %v2275 = vsub.s32 0, %v2274
      %v2276 = vrot.slane %v2271, %v2275
      %v2278 = vadd.f32 %v2270, %v2276
      %v2279 = vadd.f32 %v860, %v2278
      %v2280 = vld [vmem:[%s730] sm:$0x1]
      %v2281 = vld [vmem:[%s733] sm:$0x1]
      %v2282 = vsel %vm885, %v2279, 0.0
      %2283 = vadd.xlane.f32.xlu0 %v2282
      %v2284 = vpop.xlane.xlu0 %2283
      %v2285 = vrcp.pop 32.0
      %v2286 = vmul.f32 %v2284, %v2285
      %v2287 = vsub.f32 %v2279, %v2286
      %v2288 = vmul.f32 %v2287, %v2287
      %v2289 = vsel %vm885, %v2288, 0.0
      %2290 = vadd.xlane.f32.xlu0 %v2289
      %v2291 = vpop.xlane.xlu0 %2290
      %v2292 = vmul.f32 %v2291, %v2285
      %v2293 = vadd.f32 %v2292, 1e-05
      %v2294 = vrsqrt.pop %v2293
      %v2295 = vmul.f32 %v2287, %v2294
      %v2297 = vlaneseq
      %v2298 = vshrl.u32 %v2297, 7
      %v2299 = vsub.s32 0, %v2298
      %v2300 = vrot.slane %v2280, %v2299
      %v2302 = vmul.f32 %v2295, %v2300
      %v2304 = vlaneseq
      %v2305 = vshrl.u32 %v2304, 7
      %v2306 = vsub.s32 0, %v2305
      %v2307 = vrot.slane %v2281, %v2306
      %v2309 = vadd.f32 %v2302, %v2307
      %v2310 = vpack.c.bf16 %v2309, %v2309
      %v2311 = vld [vmem:[%s738] sm:$0xff]
      %v2312 = vld [vmem:[%s738 + $0x8] sm:$0xff]
      %v2313 = vld [vmem:[%s738 + $0x10] sm:$0xff]
      %v2314 = vld [vmem:[%s738 + $0x18] sm:$0xff]
      %v2315 = vld [vmem:[%s738 + $0x20] sm:$0xff]
      %v2316 = vld [vmem:[%s738 + $0x28] sm:$0xff]
      %v2317 = vld [vmem:[%s738 + $0x30] sm:$0xff]
      %v2318 = vld [vmem:[%s738 + $0x38] sm:$0xff]
      %v2319 = vld [vmem:[%s738 + $0x40] sm:$0xff]
      %v2320 = vld [vmem:[%s738 + $0x48] sm:$0xff]
      %v2321 = vld [vmem:[%s738 + $0x50] sm:$0xff]
      %v2322 = vld [vmem:[%s738 + $0x58] sm:$0xff]
      %v2323 = vld [vmem:[%s738 + $0x60] sm:$0xff]
      %v2324 = vld [vmem:[%s738 + $0x68] sm:$0xff]
      %v2325 = vld [vmem:[%s738 + $0x70] sm:$0xff]
      %v2326 = vld [vmem:[%s738 + $0x78] sm:$0xff]
      %v2327 = vld [vmem:[%s738 + $0x80] sm:$0xff]
      %v2328 = vld [vmem:[%s738 + $0x88] sm:$0xff]
      %v2329 = vld [vmem:[%s738 + $0x90] sm:$0xff]
      %v2330 = vld [vmem:[%s738 + $0x98] sm:$0xff]
      %v2331 = vld [vmem:[%s738 + $0xa0] sm:$0xff]
      %v2332 = vld [vmem:[%s738 + $0xa8] sm:$0xff]
      %v2333 = vld [vmem:[%s738 + $0xb0] sm:$0xff]
      %v2334 = vld [vmem:[%s738 + $0xb8] sm:$0xff]
      %v2335 = vld [vmem:[%s738 + $0xc0] sm:$0xff]
      %v2336 = vld [vmem:[%s738 + $0xc8] sm:$0xff]
      %v2337 = vld [vmem:[%s738 + $0xd0] sm:$0xff]
      %v2338 = vld [vmem:[%s738 + $0xd8] sm:$0xff]
      %v2339 = vld [vmem:[%s738 + $0xe0] sm:$0xff]
      %v2340 = vld [vmem:[%s738 + $0xe8] sm:$0xff]
      %v2341 = vld [vmem:[%s738 + $0xf0] sm:$0xff]
      %v2342 = vld [vmem:[%s738 + $0xf8] sm:$0xff]
      %v2343 = vld [vmem:[%s742] sm:$0xff]
      %v2344 = vld [vmem:[%s742 + $0x8] sm:$0xff]
      %v2347 = vlaneseq
      %v2348 = vshrl.u32 %v2347, 7
      %v2349 = vsub.s32 0, %v2348
      %v2350 = vrot.slane %v2343, %v2349
      %v2351 = vlaneseq
      %v2352 = vshrl.u32 %v2351, 7
      %v2353 = vsub.s32 1, %v2352
      %v2354 = vrot.slane %v2343, %v2353
      %v2355 = vlaneseq
      %v2356 = vshrl.u32 %v2355, 7
      %v2357 = vsub.s32 2, %v2356
      %v2358 = vrot.slane %v2343, %v2357
      %v2359 = vlaneseq
      %v2360 = vshrl.u32 %v2359, 7
      %v2361 = vsub.s32 3, %v2360
      %v2362 = vrot.slane %v2343, %v2361
      %v2363 = vlaneseq
      %v2364 = vshrl.u32 %v2363, 7
      %v2365 = vsub.s32 4, %v2364
      %v2366 = vrot.slane %v2343, %v2365
      %v2367 = vlaneseq
      %v2368 = vshrl.u32 %v2367, 7
      %v2369 = vsub.s32 5, %v2368
      %v2370 = vrot.slane %v2343, %v2369
      %v2371 = vlaneseq
      %v2372 = vshrl.u32 %v2371, 7
      %v2373 = vsub.s32 6, %v2372
      %v2374 = vrot.slane %v2343, %v2373
      %v2375 = vlaneseq
      %v2376 = vshrl.u32 %v2375, 7
      %v2377 = vsub.s32 7, %v2376
      %v2378 = vrot.slane %v2343, %v2377
      %v2379 = vlaneseq
      %v2380 = vshrl.u32 %v2379, 7
      %v2381 = vsub.s32 0, %v2380
      %v2382 = vrot.slane %v2344, %v2381
      %v2383 = vlaneseq
      %v2384 = vshrl.u32 %v2383, 7
      %v2385 = vsub.s32 1, %v2384
      %v2386 = vrot.slane %v2344, %v2385
      %v2387 = vlaneseq
      %v2388 = vshrl.u32 %v2387, 7
      %v2389 = vsub.s32 2, %v2388
      %v2390 = vrot.slane %v2344, %v2389
      %v2391 = vlaneseq
      %v2392 = vshrl.u32 %v2391, 7
      %v2393 = vsub.s32 3, %v2392
      %v2394 = vrot.slane %v2344, %v2393
      %v2395 = vlaneseq
      %v2396 = vshrl.u32 %v2395, 7
      %v2397 = vsub.s32 4, %v2396
      %v2398 = vrot.slane %v2344, %v2397
      %v2399 = vlaneseq
      %v2400 = vshrl.u32 %v2399, 7
      %v2401 = vsub.s32 5, %v2400
      %v2402 = vrot.slane %v2344, %v2401
      %v2403 = vlaneseq
      %v2404 = vshrl.u32 %v2403, 7
      %v2405 = vsub.s32 6, %v2404
      %v2406 = vrot.slane %v2344, %v2405
      %v2407 = vlaneseq
      %v2408 = vshrl.u32 %v2407, 7
      %v2409 = vsub.s32 7, %v2408
      %v2410 = vrot.slane %v2344, %v2409
      %v2459 = vunpack.c.l.b16 %v2311
      %v2460 = vunpack.c.h.b16 %v2311
      %v2461 = vunpack.c.l.b16 %v2312
      %v2462 = vunpack.c.h.b16 %v2312
      %v2463 = vunpack.c.l.b16 %v2313
      %v2464 = vunpack.c.h.b16 %v2313
      %v2465 = vunpack.c.l.b16 %v2314
      %v2466 = vunpack.c.h.b16 %v2314
      %v2467 = vunpack.c.l.b16 %v2315
      %v2468 = vunpack.c.h.b16 %v2315
      %v2469 = vunpack.c.l.b16 %v2316
      %v2470 = vunpack.c.h.b16 %v2316
      %v2471 = vunpack.c.l.b16 %v2317
      %v2472 = vunpack.c.h.b16 %v2317
      %v2473 = vunpack.c.l.b16 %v2318
      %v2474 = vunpack.c.h.b16 %v2318
      %v2475 = vunpack.c.l.b16 %v2319
      %v2476 = vunpack.c.h.b16 %v2319
      %v2477 = vunpack.c.l.b16 %v2320
      %v2478 = vunpack.c.h.b16 %v2320
      %v2479 = vunpack.c.l.b16 %v2321
      %v2480 = vunpack.c.h.b16 %v2321
      %v2481 = vunpack.c.l.b16 %v2322
      %v2482 = vunpack.c.h.b16 %v2322
      %v2483 = vunpack.c.l.b16 %v2323
      %v2484 = vunpack.c.h.b16 %v2323
      %v2485 = vunpack.c.l.b16 %v2324
      %v2486 = vunpack.c.h.b16 %v2324
      %v2487 = vunpack.c.l.b16 %v2325
      %v2488 = vunpack.c.h.b16 %v2325
      %v2489 = vunpack.c.l.b16 %v2326
      %v2490 = vunpack.c.h.b16 %v2326
      %v2491 = vunpack.c.l.b16 %v2327
      %v2492 = vunpack.c.h.b16 %v2327
      %v2493 = vunpack.c.l.b16 %v2328
      %v2494 = vunpack.c.h.b16 %v2328
      %v2495 = vunpack.c.l.b16 %v2329
      %v2496 = vunpack.c.h.b16 %v2329
      %v2497 = vunpack.c.l.b16 %v2330
      %v2498 = vunpack.c.h.b16 %v2330
      %v2499 = vunpack.c.l.b16 %v2331
      %v2500 = vunpack.c.h.b16 %v2331
      %v2501 = vunpack.c.l.b16 %v2332
      %v2502 = vunpack.c.h.b16 %v2332
      %v2503 = vunpack.c.l.b16 %v2333
      %v2504 = vunpack.c.h.b16 %v2333
      %v2505 = vunpack.c.l.b16 %v2334
      %v2506 = vunpack.c.h.b16 %v2334
      %v2507 = vunpack.c.l.b16 %v2335
      %v2508 = vunpack.c.h.b16 %v2335
      %v2509 = vunpack.c.l.b16 %v2336
      %v2510 = vunpack.c.h.b16 %v2336
      %v2511 = vunpack.c.l.b16 %v2337
      %v2512 = vunpack.c.h.b16 %v2337
      %v2513 = vunpack.c.l.b16 %v2338
      %v2514 = vunpack.c.h.b16 %v2338
      %v2515 = vunpack.c.l.b16 %v2339
      %v2516 = vunpack.c.h.b16 %v2339
      %v2517 = vunpack.c.l.b16 %v2340
      %v2518 = vunpack.c.h.b16 %v2340
      %v2519 = vunpack.c.l.b16 %v2341
      %v2520 = vunpack.c.h.b16 %v2341
      %v2521 = vunpack.c.l.b16 %v2342
      %v2522 = vunpack.c.h.b16 %v2342
      %v2523 = vpack.c.b16 %v2475, %v2459
      %v2524 = vpack.c.b16 %v2476, %v2460
      %v2525 = vpack.c.b16 %v2477, %v2461
      %v2526 = vpack.c.b16 %v2478, %v2462
      %v2527 = vpack.c.b16 %v2479, %v2463
      %v2528 = vpack.c.b16 %v2480, %v2464
      %v2529 = vpack.c.b16 %v2481, %v2465
      %v2530 = vpack.c.b16 %v2482, %v2466
      %v2531 = vpack.c.b16 %v2483, %v2467
      %v2532 = vpack.c.b16 %v2484, %v2468
      %v2533 = vpack.c.b16 %v2485, %v2469
      %v2534 = vpack.c.b16 %v2486, %v2470
      %v2535 = vpack.c.b16 %v2487, %v2471
      %v2536 = vpack.c.b16 %v2488, %v2472
      %v2537 = vpack.c.b16 %v2489, %v2473
      %v2538 = vpack.c.b16 %v2490, %v2474
      %v2539 = vpack.c.b16 %v2507, %v2491
      %v2540 = vpack.c.b16 %v2508, %v2492
      %v2541 = vpack.c.b16 %v2509, %v2493
      %v2542 = vpack.c.b16 %v2510, %v2494
      %v2543 = vpack.c.b16 %v2511, %v2495
      %v2544 = vpack.c.b16 %v2512, %v2496
      %v2545 = vpack.c.b16 %v2513, %v2497
      %v2546 = vpack.c.b16 %v2514, %v2498
      %v2547 = vpack.c.b16 %v2515, %v2499
      %v2548 = vpack.c.b16 %v2516, %v2500
      %v2549 = vpack.c.b16 %v2517, %v2501
      %v2550 = vpack.c.b16 %v2518, %v2502
      %v2551 = vpack.c.b16 %v2519, %v2503
      %v2552 = vpack.c.b16 %v2520, %v2504
      %v2553 = vpack.c.b16 %v2521, %v2505
      %v2554 = vpack.c.b16 %v2522, %v2506
      %v2588 = vsel %vm885, %v2310, 0
      %2590 = vmatprep.subr.bf16.mxu0 %v2524
      %2591 = vmatpush1.bf16.msra.mxu0 %v2523
      %2592 = vmatprep.subr.bf16.mxu0 %v2540
      %2593 = vmatpush1.bf16.msra.mxu0 %v2539
      %2594 = vmatprep.subr.bf16.mxu0 0
      %2595 = vmatpush1.bf16.msra.mxu0 0
      %2596 = vmatprep.subr.bf16.mxu0 0
      %2597 = vmatpush1.bf16.msra.mxu0 0
      %2598 = vmatprep.subr.bf16.mxu0 0
      %2599 = vmatpush1.bf16.msra.mxu0 0
      %2600 = vmatprep.subr.bf16.mxu0 0
      %2601 = vmatpush1.bf16.msra.mxu0 0
      %2602 = vmatprep.subr.bf16.mxu0 0
      %2603 = vmatpush1.bf16.msra.mxu0 0
      %2604 = vmatprep.subr.bf16.mxu0 0
      %2605 = vmatpush1.bf16.msra.mxu0 0
      %2606 = vmatprep.subr.bf16.mxu0 0
      %2607 = vmatpush1.bf16.msra.mxu0 0
      %2608 = vmatprep.subr.bf16.mxu0 0
      %2609 = vmatpush1.bf16.msra.mxu0 0
      %2610 = vmatprep.subr.bf16.mxu0 0
      %2611 = vmatpush1.bf16.msra.mxu0 0
      %2612 = vmatprep.subr.bf16.mxu0 0
      %2613 = vmatpush1.bf16.msra.mxu0 0
      %2614 = vmatprep.subr.bf16.mxu0 0
      %2615 = vmatpush1.bf16.msra.mxu0 0
      %2616 = vmatprep.subr.bf16.mxu0 0
      %2617 = vmatpush1.bf16.msra.mxu0 0
      %2618 = vmatprep.subr.bf16.mxu0 0
      %2619 = vmatpush1.bf16.msra.mxu0 0
      %2620 = vmatprep.subr.bf16.mxu0 0
      %2621 = vmatpush1.bf16.msra.mxu0 0
      %2622 = vmatprep.mubr.bf16.mxu0 0
      %2623 = vmatmul.mubr.bf16.gmra.mrb[0].mxu0 %v2588
      %v2624 = vpop.f32.mrb[0].mxu0
      %v2625 = vadd.f32 %v2350, %v2624
      %v2626 = vpop.f32.mrb[0].mxu0
      %v2627 = vadd.f32 %v2354, %v2626
      %v2628 = vpop.f32.mrb[0].mxu0
      %v2629 = vpop.f32.mrb[0].mxu0
      %2630 = vdwg.mxu0
      %2631 = vmatprep.subr.bf16.mxu0 %v2526
      %2632 = vmatpush1.bf16.msra.mxu0 %v2525
      %2633 = vmatprep.subr.bf16.mxu0 %v2542
      %2634 = vmatpush1.bf16.msra.mxu0 %v2541
      %2635 = vmatprep.subr.bf16.mxu0 0
      %2636 = vmatpush1.bf16.msra.mxu0 0
      %2637 = vmatprep.subr.bf16.mxu0 0
      %2638 = vmatpush1.bf16.msra.mxu0 0
      %2639 = vmatprep.subr.bf16.mxu0 0
      %2640 = vmatpush1.bf16.msra.mxu0 0
      %2641 = vmatprep.subr.bf16.mxu0 0
      %2642 = vmatpush1.bf16.msra.mxu0 0
      %2643 = vmatprep.subr.bf16.mxu0 0
      %2644 = vmatpush1.bf16.msra.mxu0 0
      %2645 = vmatprep.subr.bf16.mxu0 0
      %2646 = vmatpush1.bf16.msra.mxu0 0
      %2647 = vmatprep.subr.bf16.mxu0 0
      %2648 = vmatpush1.bf16.msra.mxu0 0
      %2649 = vmatprep.subr.bf16.mxu0 0
      %2650 = vmatpush1.bf16.msra.mxu0 0
      %2651 = vmatprep.subr.bf16.mxu0 0
      %2652 = vmatpush1.bf16.msra.mxu0 0
      %2653 = vmatprep.subr.bf16.mxu0 0
      %2654 = vmatpush1.bf16.msra.mxu0 0
      %2655 = vmatprep.subr.bf16.mxu0 0
      %2656 = vmatpush1.bf16.msra.mxu0 0
      %2657 = vmatprep.subr.bf16.mxu0 0
      %2658 = vmatpush1.bf16.msra.mxu0 0
      %2659 = vmatprep.subr.bf16.mxu0 0
      %2660 = vmatpush1.bf16.msra.mxu0 0
      %2661 = vmatprep.subr.bf16.mxu0 0
      %2662 = vmatpush1.bf16.msra.mxu0 0
      %2663 = vmatprep.mubr.bf16.mxu0 0
      %2664 = vmatmul.mubr.bf16.gmra.mrb[0].mxu0 %v2588
      %v2665 = vpop.f32.mrb[0].mxu0
      %v2666 = vadd.f32 %v2358, %v2665
      %v2667 = vpop.f32.mrb[0].mxu0
      %v2668 = vadd.f32 %v2362, %v2667
      %v2669 = vpop.f32.mrb[0].mxu0
      %v2670 = vpop.f32.mrb[0].mxu0
      %2671 = vdwg.mxu0
      %2672 = vmatprep.subr.bf16.mxu0 %v2528
      %2673 = vmatpush1.bf16.msra.mxu0 %v2527
      %2674 = vmatprep.subr.bf16.mxu0 %v2544
      %2675 = vmatpush1.bf16.msra.mxu0 %v2543
      %2676 = vmatprep.subr.bf16.mxu0 0
      %2677 = vmatpush1.bf16.msra.mxu0 0
      %2678 = vmatprep.subr.bf16.mxu0 0
      %2679 = vmatpush1.bf16.msra.mxu0 0
      %2680 = vmatprep.subr.bf16.mxu0 0
      %2681 = vmatpush1.bf16.msra.mxu0 0
      %2682 = vmatprep.subr.bf16.mxu0 0
      %2683 = vmatpush1.bf16.msra.mxu0 0
      %2684 = vmatprep.subr.bf16.mxu0 0
      %2685 = vmatpush1.bf16.msra.mxu0 0
      %2686 = vmatprep.subr.bf16.mxu0 0
      %2687 = vmatpush1.bf16.msra.mxu0 0
      %2688 = vmatprep.subr.bf16.mxu0 0
      %2689 = vmatpush1.bf16.msra.mxu0 0
      %2690 = vmatprep.subr.bf16.mxu0 0
      %2691 = vmatpush1.bf16.msra.mxu0 0
      %2692 = vmatprep.subr.bf16.mxu0 0
      %2693 = vmatpush1.bf16.msra.mxu0 0
      %2694 = vmatprep.subr.bf16.mxu0 0
      %2695 = vmatpush1.bf16.msra.mxu0 0
      %2696 = vmatprep.subr.bf16.mxu0 0
      %2697 = vmatpush1.bf16.msra.mxu0 0
      %2698 = vmatprep.subr.bf16.mxu0 0
      %2699 = vmatpush1.bf16.msra.mxu0 0
      %2700 = vmatprep.subr.bf16.mxu0 0
      %2701 = vmatpush1.bf16.msra.mxu0 0
      %2702 = vmatprep.subr.bf16.mxu0 0
      %2703 = vmatpush1.bf16.msra.mxu0 0
      %2704 = vmatprep.mubr.bf16.mxu0 0
      %2705 = vmatmul.mubr.bf16.gmra.mrb[0].mxu0 %v2588
      %v2706 = vpop.f32.mrb[0].mxu0
      %v2707 = vadd.f32 %v2366, %v2706
      %v2708 = vpop.f32.mrb[0].mxu0
      %v2709 = vadd.f32 %v2370, %v2708
      %v2710 = vpop.f32.mrb[0].mxu0
      %v2711 = vpop.f32.mrb[0].mxu0
      %2712 = vdwg.mxu0
      %2713 = vmatprep.subr.bf16.mxu0 %v2530
      %2714 = vmatpush1.bf16.msra.mxu0 %v2529
      %2715 = vmatprep.subr.bf16.mxu0 %v2546
      %2716 = vmatpush1.bf16.msra.mxu0 %v2545
      %2717 = vmatprep.subr.bf16.mxu0 0
      %2718 = vmatpush1.bf16.msra.mxu0 0
      %2719 = vmatprep.subr.bf16.mxu0 0
      %2720 = vmatpush1.bf16.msra.mxu0 0
      %2721 = vmatprep.subr.bf16.mxu0 0
      %2722 = vmatpush1.bf16.msra.mxu0 0
      %2723 = vmatprep.subr.bf16.mxu0 0
      %2724 = vmatpush1.bf16.msra.mxu0 0
      %2725 = vmatprep.subr.bf16.mxu0 0
      %2726 = vmatpush1.bf16.msra.mxu0 0
      %2727 = vmatprep.subr.bf16.mxu0 0
      %2728 = vmatpush1.bf16.msra.mxu0 0
      %2729 = vmatprep.subr.bf16.mxu0 0
      %2730 = vmatpush1.bf16.msra.mxu0 0
      %2731 = vmatprep.subr.bf16.mxu0 0
      %2732 = vmatpush1.bf16.msra.mxu0 0
      %2733 = vmatprep.subr.bf16.mxu0 0
      %2734 = vmatpush1.bf16.msra.mxu0 0
      %2735 = vmatprep.subr.bf16.mxu0 0
      %2736 = vmatpush1.bf16.msra.mxu0 0
      %2737 = vmatprep.subr.bf16.mxu0 0
      %2738 = vmatpush1.bf16.msra.mxu0 0
      %2739 = vmatprep.subr.bf16.mxu0 0
      %2740 = vmatpush1.bf16.msra.mxu0 0
      %2741 = vmatprep.subr.bf16.mxu0 0
      %2742 = vmatpush1.bf16.msra.mxu0 0
      %2743 = vmatprep.subr.bf16.mxu0 0
      %2744 = vmatpush1.bf16.msra.mxu0 0
      %2745 = vmatprep.mubr.bf16.mxu0 0
      %2746 = vmatmul.mubr.bf16.gmra.mrb[0].mxu0 %v2588
      %v2747 = vpop.f32.mrb[0].mxu0
      %v2748 = vadd.f32 %v2374, %v2747
      %v2749 = vpop.f32.mrb[0].mxu0
      %v2750 = vadd.f32 %v2378, %v2749
      %v2751 = vpop.f32.mrb[0].mxu0
      %v2752 = vpop.f32.mrb[0].mxu0
      %2753 = vdwg.mxu0
      %2754 = vmatprep.subr.bf16.mxu0 %v2532
      %2755 = vmatpush1.bf16.msra.mxu0 %v2531
      %2756 = vmatprep.subr.bf16.mxu0 %v2548
      %2757 = vmatpush1.bf16.msra.mxu0 %v2547
      %2758 = vmatprep.subr.bf16.mxu0 0
      %2759 = vmatpush1.bf16.msra.mxu0 0
      %2760 = vmatprep.subr.bf16.mxu0 0
      %2761 = vmatpush1.bf16.msra.mxu0 0
      %2762 = vmatprep.subr.bf16.mxu0 0
      %2763 = vmatpush1.bf16.msra.mxu0 0
      %2764 = vmatprep.subr.bf16.mxu0 0
      %2765 = vmatpush1.bf16.msra.mxu0 0
      %2766 = vmatprep.subr.bf16.mxu0 0
      %2767 = vmatpush1.bf16.msra.mxu0 0
      %2768 = vmatprep.subr.bf16.mxu0 0
      %2769 = vmatpush1.bf16.msra.mxu0 0
      %2770 = vmatprep.subr.bf16.mxu0 0
      %2771 = vmatpush1.bf16.msra.mxu0 0
      %2772 = vmatprep.subr.bf16.mxu0 0
      %2773 = vmatpush1.bf16.msra.mxu0 0
      %2774 = vmatprep.subr.bf16.mxu0 0
      %2775 = vmatpush1.bf16.msra.mxu0 0
      %2776 = vmatprep.subr.bf16.mxu0 0
      %2777 = vmatpush1.bf16.msra.mxu0 0
      %2778 = vmatprep.subr.bf16.mxu0 0
      %2779 = vmatpush1.bf16.msra.mxu0 0
      %2780 = vmatprep.subr.bf16.mxu0 0
      %2781 = vmatpush1.bf16.msra.mxu0 0
      %2782 = vmatprep.subr.bf16.mxu0 0
      %2783 = vmatpush1.bf16.msra.mxu0 0
      %2784 = vmatprep.subr.bf16.mxu0 0
      %2785 = vmatpush1.bf16.msra.mxu0 0
      %2786 = vmatprep.mubr.bf16.mxu0 0
      %2787 = vmatmul.mubr.bf16.gmra.mrb[0].mxu0 %v2588
      %v2788 = vpop.f32.mrb[0].mxu0
      %v2789 = vadd.f32 %v2382, %v2788
      %v2790 = vpop.f32.mrb[0].mxu0
      %v2791 = vadd.f32 %v2386, %v2790
      %v2792 = vpop.f32.mrb[0].mxu0
      %v2793 = vpop.f32.mrb[0].mxu0
      %2794 = vdwg.mxu0
      %2795 = vmatprep.subr.bf16.mxu0 %v2534
      %2796 = vmatpush1.bf16.msra.mxu0 %v2533
      %2797 = vmatprep.subr.bf16.mxu0 %v2550
      %2798 = vmatpush1.bf16.msra.mxu0 %v2549
      %2799 = vmatprep.subr.bf16.mxu0 0
      %2800 = vmatpush1.bf16.msra.mxu0 0
      %2801 = vmatprep.subr.bf16.mxu0 0
      %2802 = vmatpush1.bf16.msra.mxu0 0
      %2803 = vmatprep.subr.bf16.mxu0 0
      %2804 = vmatpush1.bf16.msra.mxu0 0
      %2805 = vmatprep.subr.bf16.mxu0 0
      %2806 = vmatpush1.bf16.msra.mxu0 0
      %2807 = vmatprep.subr.bf16.mxu0 0
      %2808 = vmatpush1.bf16.msra.mxu0 0
      %2809 = vmatprep.subr.bf16.mxu0 0
      %2810 = vmatpush1.bf16.msra.mxu0 0
      %2811 = vmatprep.subr.bf16.mxu0 0
      %2812 = vmatpush1.bf16.msra.mxu0 0
      %2813 = vmatprep.subr.bf16.mxu0 0
      %2814 = vmatpush1.bf16.msra.mxu0 0
      %2815 = vmatprep.subr.bf16.mxu0 0
      %2816 = vmatpush1.bf16.msra.mxu0 0
      %2817 = vmatprep.subr.bf16.mxu0 0
      %2818 = vmatpush1.bf16.msra.mxu0 0
      %2819 = vmatprep.subr.bf16.mxu0 0
      %2820 = vmatpush1.bf16.msra.mxu0 0
      %2821 = vmatprep.subr.bf16.mxu0 0
      %2822 = vmatpush1.bf16.msra.mxu0 0
      %2823 = vmatprep.subr.bf16.mxu0 0
      %2824 = vmatpush1.bf16.msra.mxu0 0
      %2825 = vmatprep.subr.bf16.mxu0 0
      %2826 = vmatpush1.bf16.msra.mxu0 0
      %2827 = vmatprep.mubr.bf16.mxu0 0
      %2828 = vmatmul.mubr.bf16.gmra.mrb[0].mxu0 %v2588
      %v2829 = vpop.f32.mrb[0].mxu0
      %v2830 = vadd.f32 %v2390, %v2829
      %v2831 = vpop.f32.mrb[0].mxu0
      %v2832 = vadd.f32 %v2394, %v2831
      %v2833 = vpop.f32.mrb[0].mxu0
      %v2834 = vpop.f32.mrb[0].mxu0
      %2835 = vdwg.mxu0
      %2836 = vmatprep.subr.bf16.mxu0 %v2536
      %2837 = vmatpush1.bf16.msra.mxu0 %v2535
      %2838 = vmatprep.subr.bf16.mxu0 %v2552
      %2839 = vmatpush1.bf16.msra.mxu0 %v2551
      %2840 = vmatprep.subr.bf16.mxu0 0
      %2841 = vmatpush1.bf16.msra.mxu0 0
      %2842 = vmatprep.subr.bf16.mxu0 0
      %2843 = vmatpush1.bf16.msra.mxu0 0
      %2844 = vmatprep.subr.bf16.mxu0 0
      %2845 = vmatpush1.bf16.msra.mxu0 0
      %2846 = vmatprep.subr.bf16.mxu0 0
      %2847 = vmatpush1.bf16.msra.mxu0 0
      %2848 = vmatprep.subr.bf16.mxu0 0
      %2849 = vmatpush1.bf16.msra.mxu0 0
      %2850 = vmatprep.subr.bf16.mxu0 0
      %2851 = vmatpush1.bf16.msra.mxu0 0
      %2852 = vmatprep.subr.bf16.mxu0 0
      %2853 = vmatpush1.bf16.msra.mxu0 0
      %2854 = vmatprep.subr.bf16.mxu0 0
      %2855 = vmatpush1.bf16.msra.mxu0 0
      %2856 = vmatprep.subr.bf16.mxu0 0
      %2857 = vmatpush1.bf16.msra.mxu0 0
      %2858 = vmatprep.subr.bf16.mxu0 0
      %2859 = vmatpush1.bf16.msra.mxu0 0
      %2860 = vmatprep.subr.bf16.mxu0 0
      %2861 = vmatpush1.bf16.msra.mxu0 0
      %2862 = vmatprep.subr.bf16.mxu0 0
      %2863 = vmatpush1.bf16.msra.mxu0 0
      %2864 = vmatprep.subr.bf16.mxu0 0
      %2865 = vmatpush1.bf16.msra.mxu0 0
      %2866 = vmatprep.subr.bf16.mxu0 0
      %2867 = vmatpush1.bf16.msra.mxu0 0
      %2868 = vmatprep.mubr.bf16.mxu0 0
      %2869 = vmatmul.mubr.bf16.gmra.mrb[0].mxu0 %v2588
      %v2870 = vpop.f32.mrb[0].mxu0
      %v2871 = vadd.f32 %v2398, %v2870
      %v2872 = vpop.f32.mrb[0].mxu0
      %v2873 = vadd.f32 %v2402, %v2872
      %v2874 = vpop.f32.mrb[0].mxu0
      %v2875 = vpop.f32.mrb[0].mxu0
      %2876 = vdwg.mxu0
      %2877 = vmatprep.subr.bf16.mxu0 %v2538
      %2878 = vmatpush1.bf16.msra.mxu0 %v2537
      %2879 = vmatprep.subr.bf16.mxu0 %v2554
      %2880 = vmatpush1.bf16.msra.mxu0 %v2553
      %2881 = vmatprep.subr.bf16.mxu0 0
      %2882 = vmatpush1.bf16.msra.mxu0 0
      %2883 = vmatprep.subr.bf16.mxu0 0
      %2884 = vmatpush1.bf16.msra.mxu0 0
      %2885 = vmatprep.subr.bf16.mxu0 0
      %2886 = vmatpush1.bf16.msra.mxu0 0
      %2887 = vmatprep.subr.bf16.mxu0 0
      %2888 = vmatpush1.bf16.msra.mxu0 0
      %2889 = vmatprep.subr.bf16.mxu0 0
      %2890 = vmatpush1.bf16.msra.mxu0 0
      %2891 = vmatprep.subr.bf16.mxu0 0
      %2892 = vmatpush1.bf16.msra.mxu0 0
      %2893 = vmatprep.subr.bf16.mxu0 0
      %2894 = vmatpush1.bf16.msra.mxu0 0
      %2895 = vmatprep.subr.bf16.mxu0 0
      %2896 = vmatpush1.bf16.msra.mxu0 0
      %2897 = vmatprep.subr.bf16.mxu0 0
      %2898 = vmatpush1.bf16.msra.mxu0 0
      %2899 = vmatprep.subr.bf16.mxu0 0
      %2900 = vmatpush1.bf16.msra.mxu0 0
      %2901 = vmatprep.subr.bf16.mxu0 0
      %2902 = vmatpush1.bf16.msra.mxu0 0
      %2903 = vmatprep.subr.bf16.mxu0 0
      %2904 = vmatpush1.bf16.msra.mxu0 0
      %2905 = vmatprep.subr.bf16.mxu0 0
      %2906 = vmatpush1.bf16.msra.mxu0 0
      %2907 = vmatprep.subr.bf16.mxu0 0
      %2908 = vmatpush1.bf16.msra.mxu0 0
      %2909 = vmatprep.mubr.bf16.mxu0 0
      %2910 = vmatmul.mubr.bf16.gmra.mrb[0].mxu0 %v2588
      %v2911 = vpop.f32.mrb[0].mxu0
      %v2912 = vadd.f32 %v2406, %v2911
      %v2913 = vpop.f32.mrb[0].mxu0
      %v2914 = vadd.f32 %v2410, %v2913
      %v2915 = vpop.f32.mrb[0].mxu0
      %v2916 = vpop.f32.mrb[0].mxu0
      %2917 = vdwg.mxu0
      %v2918 = vmax.f32 %v2625, 0.0
      %v2919 = vmax.f32 %v2627, 0.0
      %v2920 = vmax.f32 %v2666, 0.0
      %v2921 = vmax.f32 %v2668, 0.0
      %v2922 = vmax.f32 %v2707, 0.0
      %v2923 = vmax.f32 %v2709, 0.0
      %v2924 = vmax.f32 %v2748, 0.0
      %v2925 = vmax.f32 %v2750, 0.0
      %v2926 = vmax.f32 %v2789, 0.0
      %v2927 = vmax.f32 %v2791, 0.0
      %v2928 = vmax.f32 %v2830, 0.0
      %v2929 = vmax.f32 %v2832, 0.0
      %v2930 = vmax.f32 %v2871, 0.0
      %v2931 = vmax.f32 %v2873, 0.0
      %v2932 = vmax.f32 %v2912, 0.0
      %v2933 = vmax.f32 %v2914, 0.0
      %v2934 = vpack.c.bf16 %v2918, %v2918
      %v2935 = vpack.c.bf16 %v2919, %v2919
      %v2936 = vpack.c.bf16 %v2920, %v2920
      %v2937 = vpack.c.bf16 %v2921, %v2921
      %v2938 = vpack.c.bf16 %v2922, %v2922
      %v2939 = vpack.c.bf16 %v2923, %v2923
      %v2940 = vpack.c.bf16 %v2924, %v2924
      %v2941 = vpack.c.bf16 %v2925, %v2925
      %v2942 = vpack.c.bf16 %v2926, %v2926
      %v2943 = vpack.c.bf16 %v2927, %v2927
      %v2944 = vpack.c.bf16 %v2928, %v2928
      %v2945 = vpack.c.bf16 %v2929, %v2929
      %v2946 = vpack.c.bf16 %v2930, %v2930
      %v2947 = vpack.c.bf16 %v2931, %v2931
      %v2948 = vpack.c.bf16 %v2932, %v2932
      %v2949 = vpack.c.bf16 %v2933, %v2933
      %v2950 = vld [vmem:[%s747] sm:$0xf]
      %v2951 = vld [vmem:[%s747 + $0x4] sm:$0xf]
      %v2952 = vld [vmem:[%s747 + $0x8] sm:$0xf]
      %v2953 = vld [vmem:[%s747 + $0xc] sm:$0xf]
      %v2954 = vld [vmem:[%s747 + $0x10] sm:$0xf]
      %v2955 = vld [vmem:[%s747 + $0x14] sm:$0xf]
      %v2956 = vld [vmem:[%s747 + $0x18] sm:$0xf]
      %v2957 = vld [vmem:[%s747 + $0x1c] sm:$0xf]
      %v2958 = vld [vmem:[%s747 + $0x20] sm:$0xf]
      %v2959 = vld [vmem:[%s747 + $0x24] sm:$0xf]
      %v2960 = vld [vmem:[%s747 + $0x28] sm:$0xf]
      %v2961 = vld [vmem:[%s747 + $0x2c] sm:$0xf]
      %v2962 = vld [vmem:[%s747 + $0x30] sm:$0xf]
      %v2963 = vld [vmem:[%s747 + $0x34] sm:$0xf]
      %v2964 = vld [vmem:[%s747 + $0x38] sm:$0xf]
      %v2965 = vld [vmem:[%s747 + $0x3c] sm:$0xf]
      %v2966 = vld [vmem:[%s747 + $0x40] sm:$0xf]
      %v2967 = vld [vmem:[%s747 + $0x44] sm:$0xf]
      %v2968 = vld [vmem:[%s747 + $0x48] sm:$0xf]
      %v2969 = vld [vmem:[%s747 + $0x4c] sm:$0xf]
      %v2970 = vld [vmem:[%s747 + $0x50] sm:$0xf]
      %v2971 = vld [vmem:[%s747 + $0x54] sm:$0xf]
      %v2972 = vld [vmem:[%s747 + $0x58] sm:$0xf]
      %v2973 = vld [vmem:[%s747 + $0x5c] sm:$0xf]
      %v2974 = vld [vmem:[%s747 + $0x60] sm:$0xf]
      %v2975 = vld [vmem:[%s747 + $0x64] sm:$0xf]
      %v2976 = vld [vmem:[%s747 + $0x68] sm:$0xf]
      %v2977 = vld [vmem:[%s747 + $0x6c] sm:$0xf]
      %v2978 = vld [vmem:[%s747 + $0x70] sm:$0xf]
      %v2979 = vld [vmem:[%s747 + $0x74] sm:$0xf]
      %v2980 = vld [vmem:[%s747 + $0x78] sm:$0xf]
      %v2981 = vld [vmem:[%s747 + $0x7c] sm:$0xf]
      %v2982 = vld [vmem:[%s747 + $0x80] sm:$0xf]
      %v2983 = vld [vmem:[%s747 + $0x84] sm:$0xf]
      %v2984 = vld [vmem:[%s747 + $0x88] sm:$0xf]
      %v2985 = vld [vmem:[%s747 + $0x8c] sm:$0xf]
      %v2986 = vld [vmem:[%s747 + $0x90] sm:$0xf]
      %v2987 = vld [vmem:[%s747 + $0x94] sm:$0xf]
      %v2988 = vld [vmem:[%s747 + $0x98] sm:$0xf]
      %v2989 = vld [vmem:[%s747 + $0x9c] sm:$0xf]
      %v2990 = vld [vmem:[%s747 + $0xa0] sm:$0xf]
      %v2991 = vld [vmem:[%s747 + $0xa4] sm:$0xf]
      %v2992 = vld [vmem:[%s747 + $0xa8] sm:$0xf]
      %v2993 = vld [vmem:[%s747 + $0xac] sm:$0xf]
      %v2994 = vld [vmem:[%s747 + $0xb0] sm:$0xf]
      %v2995 = vld [vmem:[%s747 + $0xb4] sm:$0xf]
      %v2996 = vld [vmem:[%s747 + $0xb8] sm:$0xf]
      %v2997 = vld [vmem:[%s747 + $0xbc] sm:$0xf]
      %v2998 = vld [vmem:[%s747 + $0xc0] sm:$0xf]
      %v2999 = vld [vmem:[%s747 + $0xc4] sm:$0xf]
      %v3000 = vld [vmem:[%s747 + $0xc8] sm:$0xf]
      %v3001 = vld [vmem:[%s747 + $0xcc] sm:$0xf]
      %v3002 = vld [vmem:[%s747 + $0xd0] sm:$0xf]
      %v3003 = vld [vmem:[%s747 + $0xd4] sm:$0xf]
      %v3004 = vld [vmem:[%s747 + $0xd8] sm:$0xf]
      %v3005 = vld [vmem:[%s747 + $0xdc] sm:$0xf]
      %v3006 = vld [vmem:[%s747 + $0xe0] sm:$0xf]
      %v3007 = vld [vmem:[%s747 + $0xe4] sm:$0xf]
      %v3008 = vld [vmem:[%s747 + $0xe8] sm:$0xf]
      %v3009 = vld [vmem:[%s747 + $0xec] sm:$0xf]
      %v3010 = vld [vmem:[%s747 + $0xf0] sm:$0xf]
      %v3011 = vld [vmem:[%s747 + $0xf4] sm:$0xf]
      %v3012 = vld [vmem:[%s747 + $0xf8] sm:$0xf]
      %v3013 = vld [vmem:[%s747 + $0xfc] sm:$0xf]
      %v3014 = vld [vmem:[%s747 + $0x100] sm:$0xf]
      %v3015 = vld [vmem:[%s747 + $0x104] sm:$0xf]
      %v3016 = vld [vmem:[%s747 + $0x108] sm:$0xf]
      %v3017 = vld [vmem:[%s747 + $0x10c] sm:$0xf]
      %v3018 = vld [vmem:[%s747 + $0x110] sm:$0xf]
      %v3019 = vld [vmem:[%s747 + $0x114] sm:$0xf]
      %v3020 = vld [vmem:[%s747 + $0x118] sm:$0xf]
      %v3021 = vld [vmem:[%s747 + $0x11c] sm:$0xf]
      %v3022 = vld [vmem:[%s747 + $0x120] sm:$0xf]
      %v3023 = vld [vmem:[%s747 + $0x124] sm:$0xf]
      %v3024 = vld [vmem:[%s747 + $0x128] sm:$0xf]
      %v3025 = vld [vmem:[%s747 + $0x12c] sm:$0xf]
      %v3026 = vld [vmem:[%s747 + $0x130] sm:$0xf]
      %v3027 = vld [vmem:[%s747 + $0x134] sm:$0xf]
      %v3028 = vld [vmem:[%s747 + $0x138] sm:$0xf]
      %v3029 = vld [vmem:[%s747 + $0x13c] sm:$0xf]
      %v3030 = vld [vmem:[%s747 + $0x140] sm:$0xf]
      %v3031 = vld [vmem:[%s747 + $0x144] sm:$0xf]
      %v3032 = vld [vmem:[%s747 + $0x148] sm:$0xf]
      %v3033 = vld [vmem:[%s747 + $0x14c] sm:$0xf]
      %v3034 = vld [vmem:[%s747 + $0x150] sm:$0xf]
      %v3035 = vld [vmem:[%s747 + $0x154] sm:$0xf]
      %v3036 = vld [vmem:[%s747 + $0x158] sm:$0xf]
      %v3037 = vld [vmem:[%s747 + $0x15c] sm:$0xf]
      %v3038 = vld [vmem:[%s747 + $0x160] sm:$0xf]
      %v3039 = vld [vmem:[%s747 + $0x164] sm:$0xf]
      %v3040 = vld [vmem:[%s747 + $0x168] sm:$0xf]
      %v3041 = vld [vmem:[%s747 + $0x16c] sm:$0xf]
      %v3042 = vld [vmem:[%s747 + $0x170] sm:$0xf]
      %v3043 = vld [vmem:[%s747 + $0x174] sm:$0xf]
      %v3044 = vld [vmem:[%s747 + $0x178] sm:$0xf]
      %v3045 = vld [vmem:[%s747 + $0x17c] sm:$0xf]
      %v3046 = vld [vmem:[%s747 + $0x180] sm:$0xf]
      %v3047 = vld [vmem:[%s747 + $0x184] sm:$0xf]
      %v3048 = vld [vmem:[%s747 + $0x188] sm:$0xf]
      %v3049 = vld [vmem:[%s747 + $0x18c] sm:$0xf]
      %v3050 = vld [vmem:[%s747 + $0x190] sm:$0xf]
      %v3051 = vld [vmem:[%s747 + $0x194] sm:$0xf]
      %v3052 = vld [vmem:[%s747 + $0x198] sm:$0xf]
      %v3053 = vld [vmem:[%s747 + $0x19c] sm:$0xf]
      %v3054 = vld [vmem:[%s747 + $0x1a0] sm:$0xf]
      %v3055 = vld [vmem:[%s747 + $0x1a4] sm:$0xf]
      %v3056 = vld [vmem:[%s747 + $0x1a8] sm:$0xf]
      %v3057 = vld [vmem:[%s747 + $0x1ac] sm:$0xf]
      %v3058 = vld [vmem:[%s747 + $0x1b0] sm:$0xf]
      %v3059 = vld [vmem:[%s747 + $0x1b4] sm:$0xf]
      %v3060 = vld [vmem:[%s747 + $0x1b8] sm:$0xf]
      %v3061 = vld [vmem:[%s747 + $0x1bc] sm:$0xf]
      %v3062 = vld [vmem:[%s747 + $0x1c0] sm:$0xf]
      %v3063 = vld [vmem:[%s747 + $0x1c4] sm:$0xf]
      %v3064 = vld [vmem:[%s747 + $0x1c8] sm:$0xf]
      %v3065 = vld [vmem:[%s747 + $0x1cc] sm:$0xf]
      %v3066 = vld [vmem:[%s747 + $0x1d0] sm:$0xf]
      %v3067 = vld [vmem:[%s747 + $0x1d4] sm:$0xf]
      %v3068 = vld [vmem:[%s747 + $0x1d8] sm:$0xf]
      %v3069 = vld [vmem:[%s747 + $0x1dc] sm:$0xf]
      %v3070 = vld [vmem:[%s747 + $0x1e0] sm:$0xf]
      %v3071 = vld [vmem:[%s747 + $0x1e4] sm:$0xf]
      %v3072 = vld [vmem:[%s747 + $0x1e8] sm:$0xf]
      %v3073 = vld [vmem:[%s747 + $0x1ec] sm:$0xf]
      %v3074 = vld [vmem:[%s747 + $0x1f0] sm:$0xf]
      %v3075 = vld [vmem:[%s747 + $0x1f4] sm:$0xf]
      %v3076 = vld [vmem:[%s747 + $0x1f8] sm:$0xf]
      %v3077 = vld [vmem:[%s747 + $0x1fc] sm:$0xf]
      %v3078 = vld [vmem:[%s747 + $0x200] sm:$0xf]
      %v3079 = vld [vmem:[%s747 + $0x204] sm:$0xf]
      %v3080 = vld [vmem:[%s747 + $0x208] sm:$0xf]
      %v3081 = vld [vmem:[%s747 + $0x20c] sm:$0xf]
      %v3082 = vld [vmem:[%s747 + $0x210] sm:$0xf]
      %v3083 = vld [vmem:[%s747 + $0x214] sm:$0xf]
      %v3084 = vld [vmem:[%s747 + $0x218] sm:$0xf]
      %v3085 = vld [vmem:[%s747 + $0x21c] sm:$0xf]
      %v3086 = vld [vmem:[%s747 + $0x220] sm:$0xf]
      %v3087 = vld [vmem:[%s747 + $0x224] sm:$0xf]
      %v3088 = vld [vmem:[%s747 + $0x228] sm:$0xf]
      %v3089 = vld [vmem:[%s747 + $0x22c] sm:$0xf]
      %v3090 = vld [vmem:[%s747 + $0x230] sm:$0xf]
      %v3091 = vld [vmem:[%s747 + $0x234] sm:$0xf]
      %v3092 = vld [vmem:[%s747 + $0x238] sm:$0xf]
      %v3093 = vld [vmem:[%s747 + $0x23c] sm:$0xf]
      %v3094 = vld [vmem:[%s747 + $0x240] sm:$0xf]
      %v3095 = vld [vmem:[%s747 + $0x244] sm:$0xf]
      %v3096 = vld [vmem:[%s747 + $0x248] sm:$0xf]
      %v3097 = vld [vmem:[%s747 + $0x24c] sm:$0xf]
      %v3098 = vld [vmem:[%s747 + $0x250] sm:$0xf]
      %v3099 = vld [vmem:[%s747 + $0x254] sm:$0xf]
      %v3100 = vld [vmem:[%s747 + $0x258] sm:$0xf]
      %v3101 = vld [vmem:[%s747 + $0x25c] sm:$0xf]
      %v3102 = vld [vmem:[%s747 + $0x260] sm:$0xf]
      %v3103 = vld [vmem:[%s747 + $0x264] sm:$0xf]
      %v3104 = vld [vmem:[%s747 + $0x268] sm:$0xf]
      %v3105 = vld [vmem:[%s747 + $0x26c] sm:$0xf]
      %v3106 = vld [vmem:[%s747 + $0x270] sm:$0xf]
      %v3107 = vld [vmem:[%s747 + $0x274] sm:$0xf]
      %v3108 = vld [vmem:[%s747 + $0x278] sm:$0xf]
      %v3109 = vld [vmem:[%s747 + $0x27c] sm:$0xf]
      %v3110 = vld [vmem:[%s747 + $0x280] sm:$0xf]
      %v3111 = vld [vmem:[%s747 + $0x284] sm:$0xf]
      %v3112 = vld [vmem:[%s747 + $0x288] sm:$0xf]
      %v3113 = vld [vmem:[%s747 + $0x28c] sm:$0xf]
      %v3114 = vld [vmem:[%s747 + $0x290] sm:$0xf]
      %v3115 = vld [vmem:[%s747 + $0x294] sm:$0xf]
      %v3116 = vld [vmem:[%s747 + $0x298] sm:$0xf]
      %v3117 = vld [vmem:[%s747 + $0x29c] sm:$0xf]
      %v3118 = vld [vmem:[%s747 + $0x2a0] sm:$0xf]
      %v3119 = vld [vmem:[%s747 + $0x2a4] sm:$0xf]
      %v3120 = vld [vmem:[%s747 + $0x2a8] sm:$0xf]
      %v3121 = vld [vmem:[%s747 + $0x2ac] sm:$0xf]
      %v3122 = vld [vmem:[%s747 + $0x2b0] sm:$0xf]
      %v3123 = vld [vmem:[%s747 + $0x2b4] sm:$0xf]
      %v3124 = vld [vmem:[%s747 + $0x2b8] sm:$0xf]
      %v3125 = vld [vmem:[%s747 + $0x2bc] sm:$0xf]
      %v3126 = vld [vmem:[%s747 + $0x2c0] sm:$0xf]
      %v3127 = vld [vmem:[%s747 + $0x2c4] sm:$0xf]
      %v3128 = vld [vmem:[%s747 + $0x2c8] sm:$0xf]
      %v3129 = vld [vmem:[%s747 + $0x2cc] sm:$0xf]
      %v3130 = vld [vmem:[%s747 + $0x2d0] sm:$0xf]
      %v3131 = vld [vmem:[%s747 + $0x2d4] sm:$0xf]
      %v3132 = vld [vmem:[%s747 + $0x2d8] sm:$0xf]
      %v3133 = vld [vmem:[%s747 + $0x2dc] sm:$0xf]
      %v3134 = vld [vmem:[%s747 + $0x2e0] sm:$0xf]
      %v3135 = vld [vmem:[%s747 + $0x2e4] sm:$0xf]
      %v3136 = vld [vmem:[%s747 + $0x2e8] sm:$0xf]
      %v3137 = vld [vmem:[%s747 + $0x2ec] sm:$0xf]
      %v3138 = vld [vmem:[%s747 + $0x2f0] sm:$0xf]
      %v3139 = vld [vmem:[%s747 + $0x2f4] sm:$0xf]
      %v3140 = vld [vmem:[%s747 + $0x2f8] sm:$0xf]
      %v3141 = vld [vmem:[%s747 + $0x2fc] sm:$0xf]
      %v3142 = vld [vmem:[%s747 + $0x300] sm:$0xf]
      %v3143 = vld [vmem:[%s747 + $0x304] sm:$0xf]
      %v3144 = vld [vmem:[%s747 + $0x308] sm:$0xf]
      %v3145 = vld [vmem:[%s747 + $0x30c] sm:$0xf]
      %v3146 = vld [vmem:[%s747 + $0x310] sm:$0xf]
      %v3147 = vld [vmem:[%s747 + $0x314] sm:$0xf]
      %v3148 = vld [vmem:[%s747 + $0x318] sm:$0xf]
      %v3149 = vld [vmem:[%s747 + $0x31c] sm:$0xf]
      %v3150 = vld [vmem:[%s747 + $0x320] sm:$0xf]
      %v3151 = vld [vmem:[%s747 + $0x324] sm:$0xf]
      %v3152 = vld [vmem:[%s747 + $0x328] sm:$0xf]
      %v3153 = vld [vmem:[%s747 + $0x32c] sm:$0xf]
      %v3154 = vld [vmem:[%s747 + $0x330] sm:$0xf]
      %v3155 = vld [vmem:[%s747 + $0x334] sm:$0xf]
      %v3156 = vld [vmem:[%s747 + $0x338] sm:$0xf]
      %v3157 = vld [vmem:[%s747 + $0x33c] sm:$0xf]
      %v3158 = vld [vmem:[%s747 + $0x340] sm:$0xf]
      %v3159 = vld [vmem:[%s747 + $0x344] sm:$0xf]
      %v3160 = vld [vmem:[%s747 + $0x348] sm:$0xf]
      %v3161 = vld [vmem:[%s747 + $0x34c] sm:$0xf]
      %v3162 = vld [vmem:[%s747 + $0x350] sm:$0xf]
      %v3163 = vld [vmem:[%s747 + $0x354] sm:$0xf]
      %v3164 = vld [vmem:[%s747 + $0x358] sm:$0xf]
      %v3165 = vld [vmem:[%s747 + $0x35c] sm:$0xf]
      %v3166 = vld [vmem:[%s747 + $0x360] sm:$0xf]
      %v3167 = vld [vmem:[%s747 + $0x364] sm:$0xf]
      %v3168 = vld [vmem:[%s747 + $0x368] sm:$0xf]
      %v3169 = vld [vmem:[%s747 + $0x36c] sm:$0xf]
      %v3170 = vld [vmem:[%s747 + $0x370] sm:$0xf]
      %v3171 = vld [vmem:[%s747 + $0x374] sm:$0xf]
      %v3172 = vld [vmem:[%s747 + $0x378] sm:$0xf]
      %v3173 = vld [vmem:[%s747 + $0x37c] sm:$0xf]
      %v3174 = vld [vmem:[%s747 + $0x380] sm:$0xf]
      %v3175 = vld [vmem:[%s747 + $0x384] sm:$0xf]
      %v3176 = vld [vmem:[%s747 + $0x388] sm:$0xf]
      %v3177 = vld [vmem:[%s747 + $0x38c] sm:$0xf]
      %v3178 = vld [vmem:[%s747 + $0x390] sm:$0xf]
      %v3179 = vld [vmem:[%s747 + $0x394] sm:$0xf]
      %v3180 = vld [vmem:[%s747 + $0x398] sm:$0xf]
      %v3181 = vld [vmem:[%s747 + $0x39c] sm:$0xf]
      %v3182 = vld [vmem:[%s747 + $0x3a0] sm:$0xf]
      %v3183 = vld [vmem:[%s747 + $0x3a4] sm:$0xf]
      %v3184 = vld [vmem:[%s747 + $0x3a8] sm:$0xf]
      %v3185 = vld [vmem:[%s747 + $0x3ac] sm:$0xf]
      %v3186 = vld [vmem:[%s747 + $0x3b0] sm:$0xf]
      %v3187 = vld [vmem:[%s747 + $0x3b4] sm:$0xf]
      %v3188 = vld [vmem:[%s747 + $0x3b8] sm:$0xf]
      %v3189 = vld [vmem:[%s747 + $0x3bc] sm:$0xf]
      %v3190 = vld [vmem:[%s747 + $0x3c0] sm:$0xf]
      %v3191 = vld [vmem:[%s747 + $0x3c4] sm:$0xf]
      %v3192 = vld [vmem:[%s747 + $0x3c8] sm:$0xf]
      %v3193 = vld [vmem:[%s747 + $0x3cc] sm:$0xf]
      %v3194 = vld [vmem:[%s747 + $0x3d0] sm:$0xf]
      %v3195 = vld [vmem:[%s747 + $0x3d4] sm:$0xf]
      %v3196 = vld [vmem:[%s747 + $0x3d8] sm:$0xf]
      %v3197 = vld [vmem:[%s747 + $0x3dc] sm:$0xf]
      %v3198 = vld [vmem:[%s747 + $0x3e0] sm:$0xf]
      %v3199 = vld [vmem:[%s747 + $0x3e4] sm:$0xf]
      %v3200 = vld [vmem:[%s747 + $0x3e8] sm:$0xf]
      %v3201 = vld [vmem:[%s747 + $0x3ec] sm:$0xf]
      %v3202 = vld [vmem:[%s747 + $0x3f0] sm:$0xf]
      %v3203 = vld [vmem:[%s747 + $0x3f4] sm:$0xf]
      %v3204 = vld [vmem:[%s747 + $0x3f8] sm:$0xf]
      %v3205 = vld [vmem:[%s747 + $0x3fc] sm:$0xf]
      %v3206 = vld [vmem:[%s750] sm:$0x1]
      %v3208 = vlaneseq
      %v3209 = vshrl.u32 %v3208, 7
      %v3210 = vsub.s32 0, %v3209
      %v3211 = vrot.slane %v3206, %v3210
      %v3469 = vunpack.c.l.b16 %v2950
      %v3470 = vunpack.c.l.b16 %v2951
      %v3471 = vunpack.c.l.b16 %v2952
      %v3472 = vunpack.c.l.b16 %v2953
      %v3473 = vunpack.c.l.b16 %v2954
      %v3474 = vunpack.c.l.b16 %v2955
      %v3475 = vunpack.c.l.b16 %v2956
      %v3476 = vunpack.c.l.b16 %v2957
      %v3477 = vunpack.c.l.b16 %v2958
      %v3478 = vunpack.c.l.b16 %v2959
      %v3479 = vunpack.c.l.b16 %v2960
      %v3480 = vunpack.c.l.b16 %v2961
      %v3481 = vunpack.c.l.b16 %v2962
      %v3482 = vunpack.c.l.b16 %v2963
      %v3483 = vunpack.c.l.b16 %v2964
      %v3484 = vunpack.c.l.b16 %v2965
      %v3485 = vunpack.c.l.b16 %v2966
      %v3486 = vunpack.c.l.b16 %v2967
      %v3487 = vunpack.c.l.b16 %v2968
      %v3488 = vunpack.c.l.b16 %v2969
      %v3489 = vunpack.c.l.b16 %v2970
      %v3490 = vunpack.c.l.b16 %v2971
      %v3491 = vunpack.c.l.b16 %v2972
      %v3492 = vunpack.c.l.b16 %v2973
      %v3493 = vunpack.c.l.b16 %v2974
      %v3494 = vunpack.c.l.b16 %v2975
      %v3495 = vunpack.c.l.b16 %v2976
      %v3496 = vunpack.c.l.b16 %v2977
      %v3497 = vunpack.c.l.b16 %v2978
      %v3498 = vunpack.c.l.b16 %v2979
      %v3499 = vunpack.c.l.b16 %v2980
      %v3500 = vunpack.c.l.b16 %v2981
      %v3501 = vunpack.c.l.b16 %v2982
      %v3502 = vunpack.c.l.b16 %v2983
      %v3503 = vunpack.c.l.b16 %v2984
      %v3504 = vunpack.c.l.b16 %v2985
      %v3505 = vunpack.c.l.b16 %v2986
      %v3506 = vunpack.c.l.b16 %v2987
      %v3507 = vunpack.c.l.b16 %v2988
      %v3508 = vunpack.c.l.b16 %v2989
      %v3509 = vunpack.c.l.b16 %v2990
      %v3510 = vunpack.c.l.b16 %v2991
      %v3511 = vunpack.c.l.b16 %v2992
      %v3512 = vunpack.c.l.b16 %v2993
      %v3513 = vunpack.c.l.b16 %v2994
      %v3514 = vunpack.c.l.b16 %v2995
      %v3515 = vunpack.c.l.b16 %v2996
      %v3516 = vunpack.c.l.b16 %v2997
      %v3517 = vunpack.c.l.b16 %v2998
      %v3518 = vunpack.c.l.b16 %v2999
      %v3519 = vunpack.c.l.b16 %v3000
      %v3520 = vunpack.c.l.b16 %v3001
      %v3521 = vunpack.c.l.b16 %v3002
      %v3522 = vunpack.c.l.b16 %v3003
      %v3523 = vunpack.c.l.b16 %v3004
      %v3524 = vunpack.c.l.b16 %v3005
      %v3525 = vunpack.c.l.b16 %v3006
      %v3526 = vunpack.c.l.b16 %v3007
      %v3527 = vunpack.c.l.b16 %v3008
      %v3528 = vunpack.c.l.b16 %v3009
      %v3529 = vunpack.c.l.b16 %v3010
      %v3530 = vunpack.c.l.b16 %v3011
      %v3531 = vunpack.c.l.b16 %v3012
      %v3532 = vunpack.c.l.b16 %v3013
      %v3533 = vunpack.c.l.b16 %v3014
      %v3534 = vunpack.c.l.b16 %v3015
      %v3535 = vunpack.c.l.b16 %v3016
      %v3536 = vunpack.c.l.b16 %v3017
      %v3537 = vunpack.c.l.b16 %v3018
      %v3538 = vunpack.c.l.b16 %v3019
      %v3539 = vunpack.c.l.b16 %v3020
      %v3540 = vunpack.c.l.b16 %v3021
      %v3541 = vunpack.c.l.b16 %v3022
      %v3542 = vunpack.c.l.b16 %v3023
      %v3543 = vunpack.c.l.b16 %v3024
      %v3544 = vunpack.c.l.b16 %v3025
      %v3545 = vunpack.c.l.b16 %v3026
      %v3546 = vunpack.c.l.b16 %v3027
      %v3547 = vunpack.c.l.b16 %v3028
      %v3548 = vunpack.c.l.b16 %v3029
      %v3549 = vunpack.c.l.b16 %v3030
      %v3550 = vunpack.c.l.b16 %v3031
      %v3551 = vunpack.c.l.b16 %v3032
      %v3552 = vunpack.c.l.b16 %v3033
      %v3553 = vunpack.c.l.b16 %v3034
      %v3554 = vunpack.c.l.b16 %v3035
      %v3555 = vunpack.c.l.b16 %v3036
      %v3556 = vunpack.c.l.b16 %v3037
      %v3557 = vunpack.c.l.b16 %v3038
      %v3558 = vunpack.c.l.b16 %v3039
      %v3559 = vunpack.c.l.b16 %v3040
      %v3560 = vunpack.c.l.b16 %v3041
      %v3561 = vunpack.c.l.b16 %v3042
      %v3562 = vunpack.c.l.b16 %v3043
      %v3563 = vunpack.c.l.b16 %v3044
      %v3564 = vunpack.c.l.b16 %v3045
      %v3565 = vunpack.c.l.b16 %v3046
      %v3566 = vunpack.c.l.b16 %v3047
      %v3567 = vunpack.c.l.b16 %v3048
      %v3568 = vunpack.c.l.b16 %v3049
      %v3569 = vunpack.c.l.b16 %v3050
      %v3570 = vunpack.c.l.b16 %v3051
      %v3571 = vunpack.c.l.b16 %v3052
      %v3572 = vunpack.c.l.b16 %v3053
      %v3573 = vunpack.c.l.b16 %v3054
      %v3574 = vunpack.c.l.b16 %v3055
      %v3575 = vunpack.c.l.b16 %v3056
      %v3576 = vunpack.c.l.b16 %v3057
      %v3577 = vunpack.c.l.b16 %v3058
      %v3578 = vunpack.c.l.b16 %v3059
      %v3579 = vunpack.c.l.b16 %v3060
      %v3580 = vunpack.c.l.b16 %v3061
      %v3581 = vunpack.c.l.b16 %v3062
      %v3582 = vunpack.c.l.b16 %v3063
      %v3583 = vunpack.c.l.b16 %v3064
      %v3584 = vunpack.c.l.b16 %v3065
      %v3585 = vunpack.c.l.b16 %v3066
      %v3586 = vunpack.c.l.b16 %v3067
      %v3587 = vunpack.c.l.b16 %v3068
      %v3588 = vunpack.c.l.b16 %v3069
      %v3589 = vunpack.c.l.b16 %v3070
      %v3590 = vunpack.c.l.b16 %v3071
      %v3591 = vunpack.c.l.b16 %v3072
      %v3592 = vunpack.c.l.b16 %v3073
      %v3593 = vunpack.c.l.b16 %v3074
      %v3594 = vunpack.c.l.b16 %v3075
      %v3595 = vunpack.c.l.b16 %v3076
      %v3596 = vunpack.c.l.b16 %v3077
      %v3597 = vunpack.c.l.b16 %v3078
      %v3598 = vunpack.c.l.b16 %v3079
      %v3599 = vunpack.c.l.b16 %v3080
      %v3600 = vunpack.c.l.b16 %v3081
      %v3601 = vunpack.c.l.b16 %v3082
      %v3602 = vunpack.c.l.b16 %v3083
      %v3603 = vunpack.c.l.b16 %v3084
      %v3604 = vunpack.c.l.b16 %v3085
      %v3605 = vunpack.c.l.b16 %v3086
      %v3606 = vunpack.c.l.b16 %v3087
      %v3607 = vunpack.c.l.b16 %v3088
      %v3608 = vunpack.c.l.b16 %v3089
      %v3609 = vunpack.c.l.b16 %v3090
      %v3610 = vunpack.c.l.b16 %v3091
      %v3611 = vunpack.c.l.b16 %v3092
      %v3612 = vunpack.c.l.b16 %v3093
      %v3613 = vunpack.c.l.b16 %v3094
      %v3614 = vunpack.c.l.b16 %v3095
      %v3615 = vunpack.c.l.b16 %v3096
      %v3616 = vunpack.c.l.b16 %v3097
      %v3617 = vunpack.c.l.b16 %v3098
      %v3618 = vunpack.c.l.b16 %v3099
      %v3619 = vunpack.c.l.b16 %v3100
      %v3620 = vunpack.c.l.b16 %v3101
      %v3621 = vunpack.c.l.b16 %v3102
      %v3622 = vunpack.c.l.b16 %v3103
      %v3623 = vunpack.c.l.b16 %v3104
      %v3624 = vunpack.c.l.b16 %v3105
      %v3625 = vunpack.c.l.b16 %v3106
      %v3626 = vunpack.c.l.b16 %v3107
      %v3627 = vunpack.c.l.b16 %v3108
      %v3628 = vunpack.c.l.b16 %v3109
      %v3629 = vunpack.c.l.b16 %v3110
      %v3630 = vunpack.c.l.b16 %v3111
      %v3631 = vunpack.c.l.b16 %v3112
      %v3632 = vunpack.c.l.b16 %v3113
      %v3633 = vunpack.c.l.b16 %v3114
      %v3634 = vunpack.c.l.b16 %v3115
      %v3635 = vunpack.c.l.b16 %v3116
      %v3636 = vunpack.c.l.b16 %v3117
      %v3637 = vunpack.c.l.b16 %v3118
      %v3638 = vunpack.c.l.b16 %v3119
      %v3639 = vunpack.c.l.b16 %v3120
      %v3640 = vunpack.c.l.b16 %v3121
      %v3641 = vunpack.c.l.b16 %v3122
      %v3642 = vunpack.c.l.b16 %v3123
      %v3643 = vunpack.c.l.b16 %v3124
      %v3644 = vunpack.c.l.b16 %v3125
      %v3645 = vunpack.c.l.b16 %v3126
      %v3646 = vunpack.c.l.b16 %v3127
      %v3647 = vunpack.c.l.b16 %v3128
      %v3648 = vunpack.c.l.b16 %v3129
      %v3649 = vunpack.c.l.b16 %v3130
      %v3650 = vunpack.c.l.b16 %v3131
      %v3651 = vunpack.c.l.b16 %v3132
      %v3652 = vunpack.c.l.b16 %v3133
      %v3653 = vunpack.c.l.b16 %v3134
      %v3654 = vunpack.c.l.b16 %v3135
      %v3655 = vunpack.c.l.b16 %v3136
      %v3656 = vunpack.c.l.b16 %v3137
      %v3657 = vunpack.c.l.b16 %v3138
      %v3658 = vunpack.c.l.b16 %v3139
      %v3659 = vunpack.c.l.b16 %v3140
      %v3660 = vunpack.c.l.b16 %v3141
      %v3661 = vunpack.c.l.b16 %v3142
      %v3662 = vunpack.c.l.b16 %v3143
      %v3663 = vunpack.c.l.b16 %v3144
      %v3664 = vunpack.c.l.b16 %v3145
      %v3665 = vunpack.c.l.b16 %v3146
      %v3666 = vunpack.c.l.b16 %v3147
      %v3667 = vunpack.c.l.b16 %v3148
      %v3668 = vunpack.c.l.b16 %v3149
      %v3669 = vunpack.c.l.b16 %v3150
      %v3670 = vunpack.c.l.b16 %v3151
      %v3671 = vunpack.c.l.b16 %v3152
      %v3672 = vunpack.c.l.b16 %v3153
      %v3673 = vunpack.c.l.b16 %v3154
      %v3674 = vunpack.c.l.b16 %v3155
      %v3675 = vunpack.c.l.b16 %v3156
      %v3676 = vunpack.c.l.b16 %v3157
      %v3677 = vunpack.c.l.b16 %v3158
      %v3678 = vunpack.c.l.b16 %v3159
      %v3679 = vunpack.c.l.b16 %v3160
      %v3680 = vunpack.c.l.b16 %v3161
      %v3681 = vunpack.c.l.b16 %v3162
      %v3682 = vunpack.c.l.b16 %v3163
      %v3683 = vunpack.c.l.b16 %v3164
      %v3684 = vunpack.c.l.b16 %v3165
      %v3685 = vunpack.c.l.b16 %v3166
      %v3686 = vunpack.c.l.b16 %v3167
      %v3687 = vunpack.c.l.b16 %v3168
      %v3688 = vunpack.c.l.b16 %v3169
      %v3689 = vunpack.c.l.b16 %v3170
      %v3690 = vunpack.c.l.b16 %v3171
      %v3691 = vunpack.c.l.b16 %v3172
      %v3692 = vunpack.c.l.b16 %v3173
      %v3693 = vunpack.c.l.b16 %v3174
      %v3694 = vunpack.c.l.b16 %v3175
      %v3695 = vunpack.c.l.b16 %v3176
      %v3696 = vunpack.c.l.b16 %v3177
      %v3697 = vunpack.c.l.b16 %v3178
      %v3698 = vunpack.c.l.b16 %v3179
      %v3699 = vunpack.c.l.b16 %v3180
      %v3700 = vunpack.c.l.b16 %v3181
      %v3701 = vunpack.c.l.b16 %v3182
      %v3702 = vunpack.c.l.b16 %v3183
      %v3703 = vunpack.c.l.b16 %v3184
      %v3704 = vunpack.c.l.b16 %v3185
      %v3705 = vunpack.c.l.b16 %v3186
      %v3706 = vunpack.c.l.b16 %v3187
      %v3707 = vunpack.c.l.b16 %v3188
      %v3708 = vunpack.c.l.b16 %v3189
      %v3709 = vunpack.c.l.b16 %v3190
      %v3710 = vunpack.c.l.b16 %v3191
      %v3711 = vunpack.c.l.b16 %v3192
      %v3712 = vunpack.c.l.b16 %v3193
      %v3713 = vunpack.c.l.b16 %v3194
      %v3714 = vunpack.c.l.b16 %v3195
      %v3715 = vunpack.c.l.b16 %v3196
      %v3716 = vunpack.c.l.b16 %v3197
      %v3717 = vunpack.c.l.b16 %v3198
      %v3718 = vunpack.c.l.b16 %v3199
      %v3719 = vunpack.c.l.b16 %v3200
      %v3720 = vunpack.c.l.b16 %v3201
      %v3721 = vunpack.c.l.b16 %v3202
      %v3722 = vunpack.c.l.b16 %v3203
      %v3723 = vunpack.c.l.b16 %v3204
      %v3724 = vunpack.c.l.b16 %v3205
      %v3725 = vpack.c.b16 %v3470, %v3469
      %v3726 = vpack.c.b16 %v3472, %v3471
      %v3727 = vpack.c.b16 %v3474, %v3473
      %v3728 = vpack.c.b16 %v3476, %v3475
      %v3729 = vpack.c.b16 %v3478, %v3477
      %v3730 = vpack.c.b16 %v3480, %v3479
      %v3731 = vpack.c.b16 %v3482, %v3481
      %v3732 = vpack.c.b16 %v3484, %v3483
      %v3733 = vpack.c.b16 %v3486, %v3485
      %v3734 = vpack.c.b16 %v3488, %v3487
      %v3735 = vpack.c.b16 %v3490, %v3489
      %v3736 = vpack.c.b16 %v3492, %v3491
      %v3737 = vpack.c.b16 %v3494, %v3493
      %v3738 = vpack.c.b16 %v3496, %v3495
      %v3739 = vpack.c.b16 %v3498, %v3497
      %v3740 = vpack.c.b16 %v3500, %v3499
      %v3741 = vpack.c.b16 %v3502, %v3501
      %v3742 = vpack.c.b16 %v3504, %v3503
      %v3743 = vpack.c.b16 %v3506, %v3505
      %v3744 = vpack.c.b16 %v3508, %v3507
      %v3745 = vpack.c.b16 %v3510, %v3509
      %v3746 = vpack.c.b16 %v3512, %v3511
      %v3747 = vpack.c.b16 %v3514, %v3513
      %v3748 = vpack.c.b16 %v3516, %v3515
      %v3749 = vpack.c.b16 %v3518, %v3517
      %v3750 = vpack.c.b16 %v3520, %v3519
      %v3751 = vpack.c.b16 %v3522, %v3521
      %v3752 = vpack.c.b16 %v3524, %v3523
      %v3753 = vpack.c.b16 %v3526, %v3525
      %v3754 = vpack.c.b16 %v3528, %v3527
      %v3755 = vpack.c.b16 %v3530, %v3529
      %v3756 = vpack.c.b16 %v3532, %v3531
      %v3757 = vpack.c.b16 %v3534, %v3533
      %v3758 = vpack.c.b16 %v3536, %v3535
      %v3759 = vpack.c.b16 %v3538, %v3537
      %v3760 = vpack.c.b16 %v3540, %v3539
      %v3761 = vpack.c.b16 %v3542, %v3541
      %v3762 = vpack.c.b16 %v3544, %v3543
      %v3763 = vpack.c.b16 %v3546, %v3545
      %v3764 = vpack.c.b16 %v3548, %v3547
      %v3765 = vpack.c.b16 %v3550, %v3549
      %v3766 = vpack.c.b16 %v3552, %v3551
      %v3767 = vpack.c.b16 %v3554, %v3553
      %v3768 = vpack.c.b16 %v3556, %v3555
      %v3769 = vpack.c.b16 %v3558, %v3557
      %v3770 = vpack.c.b16 %v3560, %v3559
      %v3771 = vpack.c.b16 %v3562, %v3561
      %v3772 = vpack.c.b16 %v3564, %v3563
      %v3773 = vpack.c.b16 %v3566, %v3565
      %v3774 = vpack.c.b16 %v3568, %v3567
      %v3775 = vpack.c.b16 %v3570, %v3569
      %v3776 = vpack.c.b16 %v3572, %v3571
      %v3777 = vpack.c.b16 %v3574, %v3573
      %v3778 = vpack.c.b16 %v3576, %v3575
      %v3779 = vpack.c.b16 %v3578, %v3577
      %v3780 = vpack.c.b16 %v3580, %v3579
      %v3781 = vpack.c.b16 %v3582, %v3581
      %v3782 = vpack.c.b16 %v3584, %v3583
      %v3783 = vpack.c.b16 %v3586, %v3585
      %v3784 = vpack.c.b16 %v3588, %v3587
      %v3785 = vpack.c.b16 %v3590, %v3589
      %v3786 = vpack.c.b16 %v3592, %v3591
      %v3787 = vpack.c.b16 %v3594, %v3593
      %v3788 = vpack.c.b16 %v3596, %v3595
      %v3789 = vpack.c.b16 %v3598, %v3597
      %v3790 = vpack.c.b16 %v3600, %v3599
      %v3791 = vpack.c.b16 %v3602, %v3601
      %v3792 = vpack.c.b16 %v3604, %v3603
      %v3793 = vpack.c.b16 %v3606, %v3605
      %v3794 = vpack.c.b16 %v3608, %v3607
      %v3795 = vpack.c.b16 %v3610, %v3609
      %v3796 = vpack.c.b16 %v3612, %v3611
      %v3797 = vpack.c.b16 %v3614, %v3613
      %v3798 = vpack.c.b16 %v3616, %v3615
      %v3799 = vpack.c.b16 %v3618, %v3617
      %v3800 = vpack.c.b16 %v3620, %v3619
      %v3801 = vpack.c.b16 %v3622, %v3621
      %v3802 = vpack.c.b16 %v3624, %v3623
      %v3803 = vpack.c.b16 %v3626, %v3625
      %v3804 = vpack.c.b16 %v3628, %v3627
      %v3805 = vpack.c.b16 %v3630, %v3629
      %v3806 = vpack.c.b16 %v3632, %v3631
      %v3807 = vpack.c.b16 %v3634, %v3633
      %v3808 = vpack.c.b16 %v3636, %v3635
      %v3809 = vpack.c.b16 %v3638, %v3637
      %v3810 = vpack.c.b16 %v3640, %v3639
      %v3811 = vpack.c.b16 %v3642, %v3641
      %v3812 = vpack.c.b16 %v3644, %v3643
      %v3813 = vpack.c.b16 %v3646, %v3645
      %v3814 = vpack.c.b16 %v3648, %v3647
      %v3815 = vpack.c.b16 %v3650, %v3649
      %v3816 = vpack.c.b16 %v3652, %v3651
      %v3817 = vpack.c.b16 %v3654, %v3653
      %v3818 = vpack.c.b16 %v3656, %v3655
      %v3819 = vpack.c.b16 %v3658, %v3657
      %v3820 = vpack.c.b16 %v3660, %v3659
      %v3821 = vpack.c.b16 %v3662, %v3661
      %v3822 = vpack.c.b16 %v3664, %v3663
      %v3823 = vpack.c.b16 %v3666, %v3665
      %v3824 = vpack.c.b16 %v3668, %v3667
      %v3825 = vpack.c.b16 %v3670, %v3669
      %v3826 = vpack.c.b16 %v3672, %v3671
      %v3827 = vpack.c.b16 %v3674, %v3673
      %v3828 = vpack.c.b16 %v3676, %v3675
      %v3829 = vpack.c.b16 %v3678, %v3677
      %v3830 = vpack.c.b16 %v3680, %v3679
      %v3831 = vpack.c.b16 %v3682, %v3681
      %v3832 = vpack.c.b16 %v3684, %v3683
      %v3833 = vpack.c.b16 %v3686, %v3685
      %v3834 = vpack.c.b16 %v3688, %v3687
      %v3835 = vpack.c.b16 %v3690, %v3689
      %v3836 = vpack.c.b16 %v3692, %v3691
      %v3837 = vpack.c.b16 %v3694, %v3693
      %v3838 = vpack.c.b16 %v3696, %v3695
      %v3839 = vpack.c.b16 %v3698, %v3697
      %v3840 = vpack.c.b16 %v3700, %v3699
      %v3841 = vpack.c.b16 %v3702, %v3701
      %v3842 = vpack.c.b16 %v3704, %v3703
      %v3843 = vpack.c.b16 %v3706, %v3705
      %v3844 = vpack.c.b16 %v3708, %v3707
      %v3845 = vpack.c.b16 %v3710, %v3709
      %v3846 = vpack.c.b16 %v3712, %v3711
      %v3847 = vpack.c.b16 %v3714, %v3713
      %v3848 = vpack.c.b16 %v3716, %v3715
      %v3849 = vpack.c.b16 %v3718, %v3717
      %v3850 = vpack.c.b16 %v3720, %v3719
      %v3851 = vpack.c.b16 %v3722, %v3721
      %v3852 = vpack.c.b16 %v3724, %v3723
      %3981 = vmatprep.subr.bf16.mxu0 0
      %3982 = vmatpush1.bf16.msra.mxu0 %v3725
      %3983 = vmatprep.subr.bf16.mxu0 0
      %3984 = vmatpush1.bf16.msra.mxu0 %v3726
      %3985 = vmatprep.subr.bf16.mxu0 0
      %3986 = vmatpush1.bf16.msra.mxu0 %v3727
      %3987 = vmatprep.subr.bf16.mxu0 0
      %3988 = vmatpush1.bf16.msra.mxu0 %v3728
      %3989 = vmatprep.subr.bf16.mxu0 0
      %3990 = vmatpush1.bf16.msra.mxu0 %v3729
      %3991 = vmatprep.subr.bf16.mxu0 0
      %3992 = vmatpush1.bf16.msra.mxu0 %v3730
      %3993 = vmatprep.subr.bf16.mxu0 0
      %3994 = vmatpush1.bf16.msra.mxu0 %v3731
      %3995 = vmatprep.subr.bf16.mxu0 0
      %3996 = vmatpush1.bf16.msra.mxu0 %v3732
      %3997 = vmatprep.subr.bf16.mxu0 0
      %3998 = vmatpush1.bf16.msra.mxu0 %v3733
      %3999 = vmatprep.subr.bf16.mxu0 0
      %4000 = vmatpush1.bf16.msra.mxu0 %v3734
      %4001 = vmatprep.subr.bf16.mxu0 0
      %4002 = vmatpush1.bf16.msra.mxu0 %v3735
      %4003 = vmatprep.subr.bf16.mxu0 0
      %4004 = vmatpush1.bf16.msra.mxu0 %v3736
      %4005 = vmatprep.subr.bf16.mxu0 0
      %4006 = vmatpush1.bf16.msra.mxu0 %v3737
      %4007 = vmatprep.subr.bf16.mxu0 0
      %4008 = vmatpush1.bf16.msra.mxu0 %v3738
      %4009 = vmatprep.subr.bf16.mxu0 0
      %4010 = vmatpush1.bf16.msra.mxu0 %v3739
      %4011 = vmatprep.subr.bf16.mxu0 0
      %4012 = vmatpush1.bf16.msra.mxu0 %v3740
      %4013 = vmatprep.mubr.bf16.mxu0 %v2935
      %4014 = vmatmul.mubr.bf16.gmra.mrb[0].mxu0 %v2934
      %v4015 = vpop.f32.mrb[0].mxu0
      %v4016 = vadd.f32 %v3211, %v4015
      %v4017 = vpop.f32.mrb[0].mxu0
      %v4018 = vpop.f32.mrb[0].mxu0
      %v4019 = vpop.f32.mrb[0].mxu0
      %4020 = vdwg.mxu0
      %4021 = vmatprep.subr.bf16.mxu0 0
      %4022 = vmatpush1.bf16.msra.mxu0 %v3741
      %4023 = vmatprep.subr.bf16.mxu0 0
      %4024 = vmatpush1.bf16.msra.mxu0 %v3742
      %4025 = vmatprep.subr.bf16.mxu0 0
      %4026 = vmatpush1.bf16.msra.mxu0 %v3743
      %4027 = vmatprep.subr.bf16.mxu0 0
      %4028 = vmatpush1.bf16.msra.mxu0 %v3744
      %4029 = vmatprep.subr.bf16.mxu0 0
      %4030 = vmatpush1.bf16.msra.mxu0 %v3745
      %4031 = vmatprep.subr.bf16.mxu0 0
      %4032 = vmatpush1.bf16.msra.mxu0 %v3746
      %4033 = vmatprep.subr.bf16.mxu0 0
      %4034 = vmatpush1.bf16.msra.mxu0 %v3747
      %4035 = vmatprep.subr.bf16.mxu0 0
      %4036 = vmatpush1.bf16.msra.mxu0 %v3748
      %4037 = vmatprep.subr.bf16.mxu0 0
      %4038 = vmatpush1.bf16.msra.mxu0 %v3749
      %4039 = vmatprep.subr.bf16.mxu0 0
      %4040 = vmatpush1.bf16.msra.mxu0 %v3750
      %4041 = vmatprep.subr.bf16.mxu0 0
      %4042 = vmatpush1.bf16.msra.mxu0 %v3751
      %4043 = vmatprep.subr.bf16.mxu0 0
      %4044 = vmatpush1.bf16.msra.mxu0 %v3752
      %4045 = vmatprep.subr.bf16.mxu0 0
      %4046 = vmatpush1.bf16.msra.mxu0 %v3753
      %4047 = vmatprep.subr.bf16.mxu0 0
      %4048 = vmatpush1.bf16.msra.mxu0 %v3754
      %4049 = vmatprep.subr.bf16.mxu0 0
      %4050 = vmatpush1.bf16.msra.mxu0 %v3755
      %4051 = vmatprep.subr.bf16.mxu0 0
      %4052 = vmatpush1.bf16.msra.mxu0 %v3756
      %4053 = vmatprep.mubr.bf16.mxu0 %v2937
      %4054 = vmatmul.mubr.bf16.gmra.mrb[0].mxu0 %v2936
      %v4055 = vpop.f32.mrb[0].mxu0
      %v4056 = vadd.f32 %v4016, %v4055
      %v4057 = vpop.f32.mrb[0].mxu0
      %v4058 = vpop.f32.mrb[0].mxu0
      %v4059 = vpop.f32.mrb[0].mxu0
      %4060 = vdwg.mxu0
      %4061 = vmatprep.subr.bf16.mxu0 0
      %4062 = vmatpush1.bf16.msra.mxu0 %v3757
      %4063 = vmatprep.subr.bf16.mxu0 0
      %4064 = vmatpush1.bf16.msra.mxu0 %v3758
      %4065 = vmatprep.subr.bf16.mxu0 0
      %4066 = vmatpush1.bf16.msra.mxu0 %v3759
      %4067 = vmatprep.subr.bf16.mxu0 0
      %4068 = vmatpush1.bf16.msra.mxu0 %v3760
      %4069 = vmatprep.subr.bf16.mxu0 0
      %4070 = vmatpush1.bf16.msra.mxu0 %v3761
      %4071 = vmatprep.subr.bf16.mxu0 0
      %4072 = vmatpush1.bf16.msra.mxu0 %v3762
      %4073 = vmatprep.subr.bf16.mxu0 0
      %4074 = vmatpush1.bf16.msra.mxu0 %v3763
      %4075 = vmatprep.subr.bf16.mxu0 0
      %4076 = vmatpush1.bf16.msra.mxu0 %v3764
      %4077 = vmatprep.subr.bf16.mxu0 0
      %4078 = vmatpush1.bf16.msra.mxu0 %v3765
      %4079 = vmatprep.subr.bf16.mxu0 0
      %4080 = vmatpush1.bf16.msra.mxu0 %v3766
      %4081 = vmatprep.subr.bf16.mxu0 0
      %4082 = vmatpush1.bf16.msra.mxu0 %v3767
      %4083 = vmatprep.subr.bf16.mxu0 0
      %4084 = vmatpush1.bf16.msra.mxu0 %v3768
      %4085 = vmatprep.subr.bf16.mxu0 0
      %4086 = vmatpush1.bf16.msra.mxu0 %v3769
      %4087 = vmatprep.subr.bf16.mxu0 0
      %4088 = vmatpush1.bf16.msra.mxu0 %v3770
      %4089 = vmatprep.subr.bf16.mxu0 0
      %4090 = vmatpush1.bf16.msra.mxu0 %v3771
      %4091 = vmatprep.subr.bf16.mxu0 0
      %4092 = vmatpush1.bf16.msra.mxu0 %v3772
      %4093 = vmatprep.mubr.bf16.mxu0 %v2939
      %4094 = vmatmul.mubr.bf16.gmra.mrb[0].mxu0 %v2938
      %v4095 = vpop.f32.mrb[0].mxu0
      %v4096 = vadd.f32 %v4056, %v4095
      %v4097 = vpop.f32.mrb[0].mxu0
      %v4098 = vpop.f32.mrb[0].mxu0
      %v4099 = vpop.f32.mrb[0].mxu0
      %4100 = vdwg.mxu0
      %4101 = vmatprep.subr.bf16.mxu0 0
      %4102 = vmatpush1.bf16.msra.mxu0 %v3773
      %4103 = vmatprep.subr.bf16.mxu0 0
      %4104 = vmatpush1.bf16.msra.mxu0 %v3774
      %4105 = vmatprep.subr.bf16.mxu0 0
      %4106 = vmatpush1.bf16.msra.mxu0 %v3775
      %4107 = vmatprep.subr.bf16.mxu0 0
      %4108 = vmatpush1.bf16.msra.mxu0 %v3776
      %4109 = vmatprep.subr.bf16.mxu0 0
      %4110 = vmatpush1.bf16.msra.mxu0 %v3777
      %4111 = vmatprep.subr.bf16.mxu0 0
      %4112 = vmatpush1.bf16.msra.mxu0 %v3778
      %4113 = vmatprep.subr.bf16.mxu0 0
      %4114 = vmatpush1.bf16.msra.mxu0 %v3779
      %4115 = vmatprep.subr.bf16.mxu0 0
      %4116 = vmatpush1.bf16.msra.mxu0 %v3780
      %4117 = vmatprep.subr.bf16.mxu0 0
      %4118 = vmatpush1.bf16.msra.mxu0 %v3781
      %4119 = vmatprep.subr.bf16.mxu0 0
      %4120 = vmatpush1.bf16.msra.mxu0 %v3782
      %4121 = vmatprep.subr.bf16.mxu0 0
      %4122 = vmatpush1.bf16.msra.mxu0 %v3783
      %4123 = vmatprep.subr.bf16.mxu0 0
      %4124 = vmatpush1.bf16.msra.mxu0 %v3784
      %4125 = vmatprep.subr.bf16.mxu0 0
      %4126 = vmatpush1.bf16.msra.mxu0 %v3785
      %4127 = vmatprep.subr.bf16.mxu0 0
      %4128 = vmatpush1.bf16.msra.mxu0 %v3786
      %4129 = vmatprep.subr.bf16.mxu0 0
      %4130 = vmatpush1.bf16.msra.mxu0 %v3787
      %4131 = vmatprep.subr.bf16.mxu0 0
      %4132 = vmatpush1.bf16.msra.mxu0 %v3788
      %4133 = vmatprep.mubr.bf16.mxu0 %v2941
      %4134 = vmatmul.mubr.bf16.gmra.mrb[0].mxu0 %v2940
      %v4135 = vpop.f32.mrb[0].mxu0
      %v4136 = vadd.f32 %v4096, %v4135
      %v4137 = vpop.f32.mrb[0].mxu0
      %v4138 = vpop.f32.mrb[0].mxu0
      %v4139 = vpop.f32.mrb[0].mxu0
      %4140 = vdwg.mxu0
      %4141 = vmatprep.subr.bf16.mxu0 0
      %4142 = vmatpush1.bf16.msra.mxu0 %v3789
      %4143 = vmatprep.subr.bf16.mxu0 0
      %4144 = vmatpush1.bf16.msra.mxu0 %v3790
      %4145 = vmatprep.subr.bf16.mxu0 0
      %4146 = vmatpush1.bf16.msra.mxu0 %v3791
      %4147 = vmatprep.subr.bf16.mxu0 0
      %4148 = vmatpush1.bf16.msra.mxu0 %v3792
      %4149 = vmatprep.subr.bf16.mxu0 0
      %4150 = vmatpush1.bf16.msra.mxu0 %v3793
      %4151 = vmatprep.subr.bf16.mxu0 0
      %4152 = vmatpush1.bf16.msra.mxu0 %v3794
      %4153 = vmatprep.subr.bf16.mxu0 0
      %4154 = vmatpush1.bf16.msra.mxu0 %v3795
      %4155 = vmatprep.subr.bf16.mxu0 0
      %4156 = vmatpush1.bf16.msra.mxu0 %v3796
      %4157 = vmatprep.subr.bf16.mxu0 0
      %4158 = vmatpush1.bf16.msra.mxu0 %v3797
      %4159 = vmatprep.subr.bf16.mxu0 0
      %4160 = vmatpush1.bf16.msra.mxu0 %v3798
      %4161 = vmatprep.subr.bf16.mxu0 0
      %4162 = vmatpush1.bf16.msra.mxu0 %v3799
      %4163 = vmatprep.subr.bf16.mxu0 0
      %4164 = vmatpush1.bf16.msra.mxu0 %v3800
      %4165 = vmatprep.subr.bf16.mxu0 0
      %4166 = vmatpush1.bf16.msra.mxu0 %v3801
      %4167 = vmatprep.subr.bf16.mxu0 0
      %4168 = vmatpush1.bf16.msra.mxu0 %v3802
      %4169 = vmatprep.subr.bf16.mxu0 0
      %4170 = vmatpush1.bf16.msra.mxu0 %v3803
      %4171 = vmatprep.subr.bf16.mxu0 0
      %4172 = vmatpush1.bf16.msra.mxu0 %v3804
      %4173 = vmatprep.mubr.bf16.mxu0 %v2943
      %4174 = vmatmul.mubr.bf16.gmra.mrb[0].mxu0 %v2942
      %v4175 = vpop.f32.mrb[0].mxu0
      %v4176 = vadd.f32 %v4136, %v4175
      %v4177 = vpop.f32.mrb[0].mxu0
      %v4178 = vpop.f32.mrb[0].mxu0
      %v4179 = vpop.f32.mrb[0].mxu0
      %4180 = vdwg.mxu0
      %4181 = vmatprep.subr.bf16.mxu0 0
      %4182 = vmatpush1.bf16.msra.mxu0 %v3805
      %4183 = vmatprep.subr.bf16.mxu0 0
      %4184 = vmatpush1.bf16.msra.mxu0 %v3806
      %4185 = vmatprep.subr.bf16.mxu0 0
      %4186 = vmatpush1.bf16.msra.mxu0 %v3807
      %4187 = vmatprep.subr.bf16.mxu0 0
      %4188 = vmatpush1.bf16.msra.mxu0 %v3808
      %4189 = vmatprep.subr.bf16.mxu0 0
      %4190 = vmatpush1.bf16.msra.mxu0 %v3809
      %4191 = vmatprep.subr.bf16.mxu0 0
      %4192 = vmatpush1.bf16.msra.mxu0 %v3810
      %4193 = vmatprep.subr.bf16.mxu0 0
      %4194 = vmatpush1.bf16.msra.mxu0 %v3811
      %4195 = vmatprep.subr.bf16.mxu0 0
      %4196 = vmatpush1.bf16.msra.mxu0 %v3812
      %4197 = vmatprep.subr.bf16.mxu0 0
      %4198 = vmatpush1.bf16.msra.mxu0 %v3813
      %4199 = vmatprep.subr.bf16.mxu0 0
      %4200 = vmatpush1.bf16.msra.mxu0 %v3814
      %4201 = vmatprep.subr.bf16.mxu0 0
      %4202 = vmatpush1.bf16.msra.mxu0 %v3815
      %4203 = vmatprep.subr.bf16.mxu0 0
      %4204 = vmatpush1.bf16.msra.mxu0 %v3816
      %4205 = vmatprep.subr.bf16.mxu0 0
      %4206 = vmatpush1.bf16.msra.mxu0 %v3817
      %4207 = vmatprep.subr.bf16.mxu0 0
      %4208 = vmatpush1.bf16.msra.mxu0 %v3818
      %4209 = vmatprep.subr.bf16.mxu0 0
      %4210 = vmatpush1.bf16.msra.mxu0 %v3819
      %4211 = vmatprep.subr.bf16.mxu0 0
      %4212 = vmatpush1.bf16.msra.mxu0 %v3820
      %4213 = vmatprep.mubr.bf16.mxu0 %v2945
      %4214 = vmatmul.mubr.bf16.gmra.mrb[0].mxu0 %v2944
      %v4215 = vpop.f32.mrb[0].mxu0
      %v4216 = vadd.f32 %v4176, %v4215
      %v4217 = vpop.f32.mrb[0].mxu0
      %v4218 = vpop.f32.mrb[0].mxu0
      %v4219 = vpop.f32.mrb[0].mxu0
      %4220 = vdwg.mxu0
      %4221 = vmatprep.subr.bf16.mxu0 0
      %4222 = vmatpush1.bf16.msra.mxu0 %v3821
      %4223 = vmatprep.subr.bf16.mxu0 0
      %4224 = vmatpush1.bf16.msra.mxu0 %v3822
      %4225 = vmatprep.subr.bf16.mxu0 0
      %4226 = vmatpush1.bf16.msra.mxu0 %v3823
      %4227 = vmatprep.subr.bf16.mxu0 0
      %4228 = vmatpush1.bf16.msra.mxu0 %v3824
      %4229 = vmatprep.subr.bf16.mxu0 0
      %4230 = vmatpush1.bf16.msra.mxu0 %v3825
      %4231 = vmatprep.subr.bf16.mxu0 0
      %4232 = vmatpush1.bf16.msra.mxu0 %v3826
      %4233 = vmatprep.subr.bf16.mxu0 0
      %4234 = vmatpush1.bf16.msra.mxu0 %v3827
      %4235 = vmatprep.subr.bf16.mxu0 0
      %4236 = vmatpush1.bf16.msra.mxu0 %v3828
      %4237 = vmatprep.subr.bf16.mxu0 0
      %4238 = vmatpush1.bf16.msra.mxu0 %v3829
      %4239 = vmatprep.subr.bf16.mxu0 0
      %4240 = vmatpush1.bf16.msra.mxu0 %v3830
      %4241 = vmatprep.subr.bf16.mxu0 0
      %4242 = vmatpush1.bf16.msra.mxu0 %v3831
      %4243 = vmatprep.subr.bf16.mxu0 0
      %4244 = vmatpush1.bf16.msra.mxu0 %v3832
      %4245 = vmatprep.subr.bf16.mxu0 0
      %4246 = vmatpush1.bf16.msra.mxu0 %v3833
      %4247 = vmatprep.subr.bf16.mxu0 0
      %4248 = vmatpush1.bf16.msra.mxu0 %v3834
      %4249 = vmatprep.subr.bf16.mxu0 0
      %4250 = vmatpush1.bf16.msra.mxu0 %v3835
      %4251 = vmatprep.subr.bf16.mxu0 0
      %4252 = vmatpush1.bf16.msra.mxu0 %v3836
      %4253 = vmatprep.mubr.bf16.mxu0 %v2947
      %4254 = vmatmul.mubr.bf16.gmra.mrb[0].mxu0 %v2946
      %v4255 = vpop.f32.mrb[0].mxu0
      %v4256 = vadd.f32 %v4216, %v4255
      %v4257 = vpop.f32.mrb[0].mxu0
      %v4258 = vpop.f32.mrb[0].mxu0
      %v4259 = vpop.f32.mrb[0].mxu0
      %4260 = vdwg.mxu0
      %4261 = vmatprep.subr.bf16.mxu0 0
      %4262 = vmatpush1.bf16.msra.mxu0 %v3837
      %4263 = vmatprep.subr.bf16.mxu0 0
      %4264 = vmatpush1.bf16.msra.mxu0 %v3838
      %4265 = vmatprep.subr.bf16.mxu0 0
      %4266 = vmatpush1.bf16.msra.mxu0 %v3839
      %4267 = vmatprep.subr.bf16.mxu0 0
      %4268 = vmatpush1.bf16.msra.mxu0 %v3840
      %4269 = vmatprep.subr.bf16.mxu0 0
      %4270 = vmatpush1.bf16.msra.mxu0 %v3841
      %4271 = vmatprep.subr.bf16.mxu0 0
      %4272 = vmatpush1.bf16.msra.mxu0 %v3842
      %4273 = vmatprep.subr.bf16.mxu0 0
      %4274 = vmatpush1.bf16.msra.mxu0 %v3843
      %4275 = vmatprep.subr.bf16.mxu0 0
      %4276 = vmatpush1.bf16.msra.mxu0 %v3844
      %4277 = vmatprep.subr.bf16.mxu0 0
      %4278 = vmatpush1.bf16.msra.mxu0 %v3845
      %4279 = vmatprep.subr.bf16.mxu0 0
      %4280 = vmatpush1.bf16.msra.mxu0 %v3846
      %4281 = vmatprep.subr.bf16.mxu0 0
      %4282 = vmatpush1.bf16.msra.mxu0 %v3847
      %4283 = vmatprep.subr.bf16.mxu0 0
      %4284 = vmatpush1.bf16.msra.mxu0 %v3848
      %4285 = vmatprep.subr.bf16.mxu0 0
      %4286 = vmatpush1.bf16.msra.mxu0 %v3849
      %4287 = vmatprep.subr.bf16.mxu0 0
      %4288 = vmatpush1.bf16.msra.mxu0 %v3850
      %4289 = vmatprep.subr.bf16.mxu0 0
      %4290 = vmatpush1.bf16.msra.mxu0 %v3851
      %4291 = vmatprep.subr.bf16.mxu0 0
      %4292 = vmatpush1.bf16.msra.mxu0 %v3852
      %4293 = vmatprep.mubr.bf16.mxu0 %v2949
      %4294 = vmatmul.mubr.bf16.gmra.mrb[0].mxu0 %v2948
      %v4295 = vpop.f32.mrb[0].mxu0
      %v4296 = vadd.f32 %v4256, %v4295
      %v4297 = vpop.f32.mrb[0].mxu0
      %v4298 = vpop.f32.mrb[0].mxu0
      %v4299 = vpop.f32.mrb[0].mxu0
      %4300 = vdwg.mxu0
      %v4301 = vadd.f32 %v2309, %v4296
      %v4302 = vld [vmem:[%s753] sm:$0x1]
      %v4303 = vld [vmem:[%s756] sm:$0x1]
      %v4304 = vsel %vm885, %v4301, 0.0
      %4305 = vadd.xlane.f32.xlu0 %v4304
      %v4306 = vpop.xlane.xlu0 %4305
      %v4307 = vmul.f32 %v4306, %v2285
      %v4308 = vsub.f32 %v4301, %v4307
      %v4309 = vmul.f32 %v4308, %v4308
      %v4310 = vsel %vm885, %v4309, 0.0
      %4311 = vadd.xlane.f32.xlu0 %v4310
      %v4312 = vpop.xlane.xlu0 %4311
      %v4313 = vmul.f32 %v4312, %v2285
      %v4314 = vadd.f32 %v4313, 1e-05
      %v4315 = vrsqrt.pop %v4314
      %v4316 = vmul.f32 %v4308, %v4315
      %v4318 = vlaneseq
      %v4319 = vshrl.u32 %v4318, 7
      %v4320 = vsub.s32 0, %v4319
      %v4321 = vrot.slane %v4302, %v4320
      %v4323 = vmul.f32 %v4316, %v4321
      %v4325 = vlaneseq
      %v4326 = vshrl.u32 %v4325, 7
      %v4327 = vsub.s32 0, %v4326
      %v4328 = vrot.slane %v4303, %v4327
      %v4330 = vadd.f32 %v4323, %v4328
      %4331 = vst.msk [vmem:[#allocation2] sm:$0xff] %vm885, %v4330
      %p4332 = scmp.eq.s32.totalorder %s40, 1
      // Predicated region
      $region93: #{deepdia_ms2_forward.1} parent=87 // pred_check
        %p4333 = pneg %p4332
      $region94: #{deepdia_ms2_forward.1} parent=87 // pred_check_branch
        %4335 = sbr.rel (%p4333) target = $region96
      $region95: #{deepdia_ms2_forward.1} parent=87 // pred_region
        %v4336 = vpack.c.bf16 %v4330, %v4330
        %v4337 = vld [vmem:[%s16] sm:$0xf]
        %v4338 = vld [vmem:[%s16 + $0x4] sm:$0xf]
        %v4339 = vld [vmem:[%s16 + $0x8] sm:$0xf]
        %v4340 = vld [vmem:[%s16 + $0xc] sm:$0xf]
        %v4341 = vld [vmem:[%s17] sm:$0x1]
        %v4343 = vlaneseq
        %v4344 = vshrl.u32 %v4343, 7
        %v4345 = vsub.s32 0, %v4344
        %v4346 = vrot.slane %v4341, %v4345
        %v4352 = vunpack.c.l.b16 %v4337
        %v4353 = vunpack.c.l.b16 %v4338
        %v4354 = vunpack.c.l.b16 %v4339
        %v4355 = vunpack.c.l.b16 %v4340
        %v4356 = vpack.c.b16 %v4353, %v4352
        %v4357 = vpack.c.b16 %v4355, %v4354
        %v4361 = vsel %vm885, %v4336, 0
        %4363 = vmatprep.subr.bf16.mxu0 0
        %4364 = vmatpush1.bf16.msra.mxu0 %v4356
        %4365 = vmatprep.subr.bf16.mxu0 0
        %4366 = vmatpush1.bf16.msra.mxu0 %v4357
        %4367 = vmatprep.subr.bf16.mxu0 0
        %4368 = vmatpush1.bf16.msra.mxu0 0
        %4369 = vmatprep.subr.bf16.mxu0 0
        %4370 = vmatpush1.bf16.msra.mxu0 0
        %4371 = vmatprep.subr.bf16.mxu0 0
        %4372 = vmatpush1.bf16.msra.mxu0 0
        %4373 = vmatprep.subr.bf16.mxu0 0
        %4374 = vmatpush1.bf16.msra.mxu0 0
        %4375 = vmatprep.subr.bf16.mxu0 0
        %4376 = vmatpush1.bf16.msra.mxu0 0
        %4377 = vmatprep.subr.bf16.mxu0 0
        %4378 = vmatpush1.bf16.msra.mxu0 0
        %4379 = vmatprep.subr.bf16.mxu0 0
        %4380 = vmatpush1.bf16.msra.mxu0 0
        %4381 = vmatprep.subr.bf16.mxu0 0
        %4382 = vmatpush1.bf16.msra.mxu0 0
        %4383 = vmatprep.subr.bf16.mxu0 0
        %4384 = vmatpush1.bf16.msra.mxu0 0
        %4385 = vmatprep.subr.bf16.mxu0 0
        %4386 = vmatpush1.bf16.msra.mxu0 0
        %4387 = vmatprep.subr.bf16.mxu0 0
        %4388 = vmatpush1.bf16.msra.mxu0 0
        %4389 = vmatprep.subr.bf16.mxu0 0
        %4390 = vmatpush1.bf16.msra.mxu0 0
        %4391 = vmatprep.subr.bf16.mxu0 0
        %4392 = vmatpush1.bf16.msra.mxu0 0
        %4393 = vmatprep.subr.bf16.mxu0 0
        %4394 = vmatpush1.bf16.msra.mxu0 0
        %4395 = vmatprep.mubr.bf16.mxu0 0
        %4396 = vmatmul.mubr.bf16.gmra.mrb[0].mxu0 %v4361
        %v4397 = vpop.f32.mrb[0].mxu0
        %v4398 = vadd.f32 %v4346, %v4397
        %v4399 = vpop.f32.mrb[0].mxu0
        %v4400 = vpop.f32.mrb[0].mxu0
        %v4401 = vpop.f32.mrb[0].mxu0
        %4402 = vdwg.mxu0
        %v4403 = vmax.f32 %v4398, 0.0
        %v4404 = vlaneseq
        %v4405 = vshrl.u32 %v4404, 7
        %vm4406 = vcmp.lt.s32.totalorder %v4405, %v857
        %v4407 = vsel %vm4406, 1, 0
        %v4408 = vcvt.s32.f32 %v4407
        %v4409 = vmul.f32 %v4403, %v4408
        %4410 = vst [vmem:[%s760] sm:$0xff] %v4409
      $region96: #{deepdia_ms2_forward.1} parent=87 // pred_fallthru
        _
      %p4411 = scmp.lt.s32.totalorder %s39, 1
      %s4412 = scalar_select %p4411, %s39, 1
      %s4413 = smul.addr %s4412, 8
      %s4414 = scalar_lea.vmem %s18, %s4413
      // Predicated region
      $region97: #{deepdia_ms2_forward.1} parent=87 // pred_check
        %p4415 = pneg %p487
      $region98: #{deepdia_ms2_forward.1} parent=87 // pred_check_branch
        %4417 = sbr.rel (%p4415) target = $region100
      $region99: #{deepdia_ms2_forward.1} parent=87 // pred_region
        _
      $region100: #{deepdia_ms2_forward.1} parent=87 // pred_fallthru
        _
    $region88: #{deepdia_ms2_forward.1} parent=5 // pred_fallthru
      _
    %p4418 = scmp.le.s32.totalorder 2, %s30
    // Predicated region
    $region101: #{deepdia_ms2_forward.1} parent=5 // pred_check
      %p4419 = pneg %p4418
    $region102: #{deepdia_ms2_forward.1} parent=5 // pred_check_branch
      %4421 = sbr.rel (%p4419) target = $region104
    $region103: #{deepdia_ms2_forward.1} parent=5 // pred_region
      %s4422 = ssub.s32 %s30, 2
      // Predicated region
      $region105: #{deepdia_ms2_forward.1} parent=103 // pred_check
        %p4423 = pneg %p493
      $region106: #{deepdia_ms2_forward.1} parent=103 // pred_check_branch
        %4425 = sbr.rel (%p4423) target = $region108
      $region107: #{deepdia_ms2_forward.1} parent=103 // pred_region
        %p4426 = scmp.lt.s32.totalorder %s41, 1
        %s4427 = scalar_select %p4426, %s41, 1
        %s4428 = smul.addr %s4427, 8
        %s4429 = scalar_lea.vmem %s18, %s4428
      $region108: #{deepdia_ms2_forward.1} parent=103 // pred_fallthru
        _
    $region104: #{deepdia_ms2_forward.1} parent=5 // pred_fallthru
      _
  $region6: #{deepdia_ms2_forward.1} parent=0 // loop_footer
    %s34 = sadd.s32 1, %s30
  $region7: #{deepdia_ms2_forward.1} parent=0 // loop_footer_branch
    %29 = sbr.rel target = $region3
  $region8: #{deepdia_ms2_forward.1} parent=0 // loop_exit
    _

</llo_original>
